<compile_context>
chip_gen: v6e
topology: v6e:2x2x1
jax: 0.10.0
libtpu: 0.0.40
codegen_flags: <defaults>
</compile_context>

<pallas_src>
import functools

import jax
import jax.numpy as jnp
import numpy as np
from jax.experimental import pallas as pl
from jax.experimental.pallas import tpu as pltpu  # noqa: F401  (kept for clarity)


# ---------------------------------------------------------------------------
# Pallas kernels (single-shot, whole-array VMEM blocks, lane-dense outputs)
# ---------------------------------------------------------------------------
def _spatial_fused_kernel(x_ref, w_ref, b1_ref, xl_ref, l2g_ref, x1_ref,
                          *, out_cl, out_cg):
    """One dot for: convl2l+convg2l (-> out_xl), convl2g (-> l2g) and the
    BN-folded SpectralTransform.conv1 (+ReLU, -> x1).

    x_ref : (9*Cin, M)                 im2col slab, M = N*H*W (lanes, mult of 128)
    w_ref : (out_cl+out_cg+c_half, 9*Cin)   block weight (conv1 rows = centre tap only)
    b1_ref: (c_half, 1)                BN-folded conv1 bias (spatial rows are bias-free)
    """
    y = jnp.dot(w_ref[...], x_ref[...], preferred_element_type=jnp.float32)
    xl_ref[...] = y[:out_cl]
    l2g_ref[...] = y[out_cl:out_cl + out_cg]
    x1_ref[...] = jnp.maximum(y[out_cl + out_cg:] + b1_ref[...], 0.0)


def _dual_pointwise_relu_kernel(a1_ref, a2_ref, w1_ref, w2_ref, b1_ref, b2_ref,
                                o1_ref, o2_ref):
    """fu and lfu BN-folded 1x1 convs (+ReLU) in a single launch (two dots)."""
    y1 = jnp.dot(w1_ref[...], a1_ref[...], preferred_element_type=jnp.float32)
    o1_ref[...] = jnp.maximum(y1 + b1_ref[...], 0.0)
    y2 = jnp.dot(w2_ref[...], a2_ref[...], preferred_element_type=jnp.float32)
    o2_ref[...] = jnp.maximum(y2 + b2_ref[...], 0.0)


def _pointwise_relu_kernel(a_ref, w_ref, b_ref, o_ref):
    """Single BN-folded 1x1 conv + ReLU (used only when enable_lfu=False)."""
    y = jnp.dot(w_ref[...], a_ref[...], preferred_element_type=jnp.float32)
    o_ref[...] = jnp.maximum(y + b_ref[...], 0.0)


def _conv2_fused_kernel(a_ref, b_ref, c_ref, res_ref, w_ref, o_ref):
    """out = W @ (a + b + c) + res   (SpectralTransform.conv2 + l2g residual)."""
    s = a_ref[...] + b_ref[...] + c_ref[...]
    y = jnp.dot(w_ref[...], s, preferred_element_type=jnp.float32)
    o_ref[...] = y + res_ref[...]


# ---------------------------------------------------------------------------
# Layout helpers (wrapper-side plumbing, tiny tensors)
# ---------------------------------------------------------------------------
def _round_up(v, m):
    return (v + m - 1) // m * m


def _pad_lanes(x, mult=128):
    """Pad last (lane) dim up to a multiple of `mult`; returns (padded, orig_m)."""
    m = x.shape[-1]
    mp = _round_up(m, mult)
    if mp == m:
        return x, m
    return jnp.pad(x, ((0, 0), (0, mp - m))), m


def _pad_to(x, lanes):
    pad = lanes - x.shape[-1]
    return x if pad == 0 else jnp.pad(x, ((0, 0), (0, pad)))


def _crop_lanes(x, m):
    return x if x.shape[-1] == m else x[:, :m]


def _im2col_3x3_reflect(x):
    """(N, C, H, W) -> (9*C, N*H*W).  K = tap-major / channel-minor; batch folded
    into the lane axis (n-major pixel ordering)."""
    N, C, H, W = x.shape
    xp = jnp.pad(x, ((0, 0), (0, 0), (1, 1), (1, 1)), mode="reflect")
    taps = [xp[:, :, kh:kh + H, kw:kw + W] for kh in range(3) for kw in range(3)]
    col = jnp.stack(taps, axis=0)                    # (9, N, C, H, W)
    col = jnp.transpose(col, (0, 2, 1, 3, 4))        # (9, C, N, H, W)
    return col.reshape(9 * C, N * H * W)


def _fold_bn_1x1(w, gamma, beta, mean, var, eps=1e-5):
    """Fold inference-mode BatchNorm into a bias-free 1x1 conv weight."""
    scale = gamma / jnp.sqrt(var + eps)
    return w * scale[:, None], beta - mean * scale


def prepare_params(params, in_cl, in_cg, out_cl, out_cg, eps=1e-5):
    """Pack / BN-fold all weights ONCE, outside the traced forward."""
    c_half = out_cg // 2
    c_in = in_cl + in_cg

    # Block 3x3 weight: rows [out_xl | l2g], columns = tap-major/channel-minor.
    w_blk = jnp.zeros((out_cl + out_cg, c_in, 3, 3), jnp.float32)
    w_blk = w_blk.at[:out_cl, :in_cl].set(params["w_l2l"])
    w_blk = w_blk.at[:out_cl, in_cl:].set(params["w_g2l"])
    w_blk = w_blk.at[out_cl:, :in_cl].set(params["w_l2g"])
    w_col3 = jnp.transpose(w_blk, (0, 2, 3, 1)).reshape(out_cl + out_cg, 9 * c_in)

    # SpectralTransform.conv1 (BN folded) as centre-tap-only rows on x_g channels.
    w1, b1 = _fold_bn_1x1(params["w_conv1"], params["bn1_g"], params["bn1_b"],
                          params["bn1_m"], params["bn1_v"], eps)
    conv1_rows = jnp.zeros((c_half, 9 * c_in), jnp.float32)
    centre = 4 * c_in                                # tap (kh=1, kw=1)
    conv1_rows = conv1_rows.at[:, centre + in_cl:centre + c_in].set(w1)

    wf, bf = _fold_bn_1x1(params["w_fu"], params["bnf_g"], params["bnf_b"],
                          params["bnf_m"], params["bnf_v"], eps)
    wl, bl = _fold_bn_1x1(params["w_lfu"], params["bnl_g"], params["bnl_b"],
                          params["bnl_m"], params["bnl_v"], eps)

    return {
        "w_spatial": jnp.concatenate([w_col3, conv1_rows], axis=0),
        "b1": b1.reshape(c_half, 1),
        "w_fu": wf, "b_fu": bf.reshape(-1, 1),
        "w_lfu": wl, "b_lfu": bl.reshape(-1, 1),
        "w_conv2": params["w_conv2"],
    }


# ---------------------------------------------------------------------------
# FFC forward (Pallas path)
# ---------------------------------------------------------------------------
def ffc_forward(x_l, x_g, pp, enable_lfu=True):
    N, in_cl, H, W = x_l.shape
    out_cg, c_half = pp["w_conv2"].shape
    out_cl = pp["w_spatial"].shape[0] - out_cg - c_half
    M = N * H * W

    # ---- fused spatial 3x3 convs + conv1: ONE matmul, batch in lanes --------
    x_cat = jnp.concatenate([x_l, x_g], axis=1)               # (N, Cin, H, W)
    x_col, _ = _pad_lanes(_im2col_3x3_reflect(x_cat))         # (9*Cin, Mp)
    Mp = x_col.shape[-1]

    xl_flat, l2g_flat, x1_flat = pl.pallas_call(
        functools.partial(_spatial_fused_kernel, out_cl=out_cl, out_cg=out_cg),
        out_shape=(
            jax.ShapeDtypeStruct((out_cl, Mp), jnp.float32),
            jax.ShapeDtypeStruct((out_cg, Mp), jnp.float32),
            jax.ShapeDtypeStruct((c_half, Mp), jnp.float32),
        ),
    )(x_col, pp["w_spatial"], pp["b1"])

    out_xl = jnp.transpose(
        _crop_lanes(xl_flat, M).reshape(out_cl, N, H, W), (1, 0, 2, 3))
    x1 = _crop_lanes(x1_flat, M).reshape(c_half, N, H, W)     # (C, N, H, W) layout

    # ---- FourierUnit (fu): rfft2 (XLA) -> 1x1 conv+BN+ReLU (Pallas) -> irfft2
    f = jnp.fft.rfft2(x1, norm="ortho")                        # (C, N, H, W2)
    W2 = f.shape[-1]
    fr = jnp.stack((f.real, f.imag), axis=1).reshape(2 * c_half, N * H * W2)
    fr_p, m_fu = _pad_lanes(fr)

    if enable_lfu:
        # ---- local FourierUnit (lfu) on the 2x2-split first c_half//4 channels
        c4 = c_half // 4
        s = H // 2
        xs = x1[:c4]
        xs = jnp.concatenate([xs[:, :, :s], xs[:, :, s:]], axis=0)
        xs = jnp.concatenate([xs[:, :, :, :s], xs[:, :, :, s:]], axis=0)  # (c_half,N,s,s)
        fl = jnp.fft.rfft2(xs, norm="ortho")                   # (c_half, N, s, s2)
        s2 = fl.shape[-1]
        flr = jnp.stack((fl.real, fl.imag), axis=1).reshape(2 * c_half, N * s * s2)
        flr_p, m_lfu = _pad_lanes(flr)

        y_fu_p, y_lfu_p = pl.pallas_call(
            _dual_pointwise_relu_kernel,
            out_shape=(
                jax.ShapeDtypeStruct((2 * c_half, fr_p.shape[-1]), jnp.float32),
                jax.ShapeDtypeStruct((2 * c_half, flr_p.shape[-1]), jnp.float32),
            ),
        )(fr_p, flr_p, pp["w_fu"], pp["w_lfu"], pp["b_fu"], pp["b_lfu"])

        y_lfu = _crop_lanes(y_lfu_p, m_lfu).reshape(c_half, 2, N, s, s2)
        xs_sp = jnp.fft.irfft2(jax.lax.complex(y_lfu[:, 0], y_lfu[:, 1]),
                               s=(s, s), norm="ortho")         # (c_half, N, s, s)
        xs_flat = jnp.tile(xs_sp, (1, 1, 2, 2)).reshape(c_half, M)
    else:
        y_fu_p = pl.pallas_call(
            _pointwise_relu_kernel,
            out_shape=jax.ShapeDtypeStruct((2 * c_half, fr_p.shape[-1]),
                                           jnp.float32),
        )(fr_p, pp["w_fu"], pp["b_fu"])
        xs_flat = jnp.zeros((c_half, M), jnp.float32)

    y_fu = _crop_lanes(y_fu_p, m_fu).reshape(c_half, 2, N, H, W2)
    fu = jnp.fft.irfft2(jax.lax.complex(y_fu[:, 0], y_fu[:, 1]),
                        s=(H, W), norm="ortho")                # (c_half, N, H, W)

    # ---- conv2 fused with 3-way sum and the out_xg = l2g + spectral residual
    out_g_flat = pl.pallas_call(
        _conv2_fused_kernel,
        out_shape=jax.ShapeDtypeStruct((out_cg, Mp), jnp.float32),
    )(x1_flat,
      _pad_to(fu.reshape(c_half, M), Mp),
      _pad_to(xs_flat, Mp),
      l2g_flat,
      pp["w_conv2"])

    out_xg = jnp.transpose(
        _crop_lanes(out_g_flat, M).reshape(out_cg, N, H, W), (1, 0, 2, 3))
    return out_xl, out_xg


# ---------------------------------------------------------------------------
# Pure-JAX literal reference (mirrors the PyTorch branch-by-branch forward)
# ---------------------------------------------------------------------------
def ffc_reference(x_l, x_g, params, enable_lfu=True, eps=1e-5):
    def conv3x3(x, w):
        xp = jnp.pad(x, ((0, 0), (0, 0), (1, 1), (1, 1)), mode="reflect")
        return jax.lax.conv_general_dilated(
            xp, w, (1, 1), "VALID", dimension_numbers=("NCHW", "OIHW", "NCHW"))

    def conv1x1(x, w):
        return jax.lax.conv_general_dilated(
            x, w[:, :, None, None], (1, 1), "VALID",
            dimension_numbers=("NCHW", "OIHW", "NCHW"))

    def bn(x, g, b, m, v):
        sc = (g / jnp.sqrt(v + eps))[None, :, None, None]
        return (x - m[None, :, None, None]) * sc + b[None, :, None, None]

    def fourier_unit(x, w, g, b_, m, v):
        n, c, h, w_ = x.shape
        f = jnp.fft.rfft2(x.astype(jnp.float32), norm="ortho")
        w2 = f.shape[-1]
        fr = jnp.stack((f.real, f.imag), axis=2).reshape(n, 2 * c, h, w2)
        y = jax.nn.relu(bn(conv1x1(fr, w), g, b_, m, v))
        y = y.reshape(n, y.shape[1] // 2, 2, h, w2)
        yc = jax.lax.complex(y[:, :, 0], y[:, :, 1])
        return jnp.fft.irfft2(yc, s=(h, w_), norm="ortho")

    out_xl = conv3x3(x_l, params["w_l2l"]) + conv3x3(x_g, params["w_g2l"])
    l2g = conv3x3(x_l, params["w_l2g"])

    x = jax.nn.relu(bn(conv1x1(x_g, params["w_conv1"]),
                       params["bn1_g"], params["bn1_b"],
                       params["bn1_m"], params["bn1_v"]))
    fu = fourier_unit(x, params["w_fu"], params["bnf_g"], params["bnf_b"],
                      params["bnf_m"], params["bnf_v"])
    n, c, h, w = x.shape
    if enable_lfu:
        s = h // 2
        xs = x[:, :c // 4]
        xs = jnp.concatenate([xs[:, :, :s], xs[:, :, s:]], axis=1)
        xs = jnp.concatenate([xs[:, :, :, :s], xs[:, :, :, s:]], axis=1)
        xs = fourier_unit(xs, params["w_lfu"], params["bnl_g"], params["bnl_b"],
                          params["bnl_m"], params["bnl_v"])
        xs = jnp.tile(xs, (1, 1, 2, 2))
    else:
        xs = 0.0
    spec = conv1x1(x + fu + xs, params["w_conv2"])
    out_xg = l2g + spec
    return out_xl, out_xg


# ---------------------------------------------------------------------------
if __name__ == "__main__":
    N, H, W = 2, 16, 16
    in_channels, out_channels = 8, 16
    ratio_gin = ratio_gout = 0.5
    in_cl = in_cg = int(in_channels * ratio_gin)        # 4
    out_cl = out_cg = int(out_channels * ratio_gout)    # 8
    c_half = out_cg // 2                                # 4

    key = jax.random.PRNGKey(0)
    ks = jax.random.split(key, 22)

    def rn(k, shape, scale=0.1):
        return scale * jax.random.normal(k, shape, jnp.float32)

    params = {
        # spatial 3x3 convs (bias=False, padding_mode='reflect')
        "w_l2l": rn(ks[0], (out_cl, in_cl, 3, 3)),
        "w_g2l": rn(ks[1], (out_cl, in_cg, 3, 3)),
        "w_l2g": rn(ks[2], (out_cg, in_cl, 3, 3)),
        # SpectralTransform: conv1 (1x1) + BN
        "w_conv1": rn(ks[3], (c_half, in_cg)),
        "bn1_g": 1.0 + rn(ks[4], (c_half,)),
        "bn1_b": rn(ks[5], (c_half,)),
        "bn1_m": rn(ks[6], (c_half,)),
        "bn1_v": 0.5 + 0.5 * jax.random.uniform(ks[7], (c_half,), jnp.float32),
        # FourierUnit (fu): 1x1 conv (2c -> 2c) + BN
        "w_fu": rn(ks[8], (2 * c_half, 2 * c_half)),
        "bnf_g": 1.0 + rn(ks[9], (2 * c_half,)),
        "bnf_b": rn(ks[10], (2 * c_half,)),
        "bnf_m": rn(ks[11], (2 * c_half,)),
        "bnf_v": 0.5 + 0.5 * jax.random.uniform(ks[12], (2 * c_half,), jnp.float32),
        # FourierUnit (lfu)
        "w_lfu": rn(ks[13], (2 * c_half, 2 * c_half)),
        "bnl_g": 1.0 + rn(ks[14], (2 * c_half,)),
        "bnl_b": rn(ks[15], (2 * c_half,)),
        "bnl_m": rn(ks[16], (2 * c_half,)),
        "bnl_v": 0.5 + 0.5 * jax.random.uniform(ks[17], (2 * c_half,), jnp.float32),
        # SpectralTransform: conv2 (1x1)
        "w_conv2": rn(ks[18], (out_cg, c_half)),
    }
    x_l = jax.random.normal(ks[19], (N, in_cl, H, W), jnp.float32)
    x_g = jax.random.normal(ks[20], (N, in_cg, H, W), jnp.float32)

    # Pack / BN-fold weights once, outside the traced forward.
    packed = prepare_params(params, in_cl, in_cg, out_cl, out_cg)
    packed = jax.tree_util.tree_map(jax.block_until_ready, packed)

    fwd = jax.jit(ffc_forward, static_argnames=("enable_lfu",))
    out_l, out_g = fwd(x_l, x_g, packed)
    out_l = jax.block_until_ready(out_l)
    out_g = jax.block_until_ready(out_g)

    ref_l, ref_g = ffc_reference(x_l, x_g, params)
    ref_l = jax.block_until_ready(ref_l)
    ref_g = jax.block_until_ready(ref_g)

    assert out_l.shape == (N, out_cl, H, W), out_l.shape
    assert out_g.shape == (N, out_cg, H, W), out_g.shape
    np.testing.assert_allclose(np.asarray(out_l), np.asarray(ref_l),
                               rtol=1e-4, atol=1e-4)
    np.testing.assert_allclose(np.asarray(out_g), np.asarray(ref_g),
                               rtol=1e-4, atol=1e-4)
    print("KERNEL_OK")
</pallas_src>

<mosaic_0001>
module attributes {stable_mosaic.version = 11 : i64} {
  func.func @_spatial_fused_kernel(%arg0: memref<72x512xf32, #tpu.memory_space<vmem>>, %arg1: memref<20x72xf32, #tpu.memory_space<vmem>>, %arg2: memref<4x1xf32, #tpu.memory_space<vmem>>, %arg3: memref<8x512xf32, #tpu.memory_space<vmem>>, %arg4: memref<8x512xf32, #tpu.memory_space<vmem>>, %arg5: memref<4x512xf32, #tpu.memory_space<vmem>>) attributes {dimension_semantics = [], scalar_prefetch = 0 : i64, scratch_operands = 0 : i64, tpu.core_type = #tpu.core_type<tc>} {
    %c0 = arith.constant 0 : index
    %c0_0 = arith.constant 0 : index
    %0 = vector.load %arg1[%c0, %c0_0] : memref<20x72xf32, #tpu.memory_space<vmem>>, vector<20x72xf32>
    %c0_1 = arith.constant 0 : index
    %c0_2 = arith.constant 0 : index
    %1 = vector.load %arg0[%c0_1, %c0_2] : memref<72x512xf32, #tpu.memory_space<vmem>>, vector<72x512xf32>
    %cst = arith.constant dense<0.000000e+00> : vector<20x512xf32>
    %2 = tpu.matmul %0, %1, %cst {dimension_numbers = #tpu.dot_dimension_numbers<[1], [0], [0], [1], [0, 0, 1, 1], [], []>} : vector<20x72xf32>, vector<72x512xf32>, vector<20x512xf32> -> vector<20x512xf32>
    %3 = vector.extract_strided_slice %2 {offsets = [0, 0], sizes = [8, 512], strides = [1, 1]} : vector<20x512xf32> to vector<8x512xf32>
    %c0_3 = arith.constant 0 : index
    %c0_4 = arith.constant 0 : index
    %4 = vector.load %arg3[%c0_3, %c0_4] : memref<8x512xf32, #tpu.memory_space<vmem>>, vector<8x512xf32>
    tpu.vector_store %arg3[%c0_3, %c0_4], %3 {strides = array<i32>} : memref<8x512xf32, #tpu.memory_space<vmem>>, vector<8x512xf32>,
    %5 = vector.extract_strided_slice %2 {offsets = [8, 0], sizes = [8, 512], strides = [1, 1]} : vector<20x512xf32> to vector<8x512xf32>
    %c0_5 = arith.constant 0 : index
    %c0_6 = arith.constant 0 : index
    %6 = vector.load %arg4[%c0_5, %c0_6] : memref<8x512xf32, #tpu.memory_space<vmem>>, vector<8x512xf32>
    tpu.vector_store %arg4[%c0_5, %c0_6], %5 {strides = array<i32>} : memref<8x512xf32, #tpu.memory_space<vmem>>, vector<8x512xf32>,
    %7 = vector.extract_strided_slice %2 {offsets = [16, 0], sizes = [4, 512], strides = [1, 1]} : vector<20x512xf32> to vector<4x512xf32>
    %c0_7 = arith.constant 0 : index
    %c0_8 = arith.constant 0 : index
    %8 = vector.load %arg2[%c0_7, %c0_8] : memref<4x1xf32, #tpu.memory_space<vmem>>, vector<4x1xf32>
    %9 = vector.broadcast %8 : vector<4x1xf32> to vector<4x512xf32>
    %10 = arith.addf %7, %9 : vector<4x512xf32>
    %cst_9 = arith.constant 0.000000e+00 : f32
    %11 = vector.broadcast %cst_9 : f32 to vector<4x512xf32>
    %12 = arith.maximumf %10, %11 : vector<4x512xf32>
    %c0_10 = arith.constant 0 : index
    %c0_11 = arith.constant 0 : index
    %13 = vector.load %arg5[%c0_10, %c0_11] : memref<4x512xf32, #tpu.memory_space<vmem>>, vector<4x512xf32>
    tpu.vector_store %arg5[%c0_10, %c0_11], %12 {strides = array<i32>} : memref<4x512xf32, #tpu.memory_space<vmem>>, vector<4x512xf32>,
    return
  }
}

module attributes {stable_mosaic.version = 11 : i64} {
  func.func @_dual_pointwise_relu_kernel(%arg0: memref<8x384xf32, #tpu.memory_space<vmem>>, %arg1: memref<8x128xf32, #tpu.memory_space<vmem>>, %arg2: memref<8x8xf32, #tpu.memory_space<vmem>>, %arg3: memref<8x8xf32, #tpu.memory_space<vmem>>, %arg4: memref<8x1xf32, #tpu.memory_space<vmem>>, %arg5: memref<8x1xf32, #tpu.memory_space<vmem>>, %arg6: memref<8x384xf32, #tpu.memory_space<vmem>>, %arg7: memref<8x128xf32, #tpu.memory_space<vmem>>) attributes {dimension_semantics = [], scalar_prefetch = 0 : i64, scratch_operands = 0 : i64, tpu.core_type = #tpu.core_type<tc>} {
    %c0 = arith.constant 0 : index
    %c0_0 = arith.constant 0 : index
    %0 = vector.load %arg2[%c0, %c0_0] : memref<8x8xf32, #tpu.memory_space<vmem>>, vector<8x8xf32>
    %c0_1 = arith.constant 0 : index
    %c0_2 = arith.constant 0 : index
    %1 = vector.load %arg0[%c0_1, %c0_2] : memref<8x384xf32, #tpu.memory_space<vmem>>, vector<8x384xf32>
    %cst = arith.constant dense<0.000000e+00> : vector<8x384xf32>
    %2 = tpu.matmul %0, %1, %cst {dimension_numbers = #tpu.dot_dimension_numbers<[1], [0], [0], [1], [0, 0, 1, 1], [], []>} : vector<8x8xf32>, vector<8x384xf32>, vector<8x384xf32> -> vector<8x384xf32>
    %c0_3 = arith.constant 0 : index
    %c0_4 = arith.constant 0 : index
    %3 = vector.load %arg4[%c0_3, %c0_4] : memref<8x1xf32, #tpu.memory_space<vmem>>, vector<8x1xf32>
    %4 = vector.broadcast %3 : vector<8x1xf32> to vector<8x384xf32>
    %5 = arith.addf %2, %4 : vector<8x384xf32>
    %cst_5 = arith.constant 0.000000e+00 : f32
    %6 = vector.broadcast %cst_5 : f32 to vector<8x384xf32>
    %7 = arith.maximumf %5, %6 : vector<8x384xf32>
    %c0_6 = arith.constant 0 : index
    %c0_7 = arith.constant 0 : index
    %8 = vector.load %arg6[%c0_6, %c0_7] : memref<8x384xf32, #tpu.memory_space<vmem>>, vector<8x384xf32>
    tpu.vector_store %arg6[%c0_6, %c0_7], %7 {strides = array<i32>} : memref<8x384xf32, #tpu.memory_space<vmem>>, vector<8x384xf32>,
    %c0_8 = arith.constant 0 : index
    %c0_9 = arith.constant 0 : index
    %9 = vector.load %arg3[%c0_8, %c0_9] : memref<8x8xf32, #tpu.memory_space<vmem>>, vector<8x8xf32>
    %c0_10 = arith.constant 0 : index
    %c0_11 = arith.constant 0 : index
    %10 = vector.load %arg1[%c0_10, %c0_11] : memref<8x128xf32, #tpu.memory_space<vmem>>, vector<8x128xf32>
    %cst_12 = arith.constant dense<0.000000e+00> : vector<8x128xf32>
    %11 = tpu.matmul %9, %10, %cst_12 {dimension_numbers = #tpu.dot_dimension_numbers<[1], [0], [0], [1], [0, 0, 1, 1], [], []>} : vector<8x8xf32>, vector<8x128xf32>, vector<8x128xf32> -> vector<8x128xf32>
    %c0_13 = arith.constant 0 : index
    %c0_14 = arith.constant 0 : index
    %12 = vector.load %arg5[%c0_13, %c0_14] : memref<8x1xf32, #tpu.memory_space<vmem>>, vector<8x1xf32>
    %13 = vector.broadcast %12 : vector<8x1xf32> to vector<8x128xf32>
    %14 = arith.addf %11, %13 : vector<8x128xf32>
    %cst_15 = arith.constant 0.000000e+00 : f32
    %15 = vector.broadcast %cst_15 : f32 to vector<8x128xf32>
    %16 = arith.maximumf %14, %15 : vector<8x128xf32>
    %c0_16 = arith.constant 0 : index
    %c0_17 = arith.constant 0 : index
    %17 = vector.load %arg7[%c0_16, %c0_17] : memref<8x128xf32, #tpu.memory_space<vmem>>, vector<8x128xf32>
    tpu.vector_store %arg7[%c0_16, %c0_17], %16 {strides = array<i32>} : memref<8x128xf32, #tpu.memory_space<vmem>>, vector<8x128xf32>,
    return
  }
}

module attributes {stable_mosaic.version = 11 : i64} {
  func.func @_conv2_fused_kernel(%arg0: memref<4x512xf32, #tpu.memory_space<vmem>>, %arg1: memref<4x512xf32, #tpu.memory_space<vmem>>, %arg2: memref<4x512xf32, #tpu.memory_space<vmem>>, %arg3: memref<8x512xf32, #tpu.memory_space<vmem>>, %arg4: memref<8x4xf32, #tpu.memory_space<vmem>>, %arg5: memref<8x512xf32, #tpu.memory_space<vmem>>) attributes {dimension_semantics = [], scalar_prefetch = 0 : i64, scratch_operands = 0 : i64, tpu.core_type = #tpu.core_type<tc>} {
    %c0 = arith.constant 0 : index
    %c0_0 = arith.constant 0 : index
    %0 = vector.load %arg0[%c0, %c0_0] : memref<4x512xf32, #tpu.memory_space<vmem>>, vector<4x512xf32>
    %c0_1 = arith.constant 0 : index
    %c0_2 = arith.constant 0 : index
    %1 = vector.load %arg1[%c0_1, %c0_2] : memref<4x512xf32, #tpu.memory_space<vmem>>, vector<4x512xf32>
    %2 = arith.addf %0, %1 : vector<4x512xf32>
    %c0_3 = arith.constant 0 : index
    %c0_4 = arith.constant 0 : index
    %3 = vector.load %arg2[%c0_3, %c0_4] : memref<4x512xf32, #tpu.memory_space<vmem>>, vector<4x512xf32>
    %4 = arith.addf %2, %3 : vector<4x512xf32>
    %c0_5 = arith.constant 0 : index
    %c0_6 = arith.constant 0 : index
    %5 = vector.load %arg4[%c0_5, %c0_6] : memref<8x4xf32, #tpu.memory_space<vmem>>, vector<8x4xf32>
    %cst = arith.constant dense<0.000000e+00> : vector<8x512xf32>
    %6 = tpu.matmul %5, %4, %cst {dimension_numbers = #tpu.dot_dimension_numbers<[1], [0], [0], [1], [0, 0, 1, 1], [], []>} : vector<8x4xf32>, vector<4x512xf32>, vector<8x512xf32> -> vector<8x512xf32>
    %c0_7 = arith.constant 0 : index
    %c0_8 = arith.constant 0 : index
    %7 = vector.load %arg3[%c0_7, %c0_8] : memref<8x512xf32, #tpu.memory_space<vmem>>, vector<8x512xf32>
    %8 = arith.addf %6, %7 : vector<8x512xf32>
    %c0_9 = arith.constant 0 : index
    %c0_10 = arith.constant 0 : index
    %9 = vector.load %arg5[%c0_9, %c0_10] : memref<8x512xf32, #tpu.memory_space<vmem>>, vector<8x512xf32>
    tpu.vector_store %arg5[%c0_9, %c0_10], %8 {strides = array<i32>} : memref<8x512xf32, #tpu.memory_space<vmem>>, vector<8x512xf32>,
    return
  }
}

</mosaic_0001>

<llo_original>
// kernel: ffc_forward.3
$region0: #{ffc_forward.3}
  #allocation0 [shape = 'u32[]', space=smem, size = 0x4, offset = 0x4, fixed_abs, tag = 'smem constant byte address 0x4 - core index']
  #allocation1 [shape = 'u32[144,128]{1,0:T(1,128)}', space=vmem, size = 0x12000, scoped, tag = 'internal scratch']
  %s0 = inlined_call_operand.vmem [shape: f32[72,512], index: 0, kind: input, shape index: {}]
  %s1 = inlined_call_operand.vmem [shape: f32[20,72], index: 1, kind: input, shape index: {}]
  %s2 = inlined_call_operand.vmem [shape: f32[4,1], index: 2, kind: input, shape index: {}]
  %s3 = inlined_call_operand.vmem [shape: f32[8,512], index: 3, kind: output, shape index: {0}]
  %s4 = inlined_call_operand.vmem [shape: f32[8,512], index: 4, kind: output, shape index: {1}]
  %s5 = inlined_call_operand.vmem [shape: f32[4,512], index: 5, kind: output, shape index: {2}]
  %6 = xla_tuple %s3, %s4, %s5
  %s7 = sld [smem:[#allocation0]]
  $region38: #{ffc_forward.3} parent=0
    _
  %s9 = ssub.s32 1, %s7
  %s10 = scalar_select 0, %s9, %s7
  // Predicated region
  $region2: #{ffc_forward.3} parent=0 // pred_check
    _
  $region3: #{ffc_forward.3} parent=0 // pred_check_branch
    %12 = sbr.rel (0) target = $region5
  $region4: #{ffc_forward.3} parent=0 // pred_region
    _
  $region5: #{ffc_forward.3} parent=0 // pred_fallthru
    _
  // Predicated region
  $region6: #{ffc_forward.3} parent=0 // pred_check
    _
  $region7: #{ffc_forward.3} parent=0 // pred_check_branch
    %14 = sbr.rel (0) target = $region9
  $region8: #{ffc_forward.3} parent=0 // pred_region
    _
  $region9: #{ffc_forward.3} parent=0 // pred_fallthru
    _
  // Predicated region
  $region10: #{ffc_forward.3} parent=0 // pred_check
    _
  $region11: #{ffc_forward.3} parent=0 // pred_check_branch
    %16 = sbr.rel (0) target = $region13
  $region12: #{ffc_forward.3} parent=0 // pred_region
    _
  $region13: #{ffc_forward.3} parent=0 // pred_fallthru
    _
  %v17 = vld [vmem:[%s1] sm:$0xff]
  %v18 = vld [vmem:[%s1 + $0x8] sm:$0xff]
  %v19 = vld [vmem:[%s1 + $0x10] sm:$0xf]
  %v20 = vld [vmem:[%s0] sm:$0xff]
  %v21 = vld [vmem:[%s0 + $0x8] sm:$0xff]
  %v22 = vld [vmem:[%s0 + $0x10] sm:$0xff]
  %v23 = vld [vmem:[%s0 + $0x18] sm:$0xff]
  %v24 = vld [vmem:[%s0 + $0x20] sm:$0xff]
  %v25 = vld [vmem:[%s0 + $0x28] sm:$0xff]
  %v26 = vld [vmem:[%s0 + $0x30] sm:$0xff]
  %v27 = vld [vmem:[%s0 + $0x38] sm:$0xff]
  %v28 = vld [vmem:[%s0 + $0x40] sm:$0xff]
  %v29 = vld [vmem:[%s0 + $0x48] sm:$0xff]
  %v30 = vld [vmem:[%s0 + $0x50] sm:$0xff]
  %v31 = vld [vmem:[%s0 + $0x58] sm:$0xff]
  %v32 = vld [vmem:[%s0 + $0x60] sm:$0xff]
  %v33 = vld [vmem:[%s0 + $0x68] sm:$0xff]
  %v34 = vld [vmem:[%s0 + $0x70] sm:$0xff]
  %v35 = vld [vmem:[%s0 + $0x78] sm:$0xff]
  %v36 = vld [vmem:[%s0 + $0x80] sm:$0xff]
  %v37 = vld [vmem:[%s0 + $0x88] sm:$0xff]
  %v38 = vld [vmem:[%s0 + $0x90] sm:$0xff]
  %v39 = vld [vmem:[%s0 + $0x98] sm:$0xff]
  %v40 = vld [vmem:[%s0 + $0xa0] sm:$0xff]
  %v41 = vld [vmem:[%s0 + $0xa8] sm:$0xff]
  %v42 = vld [vmem:[%s0 + $0xb0] sm:$0xff]
  %v43 = vld [vmem:[%s0 + $0xb8] sm:$0xff]
  %v44 = vld [vmem:[%s0 + $0xc0] sm:$0xff]
  %v45 = vld [vmem:[%s0 + $0xc8] sm:$0xff]
  %v46 = vld [vmem:[%s0 + $0xd0] sm:$0xff]
  %v47 = vld [vmem:[%s0 + $0xd8] sm:$0xff]
  %v48 = vld [vmem:[%s0 + $0xe0] sm:$0xff]
  %v49 = vld [vmem:[%s0 + $0xe8] sm:$0xff]
  %v50 = vld [vmem:[%s0 + $0xf0] sm:$0xff]
  %v51 = vld [vmem:[%s0 + $0xf8] sm:$0xff]
  %v52 = vld [vmem:[%s0 + $0x100] sm:$0xff]
  %v53 = vld [vmem:[%s0 + $0x108] sm:$0xff]
  %v54 = vld [vmem:[%s0 + $0x110] sm:$0xff]
  %v55 = vld [vmem:[%s0 + $0x118] sm:$0xff]
  %vm56 = vcmask 588800
  %v58 = vsel %vm56, %v17, 0
  %v61 = vsel %vm56, %v18, 0
  %v64 = vsel %vm56, %v19, 0
  %66 = vmatprep.subr.mxu0 0.0
  %67 = vmatpush1.msra.mxu0 0.0
  %68 = vmatprep.subr.mxu0 0.0
  %69 = vmatpush1.msra.mxu0 0.0
  %70 = vmatprep.subr.mxu0 0.0
  %71 = vmatpush1.msra.mxu0 0.0
  %72 = vmatprep.subr.mxu0 0.0
  %73 = vmatpush1.msra.mxu0 0.0
  %74 = vmatprep.subr.mxu0 0.0
  %75 = vmatpush1.msra.mxu0 0.0
  %76 = vmatprep.subr.mxu0 0.0
  %77 = vmatpush1.msra.mxu0 0.0
  %78 = vmatprep.subr.mxu0 0.0
  %79 = vmatpush1.msra.mxu0 0.0
  %80 = vmatprep.subr.mxu0 %v53
  %81 = vmatpush1.msra.mxu0 %v52
  %82 = vmatprep.subr.mxu0 %v49
  %83 = vmatpush1.msra.mxu0 %v48
  %84 = vmatprep.subr.mxu0 %v45
  %85 = vmatpush1.msra.mxu0 %v44
  %86 = vmatprep.subr.mxu0 %v41
  %87 = vmatpush1.msra.mxu0 %v40
  %88 = vmatprep.subr.mxu0 %v37
  %89 = vmatpush1.msra.mxu0 %v36
  %90 = vmatprep.subr.mxu0 %v33
  %91 = vmatpush1.msra.mxu0 %v32
  %92 = vmatprep.subr.mxu0 %v29
  %93 = vmatpush1.msra.mxu0 %v28
  %94 = vmatprep.subr.mxu0 %v25
  %95 = vmatpush1.msra.mxu0 %v24
  %96 = vmatprep.subr.mxu0 %v21
  %97 = vmatpush1.msra.mxu0 %v20
  %98 = vmatprep.subr.mxu0 0.0
  %99 = vmatpush2.msra.mxu0 0.0
  %100 = vmatprep.subr.mxu0 0.0
  %101 = vmatpush2.msra.mxu0 0.0
  %102 = vmatprep.subr.mxu0 0.0
  %103 = vmatpush2.msra.mxu0 0.0
  %104 = vmatprep.subr.mxu0 0.0
  %105 = vmatpush2.msra.mxu0 0.0
  %106 = vmatprep.subr.mxu0 0.0
  %107 = vmatpush2.msra.mxu0 0.0
  %108 = vmatprep.subr.mxu0 0.0
  %109 = vmatpush2.msra.mxu0 0.0
  %110 = vmatprep.subr.mxu0 0.0
  %111 = vmatpush2.msra.mxu0 0.0
  %112 = vmatprep.subr.mxu0 0.0
  %113 = vmatpush2.msra.mxu0 0.0
  %114 = vmatprep.subr.mxu0 0.0
  %115 = vmatpush2.msra.mxu0 0.0
  %116 = vmatprep.subr.mxu0 0.0
  %117 = vmatpush2.msra.mxu0 0.0
  %118 = vmatprep.subr.mxu0 0.0
  %119 = vmatpush2.msra.mxu0 0.0
  %120 = vmatprep.subr.mxu0 0.0
  %121 = vmatpush2.msra.mxu0 0.0
  %122 = vmatprep.subr.mxu0 0.0
  %123 = vmatpush2.msra.mxu0 0.0
  %124 = vmatprep.subr.mxu0 0.0
  %125 = vmatpush2.msra.mxu0 0.0
  %126 = vmatprep.subr.mxu0 0.0
  %127 = vmatpush2.msra.mxu0 0.0
  %128 = vmatprep.subr.mxu0 0.0
  %129 = vmatpush2.msra.mxu0 0.0
  %130 = vmatprep.mubr.f32.mxu0 0.0
  %131 = vmatmul.mubr.f32.gmra.mxu0 %v58
  %v132 = vpop.f32.mrf.mxu0
  %v133 = vadd.f32 0.0, %v132
  %v134 = vpop.f32.mrf.mxu0
  %v135 = vadd.f32 0.0, %v134
  %136 = vmatprep.mubr.f32.mxu0 0.0
  %137 = vmatmul.mubr.f32.gmra.mxu0 %v61
  %v138 = vpop.f32.mrf.mxu0
  %v139 = vadd.f32 0.0, %v138
  %v140 = vpop.f32.mrf.mxu0
  %v141 = vadd.f32 0.0, %v140
  %142 = vmatprep.mubr.f32.mxu0 0.0
  %143 = vmatmul.mubr.f32.gmra.mxu0 %v64
  %v144 = vpop.f32.mrf.mxu0
  %v145 = vadd.f32 0.0, %v144
  %v146 = vpop.f32.mrf.mxu0
  %v147 = vadd.f32 0.0, %v146
  %148 = vdwg.mxu0
  %149 = vmatprep.subr.mxu0 0.0
  %150 = vmatpush1.msra.mxu0 0.0
  %151 = vmatprep.subr.mxu0 0.0
  %152 = vmatpush1.msra.mxu0 0.0
  %153 = vmatprep.subr.mxu0 0.0
  %154 = vmatpush1.msra.mxu0 0.0
  %155 = vmatprep.subr.mxu0 0.0
  %156 = vmatpush1.msra.mxu0 0.0
  %157 = vmatprep.subr.mxu0 0.0
  %158 = vmatpush1.msra.mxu0 0.0
  %159 = vmatprep.subr.mxu0 0.0
  %160 = vmatpush1.msra.mxu0 0.0
  %161 = vmatprep.subr.mxu0 0.0
  %162 = vmatpush1.msra.mxu0 0.0
  %163 = vmatprep.subr.mxu0 %v55
  %164 = vmatpush1.msra.mxu0 %v54
  %165 = vmatprep.subr.mxu0 %v51
  %166 = vmatpush1.msra.mxu0 %v50
  %167 = vmatprep.subr.mxu0 %v47
  %168 = vmatpush1.msra.mxu0 %v46
  %169 = vmatprep.subr.mxu0 %v43
  %170 = vmatpush1.msra.mxu0 %v42
  %171 = vmatprep.subr.mxu0 %v39
  %172 = vmatpush1.msra.mxu0 %v38
  %173 = vmatprep.subr.mxu0 %v35
  %174 = vmatpush1.msra.mxu0 %v34
  %175 = vmatprep.subr.mxu0 %v31
  %176 = vmatpush1.msra.mxu0 %v30
  %177 = vmatprep.subr.mxu0 %v27
  %178 = vmatpush1.msra.mxu0 %v26
  %179 = vmatprep.subr.mxu0 %v23
  %180 = vmatpush1.msra.mxu0 %v22
  %181 = vmatprep.subr.mxu0 0.0
  %182 = vmatpush2.msra.mxu0 0.0
  %183 = vmatprep.subr.mxu0 0.0
  %184 = vmatpush2.msra.mxu0 0.0
  %185 = vmatprep.subr.mxu0 0.0
  %186 = vmatpush2.msra.mxu0 0.0
  %187 = vmatprep.subr.mxu0 0.0
  %188 = vmatpush2.msra.mxu0 0.0
  %189 = vmatprep.subr.mxu0 0.0
  %190 = vmatpush2.msra.mxu0 0.0
  %191 = vmatprep.subr.mxu0 0.0
  %192 = vmatpush2.msra.mxu0 0.0
  %193 = vmatprep.subr.mxu0 0.0
  %194 = vmatpush2.msra.mxu0 0.0
  %195 = vmatprep.subr.mxu0 0.0
  %196 = vmatpush2.msra.mxu0 0.0
  %197 = vmatprep.subr.mxu0 0.0
  %198 = vmatpush2.msra.mxu0 0.0
  %199 = vmatprep.subr.mxu0 0.0
  %200 = vmatpush2.msra.mxu0 0.0
  %201 = vmatprep.subr.mxu0 0.0
  %202 = vmatpush2.msra.mxu0 0.0
  %203 = vmatprep.subr.mxu0 0.0
  %204 = vmatpush2.msra.mxu0 0.0
  %205 = vmatprep.subr.mxu0 0.0
  %206 = vmatpush2.msra.mxu0 0.0
  %207 = vmatprep.subr.mxu0 0.0
  %208 = vmatpush2.msra.mxu0 0.0
  %209 = vmatprep.subr.mxu0 0.0
  %210 = vmatpush2.msra.mxu0 0.0
  %211 = vmatprep.subr.mxu0 0.0
  %212 = vmatpush2.msra.mxu0 0.0
  %213 = vmatprep.mubr.f32.mxu0 0.0
  %214 = vmatmul.mubr.f32.gmra.mxu0 %v58
  %v215 = vpop.f32.mrf.mxu0
  %v216 = vadd.f32 0.0, %v215
  %v217 = vpop.f32.mrf.mxu0
  %v218 = vadd.f32 0.0, %v217
  %219 = vmatprep.mubr.f32.mxu0 0.0
  %220 = vmatmul.mubr.f32.gmra.mxu0 %v61
  %v221 = vpop.f32.mrf.mxu0
  %v222 = vadd.f32 0.0, %v221
  %v223 = vpop.f32.mrf.mxu0
  %v224 = vadd.f32 0.0, %v223
  %225 = vmatprep.mubr.f32.mxu0 0.0
  %226 = vmatmul.mubr.f32.gmra.mxu0 %v64
  %v227 = vpop.f32.mrf.mxu0
  %v228 = vadd.f32 0.0, %v227
  %v229 = vpop.f32.mrf.mxu0
  %v230 = vadd.f32 0.0, %v229
  %231 = vdwg.mxu0
  %232 = vst [vmem:[%s3] sm:$0xff] %v133
  %233 = vst [vmem:[%s3 + $0x8] sm:$0xff] %v135
  %234 = vst [vmem:[%s3 + $0x10] sm:$0xff] %v216
  %235 = vst [vmem:[%s3 + $0x18] sm:$0xff] %v218
  %236 = vst [vmem:[%s4] sm:$0xff] %v139
  %237 = vst [vmem:[%s4 + $0x8] sm:$0xff] %v141
  %238 = vst [vmem:[%s4 + $0x10] sm:$0xff] %v222
  %239 = vst [vmem:[%s4 + $0x18] sm:$0xff] %v224
  %v240 = vld [vmem:[%s2] sm:$0xf]
  %242 = vset.pattern.permute.xlu0 0
  %243 = vperm.xlu0 %242, %v240
  %v244 = vpop.permute.xlu0 %243
  %v246 = vadd.f32 %v145, %v244
  %v247 = vadd.f32 %v147, %v244
  %v248 = vadd.f32 %v228, %v244
  %v249 = vadd.f32 %v230, %v244
  %v250 = vmax.f32 %v246, 0.0
  %v251 = vmax.f32 %v247, 0.0
  %v252 = vmax.f32 %v248, 0.0
  %v253 = vmax.f32 %v249, 0.0
  %v258 = vcombine.low %v250, %v251
  %v259 = vcombine.low %v252, %v253
  %262 = vst [vmem:[%s5] sm:$0xff] %v258
  %263 = vst [vmem:[%s5 + $0x8] sm:$0xff] %v259
  // Predicated region
  $region14: #{ffc_forward.3} parent=0 // pred_check
    _
  $region15: #{ffc_forward.3} parent=0 // pred_check_branch
    %265 = sbr.rel (0) target = $region17
  $region16: #{ffc_forward.3} parent=0 // pred_region
    _
  $region17: #{ffc_forward.3} parent=0 // pred_fallthru
    _
  // Predicated region
  $region18: #{ffc_forward.3} parent=0 // pred_check
    _
  $region19: #{ffc_forward.3} parent=0 // pred_check_branch
    %267 = sbr.rel (0) target = $region21
  $region20: #{ffc_forward.3} parent=0 // pred_region
    _
  $region21: #{ffc_forward.3} parent=0 // pred_fallthru
    _
  // Predicated region
  $region22: #{ffc_forward.3} parent=0 // pred_check
    _
  $region23: #{ffc_forward.3} parent=0 // pred_check_branch
    %269 = sbr.rel (0) target = $region25
  $region24: #{ffc_forward.3} parent=0 // pred_region
    _
  $region25: #{ffc_forward.3} parent=0 // pred_fallthru
    _
  // Predicated region
  $region26: #{ffc_forward.3} parent=0 // pred_check
    _
  $region27: #{ffc_forward.3} parent=0 // pred_check_branch
    %271 = sbr.rel (0) target = $region29
  $region28: #{ffc_forward.3} parent=0 // pred_region
    _
  $region29: #{ffc_forward.3} parent=0 // pred_fallthru
    _
  // Predicated region
  $region30: #{ffc_forward.3} parent=0 // pred_check
    _
  $region31: #{ffc_forward.3} parent=0 // pred_check_branch
    %273 = sbr.rel (0) target = $region33
  $region32: #{ffc_forward.3} parent=0 // pred_region
    _
  $region33: #{ffc_forward.3} parent=0 // pred_fallthru
    _
  // Predicated region
  $region34: #{ffc_forward.3} parent=0 // pred_check
    _
  $region35: #{ffc_forward.3} parent=0 // pred_check_branch
    %275 = sbr.rel (0) target = $region37
  $region36: #{ffc_forward.3} parent=0 // pred_region
    _
  $region37: #{ffc_forward.3} parent=0 // pred_fallthru
    _

// kernel: ffc_forward.4
$region0: #{ffc_forward.4}
  #allocation0 [shape = 'u32[]', space=smem, size = 0x4, offset = 0x4, fixed_abs, tag = 'smem constant byte address 0x4 - core index']
  #allocation1 [shape = 'u32[144,128]{1,0:T(1,128)}', space=vmem, size = 0x12000, scoped, tag = 'internal scratch']
  %s0 = inlined_call_operand.vmem [shape: f32[8,384], index: 0, kind: input, shape index: {}]
  %s1 = inlined_call_operand.vmem [shape: f32[8,128], index: 1, kind: input, shape index: {}]
  %s2 = inlined_call_operand.vmem [shape: f32[8,8], index: 2, kind: input, shape index: {}]
  %s3 = inlined_call_operand.vmem [shape: f32[8,8], index: 3, kind: input, shape index: {}]
  %s4 = inlined_call_operand.vmem [shape: f32[8,1], index: 4, kind: input, shape index: {}]
  %s5 = inlined_call_operand.vmem [shape: f32[8,1], index: 5, kind: input, shape index: {}]
  %s6 = inlined_call_operand.vmem [shape: f32[8,384], index: 6, kind: output, shape index: {0}]
  %s7 = inlined_call_operand.vmem [shape: f32[8,128], index: 7, kind: output, shape index: {1}]
  %8 = xla_tuple %s6, %s7
  %s9 = sld [smem:[#allocation0]]
  $region42: #{ffc_forward.4} parent=0
    _
  %s11 = ssub.s32 1, %s9
  %s12 = scalar_select 0, %s11, %s9
  // Predicated region
  $region2: #{ffc_forward.4} parent=0 // pred_check
    _
  $region3: #{ffc_forward.4} parent=0 // pred_check_branch
    %14 = sbr.rel (0) target = $region5
  $region4: #{ffc_forward.4} parent=0 // pred_region
    _
  $region5: #{ffc_forward.4} parent=0 // pred_fallthru
    _
  // Predicated region
  $region6: #{ffc_forward.4} parent=0 // pred_check
    _
  $region7: #{ffc_forward.4} parent=0 // pred_check_branch
    %16 = sbr.rel (0) target = $region9
  $region8: #{ffc_forward.4} parent=0 // pred_region
    _
  $region9: #{ffc_forward.4} parent=0 // pred_fallthru
    _
  // Predicated region
  $region10: #{ffc_forward.4} parent=0 // pred_check
    _
  $region11: #{ffc_forward.4} parent=0 // pred_check_branch
    %18 = sbr.rel (0) target = $region13
  $region12: #{ffc_forward.4} parent=0 // pred_region
    _
  $region13: #{ffc_forward.4} parent=0 // pred_fallthru
    _
  // Predicated region
  $region14: #{ffc_forward.4} parent=0 // pred_check
    _
  $region15: #{ffc_forward.4} parent=0 // pred_check_branch
    %20 = sbr.rel (0) target = $region17
  $region16: #{ffc_forward.4} parent=0 // pred_region
    _
  $region17: #{ffc_forward.4} parent=0 // pred_fallthru
    _
  // Predicated region
  $region18: #{ffc_forward.4} parent=0 // pred_check
    _
  $region19: #{ffc_forward.4} parent=0 // pred_check_branch
    %22 = sbr.rel (0) target = $region21
  $region20: #{ffc_forward.4} parent=0 // pred_region
    _
  $region21: #{ffc_forward.4} parent=0 // pred_fallthru
    _
  // Predicated region
  $region22: #{ffc_forward.4} parent=0 // pred_check
    _
  $region23: #{ffc_forward.4} parent=0 // pred_check_branch
    %24 = sbr.rel (0) target = $region25
  $region24: #{ffc_forward.4} parent=0 // pred_region
    _
  $region25: #{ffc_forward.4} parent=0 // pred_fallthru
    _
  %v25 = vld [vmem:[%s2] sm:$0xff]
  %v26 = vld [vmem:[%s0] sm:$0xff]
  %v27 = vld [vmem:[%s0 + $0x8] sm:$0xff]
  %v28 = vld [vmem:[%s0 + $0x10] sm:$0xff]
  %v29 = vld [vmem:[%s4] sm:$0xff]
  %31 = vset.pattern.permute.xlu0 0
  %32 = vperm.xlu0 %31, %v29
  %v33 = vpop.permute.xlu0 %32
  %vm35 = vcmask 64512
  %v37 = vsel %vm35, %v25, 0
  %39 = vmatprep.subr.mxu0 0.0
  %40 = vmatpush1.msra.mxu0 0.0
  %41 = vmatprep.subr.mxu0 0.0
  %42 = vmatpush1.msra.mxu0 0.0
  %43 = vmatprep.subr.mxu0 0.0
  %44 = vmatpush1.msra.mxu0 0.0
  %45 = vmatprep.subr.mxu0 0.0
  %46 = vmatpush1.msra.mxu0 0.0
  %47 = vmatprep.subr.mxu0 0.0
  %48 = vmatpush1.msra.mxu0 0.0
  %49 = vmatprep.subr.mxu0 0.0
  %50 = vmatpush1.msra.mxu0 0.0
  %51 = vmatprep.subr.mxu0 0.0
  %52 = vmatpush1.msra.mxu0 0.0
  %53 = vmatprep.subr.mxu0 0.0
  %54 = vmatpush1.msra.mxu0 0.0
  %55 = vmatprep.subr.mxu0 0.0
  %56 = vmatpush1.msra.mxu0 0.0
  %57 = vmatprep.subr.mxu0 0.0
  %58 = vmatpush1.msra.mxu0 0.0
  %59 = vmatprep.subr.mxu0 0.0
  %60 = vmatpush1.msra.mxu0 0.0
  %61 = vmatprep.subr.mxu0 0.0
  %62 = vmatpush1.msra.mxu0 0.0
  %63 = vmatprep.subr.mxu0 0.0
  %64 = vmatpush1.msra.mxu0 0.0
  %65 = vmatprep.subr.mxu0 0.0
  %66 = vmatpush1.msra.mxu0 0.0
  %67 = vmatprep.subr.mxu0 0.0
  %68 = vmatpush1.msra.mxu0 0.0
  %69 = vmatprep.subr.mxu0 %v27
  %70 = vmatpush1.msra.mxu0 %v26
  %71 = vmatprep.subr.mxu0 0.0
  %72 = vmatpush2.msra.mxu0 0.0
  %73 = vmatprep.subr.mxu0 0.0
  %74 = vmatpush2.msra.mxu0 0.0
  %75 = vmatprep.subr.mxu0 0.0
  %76 = vmatpush2.msra.mxu0 0.0
  %77 = vmatprep.subr.mxu0 0.0
  %78 = vmatpush2.msra.mxu0 0.0
  %79 = vmatprep.subr.mxu0 0.0
  %80 = vmatpush2.msra.mxu0 0.0
  %81 = vmatprep.subr.mxu0 0.0
  %82 = vmatpush2.msra.mxu0 0.0
  %83 = vmatprep.subr.mxu0 0.0
  %84 = vmatpush2.msra.mxu0 0.0
  %85 = vmatprep.subr.mxu0 0.0
  %86 = vmatpush2.msra.mxu0 0.0
  %87 = vmatprep.subr.mxu0 0.0
  %88 = vmatpush2.msra.mxu0 0.0
  %89 = vmatprep.subr.mxu0 0.0
  %90 = vmatpush2.msra.mxu0 0.0
  %91 = vmatprep.subr.mxu0 0.0
  %92 = vmatpush2.msra.mxu0 0.0
  %93 = vmatprep.subr.mxu0 0.0
  %94 = vmatpush2.msra.mxu0 0.0
  %95 = vmatprep.subr.mxu0 0.0
  %96 = vmatpush2.msra.mxu0 0.0
  %97 = vmatprep.subr.mxu0 0.0
  %98 = vmatpush2.msra.mxu0 0.0
  %99 = vmatprep.subr.mxu0 0.0
  %100 = vmatpush2.msra.mxu0 0.0
  %101 = vmatprep.subr.mxu0 0.0
  %102 = vmatpush2.msra.mxu0 0.0
  %103 = vmatprep.mubr.f32.mxu0 0.0
  %104 = vmatmul.mubr.f32.gmra.mxu0 %v37
  %v105 = vpop.f32.mrf.mxu0
  %v106 = vadd.f32 %v33, %v105
  %v107 = vpop.f32.mrf.mxu0
  %v108 = vadd.f32 %v33, %v107
  %109 = vdwg.mxu0
  %110 = vmatprep.subr.mxu0 0.0
  %111 = vmatpush1.msra.mxu0 0.0
  %112 = vmatprep.subr.mxu0 0.0
  %113 = vmatpush1.msra.mxu0 0.0
  %114 = vmatprep.subr.mxu0 0.0
  %115 = vmatpush1.msra.mxu0 0.0
  %116 = vmatprep.subr.mxu0 0.0
  %117 = vmatpush1.msra.mxu0 0.0
  %118 = vmatprep.subr.mxu0 0.0
  %119 = vmatpush1.msra.mxu0 0.0
  %120 = vmatprep.subr.mxu0 0.0
  %121 = vmatpush1.msra.mxu0 0.0
  %122 = vmatprep.subr.mxu0 0.0
  %123 = vmatpush1.msra.mxu0 0.0
  %124 = vmatprep.subr.mxu0 0.0
  %125 = vmatpush1.msra.mxu0 0.0
  %126 = vmatprep.subr.mxu0 0.0
  %127 = vmatpush1.msra.mxu0 0.0
  %128 = vmatprep.subr.mxu0 0.0
  %129 = vmatpush1.msra.mxu0 0.0
  %130 = vmatprep.subr.mxu0 0.0
  %131 = vmatpush1.msra.mxu0 0.0
  %132 = vmatprep.subr.mxu0 0.0
  %133 = vmatpush1.msra.mxu0 0.0
  %134 = vmatprep.subr.mxu0 0.0
  %135 = vmatpush1.msra.mxu0 0.0
  %136 = vmatprep.subr.mxu0 0.0
  %137 = vmatpush1.msra.mxu0 0.0
  %138 = vmatprep.subr.mxu0 0.0
  %139 = vmatpush1.msra.mxu0 0.0
  %140 = vmatprep.subr.mxu0 0.0
  %141 = vmatpush1.msra.mxu0 %v28
  %142 = vmatprep.subr.mxu0 0.0
  %143 = vmatpush2.msra.mxu0 0.0
  %144 = vmatprep.subr.mxu0 0.0
  %145 = vmatpush2.msra.mxu0 0.0
  %146 = vmatprep.subr.mxu0 0.0
  %147 = vmatpush2.msra.mxu0 0.0
  %148 = vmatprep.subr.mxu0 0.0
  %149 = vmatpush2.msra.mxu0 0.0
  %150 = vmatprep.subr.mxu0 0.0
  %151 = vmatpush2.msra.mxu0 0.0
  %152 = vmatprep.subr.mxu0 0.0
  %153 = vmatpush2.msra.mxu0 0.0
  %154 = vmatprep.subr.mxu0 0.0
  %155 = vmatpush2.msra.mxu0 0.0
  %156 = vmatprep.subr.mxu0 0.0
  %157 = vmatpush2.msra.mxu0 0.0
  %158 = vmatprep.subr.mxu0 0.0
  %159 = vmatpush2.msra.mxu0 0.0
  %160 = vmatprep.subr.mxu0 0.0
  %161 = vmatpush2.msra.mxu0 0.0
  %162 = vmatprep.subr.mxu0 0.0
  %163 = vmatpush2.msra.mxu0 0.0
  %164 = vmatprep.subr.mxu0 0.0
  %165 = vmatpush2.msra.mxu0 0.0
  %166 = vmatprep.subr.mxu0 0.0
  %167 = vmatpush2.msra.mxu0 0.0
  %168 = vmatprep.subr.mxu0 0.0
  %169 = vmatpush2.msra.mxu0 0.0
  %170 = vmatprep.subr.mxu0 0.0
  %171 = vmatpush2.msra.mxu0 0.0
  %172 = vmatprep.subr.mxu0 0.0
  %173 = vmatpush2.msra.mxu0 0.0
  %174 = vmatprep.mubr.f32.mxu0 0.0
  %175 = vmatmul.mubr.f32.gmra.mxu0 %v37
  %v176 = vpop.f32.mrf.mxu0
  %v177 = vadd.f32 %v33, %v176
  %v178 = vpop.f32.mrf.mxu0
  %179 = vdwg.mxu0
  %v180 = vmax.f32 %v106, 0.0
  %v181 = vmax.f32 %v108, 0.0
  %v182 = vmax.f32 %v177, 0.0
  %183 = vst [vmem:[%s6] sm:$0xff] %v180
  %184 = vst [vmem:[%s6 + $0x8] sm:$0xff] %v181
  %185 = vst [vmem:[%s6 + $0x10] sm:$0xff] %v182
  %v186 = vld [vmem:[%s3] sm:$0xff]
  %v187 = vld [vmem:[%s1] sm:$0xff]
  %v188 = vld [vmem:[%s5] sm:$0xff]
  %190 = vset.pattern.permute.xlu0 0
  %191 = vperm.xlu0 %190, %v188
  %v192 = vpop.permute.xlu0 %191
  %v195 = vsel %vm35, %v186, 0
  %197 = vmatprep.subr.mxu0 0.0
  %198 = vmatpush1.msra.mxu0 0.0
  %199 = vmatprep.subr.mxu0 0.0
  %200 = vmatpush1.msra.mxu0 0.0
  %201 = vmatprep.subr.mxu0 0.0
  %202 = vmatpush1.msra.mxu0 0.0
  %203 = vmatprep.subr.mxu0 0.0
  %204 = vmatpush1.msra.mxu0 0.0
  %205 = vmatprep.subr.mxu0 0.0
  %206 = vmatpush1.msra.mxu0 0.0
  %207 = vmatprep.subr.mxu0 0.0
  %208 = vmatpush1.msra.mxu0 0.0
  %209 = vmatprep.subr.mxu0 0.0
  %210 = vmatpush1.msra.mxu0 0.0
  %211 = vmatprep.subr.mxu0 0.0
  %212 = vmatpush1.msra.mxu0 0.0
  %213 = vmatprep.subr.mxu0 0.0
  %214 = vmatpush1.msra.mxu0 0.0
  %215 = vmatprep.subr.mxu0 0.0
  %216 = vmatpush1.msra.mxu0 0.0
  %217 = vmatprep.subr.mxu0 0.0
  %218 = vmatpush1.msra.mxu0 0.0
  %219 = vmatprep.subr.mxu0 0.0
  %220 = vmatpush1.msra.mxu0 0.0
  %221 = vmatprep.subr.mxu0 0.0
  %222 = vmatpush1.msra.mxu0 0.0
  %223 = vmatprep.subr.mxu0 0.0
  %224 = vmatpush1.msra.mxu0 0.0
  %225 = vmatprep.subr.mxu0 0.0
  %226 = vmatpush1.msra.mxu0 0.0
  %227 = vmatprep.subr.mxu0 0.0
  %228 = vmatpush1.msra.mxu0 %v187
  %229 = vmatprep.subr.mxu0 0.0
  %230 = vmatpush2.msra.mxu0 0.0
  %231 = vmatprep.subr.mxu0 0.0
  %232 = vmatpush2.msra.mxu0 0.0
  %233 = vmatprep.subr.mxu0 0.0
  %234 = vmatpush2.msra.mxu0 0.0
  %235 = vmatprep.subr.mxu0 0.0
  %236 = vmatpush2.msra.mxu0 0.0
  %237 = vmatprep.subr.mxu0 0.0
  %238 = vmatpush2.msra.mxu0 0.0
  %239 = vmatprep.subr.mxu0 0.0
  %240 = vmatpush2.msra.mxu0 0.0
  %241 = vmatprep.subr.mxu0 0.0
  %242 = vmatpush2.msra.mxu0 0.0
  %243 = vmatprep.subr.mxu0 0.0
  %244 = vmatpush2.msra.mxu0 0.0
  %245 = vmatprep.subr.mxu0 0.0
  %246 = vmatpush2.msra.mxu0 0.0
  %247 = vmatprep.subr.mxu0 0.0
  %248 = vmatpush2.msra.mxu0 0.0
  %249 = vmatprep.subr.mxu0 0.0
  %250 = vmatpush2.msra.mxu0 0.0
  %251 = vmatprep.subr.mxu0 0.0
  %252 = vmatpush2.msra.mxu0 0.0
  %253 = vmatprep.subr.mxu0 0.0
  %254 = vmatpush2.msra.mxu0 0.0
  %255 = vmatprep.subr.mxu0 0.0
  %256 = vmatpush2.msra.mxu0 0.0
  %257 = vmatprep.subr.mxu0 0.0
  %258 = vmatpush2.msra.mxu0 0.0
  %259 = vmatprep.subr.mxu0 0.0
  %260 = vmatpush2.msra.mxu0 0.0
  %261 = vmatprep.mubr.f32.mxu0 0.0
  %262 = vmatmul.mubr.f32.gmra.mxu0 %v195
  %v263 = vpop.f32.mrf.mxu0
  %v264 = vadd.f32 %v192, %v263
  %v265 = vpop.f32.mrf.mxu0
  %266 = vdwg.mxu0
  %v267 = vmax.f32 %v264, 0.0
  %268 = vst [vmem:[%s7] sm:$0xff] %v267
  // Predicated region
  $region26: #{ffc_forward.4} parent=0 // pred_check
    _
  $region27: #{ffc_forward.4} parent=0 // pred_check_branch
    %270 = sbr.rel (0) target = $region29
  $region28: #{ffc_forward.4} parent=0 // pred_region
    _
  $region29: #{ffc_forward.4} parent=0 // pred_fallthru
    _
  // Predicated region
  $region30: #{ffc_forward.4} parent=0 // pred_check
    _
  $region31: #{ffc_forward.4} parent=0 // pred_check_branch
    %272 = sbr.rel (0) target = $region33
  $region32: #{ffc_forward.4} parent=0 // pred_region
    _
  $region33: #{ffc_forward.4} parent=0 // pred_fallthru
    _
  // Predicated region
  $region34: #{ffc_forward.4} parent=0 // pred_check
    _
  $region35: #{ffc_forward.4} parent=0 // pred_check_branch
    %274 = sbr.rel (0) target = $region37
  $region36: #{ffc_forward.4} parent=0 // pred_region
    _
  $region37: #{ffc_forward.4} parent=0 // pred_fallthru
    _
  // Predicated region
  $region38: #{ffc_forward.4} parent=0 // pred_check
    _
  $region39: #{ffc_forward.4} parent=0 // pred_check_branch
    %276 = sbr.rel (0) target = $region41
  $region40: #{ffc_forward.4} parent=0 // pred_region
    _
  $region41: #{ffc_forward.4} parent=0 // pred_fallthru
    _

// kernel: reverse.1
$region0: #{reverse.1}
  %s0 = inlined_call_operand.vmem [shape: f32[4,2,8,3], index: 0, kind: input, shape index: {}]
  %s1 = inlined_call_operand.vmem [shape: f32[4,2,8,3], index: 1, kind: output, shape index: {}]
  $region1: #{reverse.1} parent=0
    #allocation0 [shape = 'u8[65536]{0}', space=vmem, size = 0x10000, scoped, tag = 'operand span for operand 0']
    #allocation1 [shape = 'u8[32768]{0}', space=vmem, size = 0x8000, scoped, tag = 'packed  for operand 0']
    #allocation2 [shape = 'u8[32768]{0}', space=vmem, size = 0x8000, scoped, tag = 'operand span for operand 1']
    #allocation3 [shape = 'u8[16384]{0}', space=vmem, size = 0x4000, scoped, tag = 'packed  for operand 1']
    %s2 = scalar_lea.vmem [#allocation1], 4
    // Predicated region
    $region2: #{reverse.1} parent=1 // pred_check
      _
    $region3: #{reverse.1} parent=1 // pred_check_branch
      %4 = sbr.rel (0) target = $region5
    $region4: #{reverse.1} parent=1 // pred_region
      // Predicated region
      $region6: #{reverse.1} parent=4 // pred_check
        _
      $region7: #{reverse.1} parent=4 // pred_check_branch
        %6 = sbr.rel target = $region9
      $region8: #{reverse.1} parent=4 // pred_region
        // Predicated region
        $region21: #{reverse.1} parent=8 // pred_check
          _
        $region22: #{reverse.1} parent=8 // pred_check_branch
          %36 = sbr.rel (0) target = $region24
        $region23: #{reverse.1} parent=8 // pred_region
          loop: start=0, step=1, limit=1
          $region25: #{reverse.1} parent=23 // loop_pre_header
            _
          $region26: #{reverse.1} parent=23 // loop_header
            %s38 = sphi 0, %s42
            %p39 = scmp.ge.s32.totalorder %s38, 1
            %s43 = sphi %s0, %s0
            %s44 = sphi %s2, %s2
          $region27: #{reverse.1} parent=23 // loop_header_branch
            %41 = sbr.rel (%p39) target = $region31
          $region28: #{reverse.1} parent=23 // loop_body
            _
          $region29: #{reverse.1} parent=23 // loop_footer
            %s42 = sadd.s32 1, %s38
          $region30: #{reverse.1} parent=23 // loop_footer_branch
            %37 = sbr.rel target = $region26
          $region31: #{reverse.1} parent=23 // loop_exit
            _
          %s46 = ssub.s32 16, 1
          loop: start=0, step=1, limit=1
          $region32: #{reverse.1} parent=23 // loop_pre_header
            _
          $region33: #{reverse.1} parent=23 // loop_header
            %s48 = sphi 0, %s52
            %p49 = scmp.ge.s32.totalorder %s48, 1
            %s53 = sphi %s0, %s0
            %s54 = sphi %s2, %s2
          $region34: #{reverse.1} parent=23 // loop_header_branch
            %51 = sbr.rel (%p49) target = $region38
          $region35: #{reverse.1} parent=23 // loop_body
            %v55 = vld [vmem:[%s53] sm:%s46]
            %56 = vst [vmem:[%s54] sm:%s46] %v55
            %v57 = vld [vmem:[%s53 + $0x4] sm:%s46]
            %58 = vst [vmem:[%s54 + $0x8] sm:%s46] %v57
            %v59 = vld [vmem:[%s53 + $0x8] sm:%s46]
            %60 = vst [vmem:[%s54 + $0x10] sm:%s46] %v59
            %v61 = vld [vmem:[%s53 + $0xc] sm:%s46]
            %62 = vst [vmem:[%s54 + $0x18] sm:%s46] %v61
            %v63 = vld [vmem:[%s53 + $0x10] sm:%s46]
            %64 = vst [vmem:[%s54 + $0x20] sm:%s46] %v63
            %v65 = vld [vmem:[%s53 + $0x14] sm:%s46]
            %66 = vst [vmem:[%s54 + $0x28] sm:%s46] %v65
            %v67 = vld [vmem:[%s53 + $0x18] sm:%s46]
            %68 = vst [vmem:[%s54 + $0x30] sm:%s46] %v67
            %v69 = vld [vmem:[%s53 + $0x1c] sm:%s46]
            %70 = vst [vmem:[%s54 + $0x38] sm:%s46] %v69
          $region36: #{reverse.1} parent=23 // loop_footer
            %s52 = sadd.s32 1, %s48
          $region37: #{reverse.1} parent=23 // loop_footer_branch
            %47 = sbr.rel target = $region33
          $region38: #{reverse.1} parent=23 // loop_exit
            _
        $region24: #{reverse.1} parent=8 // pred_fallthru
          _
      $region9: #{reverse.1} parent=4 // pred_fallthru
        _
      // Predicated region
      $region10: #{reverse.1} parent=4 // pred_check
        _
      $region11: #{reverse.1} parent=4 // pred_check_branch
        %8 = sbr.rel (0) target = $region13
      $region12: #{reverse.1} parent=4 // pred_region
        %s10 = ssub.s32 16, 1
        loop: start=0, step=1, limit=1
        $region14: #{reverse.1} parent=12 // loop_pre_header
          _
        $region15: #{reverse.1} parent=12 // loop_header
          %s12 = sphi 0, %s16
          %p13 = scmp.ge.s32.totalorder %s12, 1
          %s17 = sphi %s0, %s0
          %s18 = sphi %s2, %s2
        $region16: #{reverse.1} parent=12 // loop_header_branch
          %15 = sbr.rel (%p13) target = $region20
        $region17: #{reverse.1} parent=12 // loop_body
          %v19 = vld [vmem:[%s17] sm:%s10]
          %20 = vst [vmem:[%s18] sm:%s10] %v19
          %v21 = vld [vmem:[%s17 + $0x4] sm:%s10]
          %22 = vst [vmem:[%s18 + $0x8] sm:%s10] %v21
          %v23 = vld [vmem:[%s17 + $0x8] sm:%s10]
          %24 = vst [vmem:[%s18 + $0x10] sm:%s10] %v23
          %v25 = vld [vmem:[%s17 + $0xc] sm:%s10]
          %26 = vst [vmem:[%s18 + $0x18] sm:%s10] %v25
          %v27 = vld [vmem:[%s17 + $0x10] sm:%s10]
          %28 = vst [vmem:[%s18 + $0x20] sm:%s10] %v27
          %v29 = vld [vmem:[%s17 + $0x14] sm:%s10]
          %30 = vst [vmem:[%s18 + $0x28] sm:%s10] %v29
          %v31 = vld [vmem:[%s17 + $0x18] sm:%s10]
          %32 = vst [vmem:[%s18 + $0x30] sm:%s10] %v31
          %v33 = vld [vmem:[%s17 + $0x1c] sm:%s10]
          %34 = vst [vmem:[%s18 + $0x38] sm:%s10] %v33
        $region18: #{reverse.1} parent=12 // loop_footer
          %s16 = sadd.s32 1, %s12
        $region19: #{reverse.1} parent=12 // loop_footer_branch
          %11 = sbr.rel target = $region15
        $region20: #{reverse.1} parent=12 // loop_exit
          _
      $region13: #{reverse.1} parent=4 // pred_fallthru
        _
    $region5: #{reverse.1} parent=1 // pred_fallthru
      _
    %71 = vnop
    %s73 = sshll.u32 1, 4
    %s74 = ssub.s32 %s73, 1
    %s75 = smul.addr 4, 15
    %s76 = scalar_lea.vmem [#allocation1], %s75
    %v77 = vld [vmem:[%s76] sm:%s74]
    %s78 = scalar_lea.vmem [#allocation0], 120
    %79 = vst [vmem:[%s78] sm:%s74] %v77
    %s80 = smul.addr 4, 14
    %s81 = scalar_lea.vmem [#allocation1], %s80
    %v82 = vld [vmem:[%s81] sm:%s74]
    %s83 = scalar_lea.vmem [#allocation0], 112
    %84 = vst [vmem:[%s83] sm:%s74] %v82
    %s85 = smul.addr 4, 13
    %s86 = scalar_lea.vmem [#allocation1], %s85
    %v87 = vld [vmem:[%s86] sm:%s74]
    %s88 = scalar_lea.vmem [#allocation0], 104
    %89 = vst [vmem:[%s88] sm:%s74] %v87
    %s90 = smul.addr 4, 12
    %s91 = scalar_lea.vmem [#allocation1], %s90
    %v92 = vld [vmem:[%s91] sm:%s74]
    %s93 = scalar_lea.vmem [#allocation0], 96
    %94 = vst [vmem:[%s93] sm:%s74] %v92
    %s95 = smul.addr 4, 11
    %s96 = scalar_lea.vmem [#allocation1], %s95
    %v97 = vld [vmem:[%s96] sm:%s74]
    %s98 = scalar_lea.vmem [#allocation0], 88
    %99 = vst [vmem:[%s98] sm:%s74] %v97
    %s100 = smul.addr 4, 10
    %s101 = scalar_lea.vmem [#allocation1], %s100
    %v102 = vld [vmem:[%s101] sm:%s74]
    %s103 = scalar_lea.vmem [#allocation0], 80
    %104 = vst [vmem:[%s103] sm:%s74] %v102
    %s105 = smul.addr 4, 9
    %s106 = scalar_lea.vmem [#allocation1], %s105
    %v107 = vld [vmem:[%s106] sm:%s74]
    %s108 = scalar_lea.vmem [#allocation0], 72
    %109 = vst [vmem:[%s108] sm:%s74] %v107
    %s110 = smul.addr 4, 8
    %s111 = scalar_lea.vmem [#allocation1], %s110
    %v112 = vld [vmem:[%s111] sm:%s74]
    %s113 = scalar_lea.vmem [#allocation0], 64
    %114 = vst [vmem:[%s113] sm:%s74] %v112
    %s115 = smul.addr 4, 7
    %s116 = scalar_lea.vmem [#allocation1], %s115
    %v117 = vld [vmem:[%s116] sm:%s74]
    %s118 = scalar_lea.vmem [#allocation0], 56
    %119 = vst [vmem:[%s118] sm:%s74] %v117
    %s120 = smul.addr 4, 6
    %s121 = scalar_lea.vmem [#allocation1], %s120
    %v122 = vld [vmem:[%s121] sm:%s74]
    %s123 = scalar_lea.vmem [#allocation0], 48
    %124 = vst [vmem:[%s123] sm:%s74] %v122
    %s125 = smul.addr 4, 5
    %s126 = scalar_lea.vmem [#allocation1], %s125
    %v127 = vld [vmem:[%s126] sm:%s74]
    %s128 = scalar_lea.vmem [#allocation0], 40
    %129 = vst [vmem:[%s128] sm:%s74] %v127
    %s130 = smul.addr 4, 4
    %s131 = scalar_lea.vmem [#allocation1], %s130
    %v132 = vld [vmem:[%s131] sm:%s74]
    %s133 = scalar_lea.vmem [#allocation0], 32
    %134 = vst [vmem:[%s133] sm:%s74] %v132
    %s135 = smul.addr 4, 3
    %s136 = scalar_lea.vmem [#allocation1], %s135
    %v137 = vld [vmem:[%s136] sm:%s74]
    %s138 = scalar_lea.vmem [#allocation0], 24
    %139 = vst [vmem:[%s138] sm:%s74] %v137
    %s140 = smul.addr 4, 2
    %s141 = scalar_lea.vmem [#allocation1], %s140
    %v142 = vld [vmem:[%s141] sm:%s74]
    %s143 = scalar_lea.vmem [#allocation0], 16
    %144 = vst [vmem:[%s143] sm:%s74] %v142
    %s145 = scalar_lea.vmem [#allocation1], 4
    %v146 = vld [vmem:[%s145] sm:%s74]
    %s147 = scalar_lea.vmem [#allocation0], 8
    %148 = vst [vmem:[%s147] sm:%s74] %v146
    %v149 = vld [vmem:[#allocation1] sm:%s74]
    %150 = vst [vmem:[#allocation0] sm:%s74] %v149
    %s151 = scalar_lea.vmem [#allocation0], 7
    %v152 = vld [vmem:[%s151] ss:$-1 sm:$0xff]
    %v153 = vrot.slane %v152, 5
    %154 = vst [vmem:[#allocation2] sm:$0xff] %v153
    %s155 = scalar_lea.vmem [#allocation0], 8
    %s156 = scalar_lea.vmem %s155, 7 [#allocation0]
    %v157 = vld [vmem:[%s156] ss:$-1 sm:$0xff]
    %v158 = vrot.slane %v157, 5
    %v159 = vlaneseq
    %v160 = vshrl.u32 %v159, 7
    %vm161 = vcmp.lt.s32.totalorder %v160, 3
    %162 = vst.msk [vmem:[#allocation2] sm:$0xff] %vm161, %v158
    %s163 = scalar_lea.vmem [#allocation2], 8
    %s164 = scalar_lea.vmem [#allocation0], 16
    %s165 = scalar_lea.vmem %s164, 7 [#allocation0]
    %v166 = vld [vmem:[%s165] ss:$-1 sm:$0xff]
    %v167 = vrot.slane %v166, 5
    %168 = vst [vmem:[%s163] sm:$0xff] %v167
    %s169 = scalar_lea.vmem %s164, 8 [#allocation0]
    %s170 = scalar_lea.vmem %s169, 7 [#allocation0]
    %v171 = vld [vmem:[%s170] ss:$-1 sm:$0xff]
    %v172 = vrot.slane %v171, 5
    %v173 = vlaneseq
    %v174 = vshrl.u32 %v173, 7
    %vm175 = vcmp.lt.s32.totalorder %v174, 3
    %176 = vst.msk [vmem:[%s163] sm:$0xff] %vm175, %v172
    %s177 = scalar_lea.vmem [#allocation2], 16
    %s178 = scalar_lea.vmem [#allocation0], 32
    %s179 = scalar_lea.vmem %s178, 7 [#allocation0]
    %v180 = vld [vmem:[%s179] ss:$-1 sm:$0xff]
    %v181 = vrot.slane %v180, 5
    %182 = vst [vmem:[%s177] sm:$0xff] %v181
    %s183 = scalar_lea.vmem %s178, 8 [#allocation0]
    %s184 = scalar_lea.vmem %s183, 7 [#allocation0]
    %v185 = vld [vmem:[%s184] ss:$-1 sm:$0xff]
    %v186 = vrot.slane %v185, 5
    %v187 = vlaneseq
    %v188 = vshrl.u32 %v187, 7
    %vm189 = vcmp.lt.s32.totalorder %v188, 3
    %190 = vst.msk [vmem:[%s177] sm:$0xff] %vm189, %v186
    %s191 = scalar_lea.vmem [#allocation2], 24
    %s192 = scalar_lea.vmem [#allocation0], 48
    %s193 = scalar_lea.vmem %s192, 7 [#allocation0]
    %v194 = vld [vmem:[%s193] ss:$-1 sm:$0xff]
    %v195 = vrot.slane %v194, 5
    %196 = vst [vmem:[%s191] sm:$0xff] %v195
    %s197 = scalar_lea.vmem %s192, 8 [#allocation0]
    %s198 = scalar_lea.vmem %s197, 7 [#allocation0]
    %v199 = vld [vmem:[%s198] ss:$-1 sm:$0xff]
    %v200 = vrot.slane %v199, 5
    %v201 = vlaneseq
    %v202 = vshrl.u32 %v201, 7
    %vm203 = vcmp.lt.s32.totalorder %v202, 3
    %204 = vst.msk [vmem:[%s191] sm:$0xff] %vm203, %v200
    %s205 = scalar_lea.vmem [#allocation2], 32
    %s206 = scalar_lea.vmem [#allocation0], 64
    %s207 = scalar_lea.vmem %s206, 7 [#allocation0]
    %v208 = vld [vmem:[%s207] ss:$-1 sm:$0xff]
    %v209 = vrot.slane %v208, 5
    %210 = vst [vmem:[%s205] sm:$0xff] %v209
    %s211 = scalar_lea.vmem %s206, 8 [#allocation0]
    %s212 = scalar_lea.vmem %s211, 7 [#allocation0]
    %v213 = vld [vmem:[%s212] ss:$-1 sm:$0xff]
    %v214 = vrot.slane %v213, 5
    %v215 = vlaneseq
    %v216 = vshrl.u32 %v215, 7
    %vm217 = vcmp.lt.s32.totalorder %v216, 3
    %218 = vst.msk [vmem:[%s205] sm:$0xff] %vm217, %v214
    %s219 = scalar_lea.vmem [#allocation2], 40
    %s220 = scalar_lea.vmem [#allocation0], 80
    %s221 = scalar_lea.vmem %s220, 7 [#allocation0]
    %v222 = vld [vmem:[%s221] ss:$-1 sm:$0xff]
    %v223 = vrot.slane %v222, 5
    %224 = vst [vmem:[%s219] sm:$0xff] %v223
    %s225 = scalar_lea.vmem %s220, 8 [#allocation0]
    %s226 = scalar_lea.vmem %s225, 7 [#allocation0]
    %v227 = vld [vmem:[%s226] ss:$-1 sm:$0xff]
    %v228 = vrot.slane %v227, 5
    %v229 = vlaneseq
    %v230 = vshrl.u32 %v229, 7
    %vm231 = vcmp.lt.s32.totalorder %v230, 3
    %232 = vst.msk [vmem:[%s219] sm:$0xff] %vm231, %v228
    %s233 = scalar_lea.vmem [#allocation2], 48
    %s234 = scalar_lea.vmem [#allocation0], 96
    %s235 = scalar_lea.vmem %s234, 7 [#allocation0]
    %v236 = vld [vmem:[%s235] ss:$-1 sm:$0xff]
    %v237 = vrot.slane %v236, 5
    %238 = vst [vmem:[%s233] sm:$0xff] %v237
    %s239 = scalar_lea.vmem %s234, 8 [#allocation0]
    %s240 = scalar_lea.vmem %s239, 7 [#allocation0]
    %v241 = vld [vmem:[%s240] ss:$-1 sm:$0xff]
    %v242 = vrot.slane %v241, 5
    %v243 = vlaneseq
    %v244 = vshrl.u32 %v243, 7
    %vm245 = vcmp.lt.s32.totalorder %v244, 3
    %246 = vst.msk [vmem:[%s233] sm:$0xff] %vm245, %v242
    %s247 = scalar_lea.vmem [#allocation2], 56
    %s248 = scalar_lea.vmem [#allocation0], 112
    %s249 = scalar_lea.vmem %s248, 7 [#allocation0]
    %v250 = vld [vmem:[%s249] ss:$-1 sm:$0xff]
    %v251 = vrot.slane %v250, 5
    %252 = vst [vmem:[%s247] sm:$0xff] %v251
    %s253 = scalar_lea.vmem %s248, 8 [#allocation0]
    %s254 = scalar_lea.vmem %s253, 7 [#allocation0]
    %v255 = vld [vmem:[%s254] ss:$-1 sm:$0xff]
    %v256 = vrot.slane %v255, 5
    %v257 = vlaneseq
    %v258 = vshrl.u32 %v257, 7
    %vm259 = vcmp.lt.s32.totalorder %v258, 3
    %260 = vst.msk [vmem:[%s247] sm:$0xff] %vm259, %v256
    %s262 = sshll.u32 1, 4
    %s263 = ssub.s32 %s262, 1
    %v265 = vld [vmem:[#allocation2] sm:%s263]
    %s266 = sshll.u32 1, 4
    %s267 = ssub.s32 %s266, 1
    %268 = vst [vmem:[#allocation3] sm:%s267] %v265
    %s269 = scalar_lea.vmem [#allocation2], 8
    %v270 = vld [vmem:[%s269] sm:%s263]
    %s271 = sshll.u32 1, 4
    %s272 = ssub.s32 %s271, 1
    %s273 = scalar_lea.vmem [#allocation3], 4
    %274 = vst [vmem:[%s273] sm:%s272] %v270
    %s275 = scalar_lea.vmem [#allocation2], 16
    %v276 = vld [vmem:[%s275] sm:%s263]
    %s277 = sshll.u32 1, 4
    %s278 = ssub.s32 %s277, 1
    %s279 = smul.addr 4, 2
    %s280 = scalar_lea.vmem [#allocation3], %s279
    %281 = vst [vmem:[%s280] sm:%s278] %v276
    %s282 = scalar_lea.vmem [#allocation2], 24
    %v283 = vld [vmem:[%s282] sm:%s263]
    %s284 = sshll.u32 1, 4
    %s285 = ssub.s32 %s284, 1
    %s286 = smul.addr 4, 3
    %s287 = scalar_lea.vmem [#allocation3], %s286
    %288 = vst [vmem:[%s287] sm:%s285] %v283
    %s289 = scalar_lea.vmem [#allocation2], 32
    %v290 = vld [vmem:[%s289] sm:%s263]
    %s291 = sshll.u32 1, 4
    %s292 = ssub.s32 %s291, 1
    %s293 = smul.addr 4, 4
    %s294 = scalar_lea.vmem [#allocation3], %s293
    %295 = vst [vmem:[%s294] sm:%s292] %v290
    %s296 = scalar_lea.vmem [#allocation2], 40
    %v297 = vld [vmem:[%s296] sm:%s263]
    %s298 = sshll.u32 1, 4
    %s299 = ssub.s32 %s298, 1
    %s300 = smul.addr 4, 5
    %s301 = scalar_lea.vmem [#allocation3], %s300
    %302 = vst [vmem:[%s301] sm:%s299] %v297
    %s303 = scalar_lea.vmem [#allocation2], 48
    %v304 = vld [vmem:[%s303] sm:%s263]
    %s305 = sshll.u32 1, 4
    %s306 = ssub.s32 %s305, 1
    %s307 = smul.addr 4, 6
    %s308 = scalar_lea.vmem [#allocation3], %s307
    %309 = vst [vmem:[%s308] sm:%s306] %v304
    %s310 = scalar_lea.vmem [#allocation2], 56
    %v311 = vld [vmem:[%s310] sm:%s263]
    %s312 = sshll.u32 1, 4
    %s313 = ssub.s32 %s312, 1
    %s314 = smul.addr 4, 7
    %s315 = scalar_lea.vmem [#allocation3], %s314
    %316 = vst [vmem:[%s315] sm:%s313] %v311
    // Predicated region
    $region39: #{reverse.1} parent=1 // pred_check
      _
    $region40: #{reverse.1} parent=1 // pred_check_branch
      %318 = sbr.rel (0) target = $region42
    $region41: #{reverse.1} parent=1 // pred_region
      // Predicated region
      $region43: #{reverse.1} parent=41 // pred_check
        _
      $region44: #{reverse.1} parent=41 // pred_check_branch
        %320 = sbr.rel target = $region46
      $region45: #{reverse.1} parent=41 // pred_region
        // Predicated region
        $region58: #{reverse.1} parent=45 // pred_check
          _
        $region59: #{reverse.1} parent=45 // pred_check_branch
          %350 = sbr.rel (0) target = $region61
        $region60: #{reverse.1} parent=45 // pred_region
          loop: start=0, step=1, limit=1
          $region62: #{reverse.1} parent=60 // loop_pre_header
            _
          $region63: #{reverse.1} parent=60 // loop_header
            %s352 = sphi 0, %s356
            %p353 = scmp.ge.s32.totalorder %s352, 1
            %s357 = sphi [#allocation3], [#allocation3]
            %s358 = sphi %s1, %s1
          $region64: #{reverse.1} parent=60 // loop_header_branch
            %355 = sbr.rel (%p353) target = $region68
          $region65: #{reverse.1} parent=60 // loop_body
            _
          $region66: #{reverse.1} parent=60 // loop_footer
            %s356 = sadd.s32 1, %s352
          $region67: #{reverse.1} parent=60 // loop_footer_branch
            %351 = sbr.rel target = $region63
          $region68: #{reverse.1} parent=60 // loop_exit
            _
          %s360 = ssub.s32 16, 1
          loop: start=0, step=1, limit=1
          $region69: #{reverse.1} parent=60 // loop_pre_header
            _
          $region70: #{reverse.1} parent=60 // loop_header
            %s362 = sphi 0, %s366
            %p363 = scmp.ge.s32.totalorder %s362, 1
            %s367 = sphi [#allocation3], [#allocation3]
            %s368 = sphi %s1, %s1
          $region71: #{reverse.1} parent=60 // loop_header_branch
            %365 = sbr.rel (%p363) target = $region75
          $region72: #{reverse.1} parent=60 // loop_body
            %v369 = vld [vmem:[%s367] sm:%s360]
            %370 = vst [vmem:[%s368] sm:%s360] %v369
            %v371 = vld [vmem:[%s367 + $0x4] sm:%s360]
            %372 = vst [vmem:[%s368 + $0x4] sm:%s360] %v371
            %v373 = vld [vmem:[%s367 + $0x8] sm:%s360]
            %374 = vst [vmem:[%s368 + $0x8] sm:%s360] %v373
            %v375 = vld [vmem:[%s367 + $0xc] sm:%s360]
            %376 = vst [vmem:[%s368 + $0xc] sm:%s360] %v375
            %v377 = vld [vmem:[%s367 + $0x10] sm:%s360]
            %378 = vst [vmem:[%s368 + $0x10] sm:%s360] %v377
            %v379 = vld [vmem:[%s367 + $0x14] sm:%s360]
            %380 = vst [vmem:[%s368 + $0x14] sm:%s360] %v379
            %v381 = vld [vmem:[%s367 + $0x18] sm:%s360]
            %382 = vst [vmem:[%s368 + $0x18] sm:%s360] %v381
            %v383 = vld [vmem:[%s367 + $0x1c] sm:%s360]
            %384 = vst [vmem:[%s368 + $0x1c] sm:%s360] %v383
          $region73: #{reverse.1} parent=60 // loop_footer
            %s366 = sadd.s32 1, %s362
          $region74: #{reverse.1} parent=60 // loop_footer_branch
            %361 = sbr.rel target = $region70
          $region75: #{reverse.1} parent=60 // loop_exit
            _
        $region61: #{reverse.1} parent=45 // pred_fallthru
          _
      $region46: #{reverse.1} parent=41 // pred_fallthru
        _
      // Predicated region
      $region47: #{reverse.1} parent=41 // pred_check
        _
      $region48: #{reverse.1} parent=41 // pred_check_branch
        %322 = sbr.rel (0) target = $region50
      $region49: #{reverse.1} parent=41 // pred_region
        %s324 = ssub.s32 16, 1
        loop: start=0, step=1, limit=1
        $region51: #{reverse.1} parent=49 // loop_pre_header
          _
        $region52: #{reverse.1} parent=49 // loop_header
          %s326 = sphi 0, %s330
          %p327 = scmp.ge.s32.totalorder %s326, 1
          %s331 = sphi [#allocation3], [#allocation3]
          %s332 = sphi %s1, %s1
        $region53: #{reverse.1} parent=49 // loop_header_branch
          %329 = sbr.rel (%p327) target = $region57
        $region54: #{reverse.1} parent=49 // loop_body
          %v333 = vld [vmem:[%s331] sm:%s324]
          %334 = vst [vmem:[%s332] sm:%s324] %v333
          %v335 = vld [vmem:[%s331 + $0x4] sm:%s324]
          %336 = vst [vmem:[%s332 + $0x4] sm:%s324] %v335
          %v337 = vld [vmem:[%s331 + $0x8] sm:%s324]
          %338 = vst [vmem:[%s332 + $0x8] sm:%s324] %v337
          %v339 = vld [vmem:[%s331 + $0xc] sm:%s324]
          %340 = vst [vmem:[%s332 + $0xc] sm:%s324] %v339
          %v341 = vld [vmem:[%s331 + $0x10] sm:%s324]
          %342 = vst [vmem:[%s332 + $0x10] sm:%s324] %v341
          %v343 = vld [vmem:[%s331 + $0x14] sm:%s324]
          %344 = vst [vmem:[%s332 + $0x14] sm:%s324] %v343
          %v345 = vld [vmem:[%s331 + $0x18] sm:%s324]
          %346 = vst [vmem:[%s332 + $0x18] sm:%s324] %v345
          %v347 = vld [vmem:[%s331 + $0x1c] sm:%s324]
          %348 = vst [vmem:[%s332 + $0x1c] sm:%s324] %v347
        $region55: #{reverse.1} parent=49 // loop_footer
          %s330 = sadd.s32 1, %s326
        $region56: #{reverse.1} parent=49 // loop_footer_branch
          %325 = sbr.rel target = $region52
        $region57: #{reverse.1} parent=49 // loop_exit
          _
      $region50: #{reverse.1} parent=41 // pred_fallthru
        _
    $region42: #{reverse.1} parent=1 // pred_fallthru
      _
    %385 = vnop

// kernel: tile.9
$region0: #{tile.9}
  %s0 = inlined_call_operand.vmem [shape: f32[4,2,2,8,2,8], index: 0, kind: input, shape index: {}]
  %s1 = inlined_call_operand.vmem [shape: f32[4,512], index: 1, kind: output, shape index: {}]
  $region1: #{tile.9} parent=0
    #allocation0 [shape = 'u8[16384]{0}', space=vmem, size = 0x4000, scoped, tag = 'scoped mem for output reshape']
    #allocation1 [shape = 'u8[524288]{0}', space=vmem, size = 0x80000, scoped, tag = 'scoped mem for input reshape']
    %s3 = sshll.u32 1, 2
    %s4 = ssub.s32 %s3, 1
    %s5 = smul.addr 2, 127
    %s6 = scalar_lea.vmem %s0, %s5
    %v7 = vld [vmem:[%s6] sm:%s4]
    %s8 = scalar_lea.vmem [#allocation1], 1016
    %9 = vst [vmem:[%s8] sm:%s4] %v7
    %s10 = smul.addr 2, 126
    %s11 = scalar_lea.vmem %s0, %s10
    %v12 = vld [vmem:[%s11] sm:%s4]
    %s13 = scalar_lea.vmem [#allocation1], 1008
    %14 = vst [vmem:[%s13] sm:%s4] %v12
    %s15 = smul.addr 2, 125
    %s16 = scalar_lea.vmem %s0, %s15
    %v17 = vld [vmem:[%s16] sm:%s4]
    %s18 = scalar_lea.vmem [#allocation1], 1000
    %19 = vst [vmem:[%s18] sm:%s4] %v17
    %s20 = smul.addr 2, 124
    %s21 = scalar_lea.vmem %s0, %s20
    %v22 = vld [vmem:[%s21] sm:%s4]
    %s23 = scalar_lea.vmem [#allocation1], 992
    %24 = vst [vmem:[%s23] sm:%s4] %v22
    %s25 = smul.addr 2, 123
    %s26 = scalar_lea.vmem %s0, %s25
    %v27 = vld [vmem:[%s26] sm:%s4]
    %s28 = scalar_lea.vmem [#allocation1], 984
    %29 = vst [vmem:[%s28] sm:%s4] %v27
    %s30 = smul.addr 2, 122
    %s31 = scalar_lea.vmem %s0, %s30
    %v32 = vld [vmem:[%s31] sm:%s4]
    %s33 = scalar_lea.vmem [#allocation1], 976
    %34 = vst [vmem:[%s33] sm:%s4] %v32
    %s35 = smul.addr 2, 121
    %s36 = scalar_lea.vmem %s0, %s35
    %v37 = vld [vmem:[%s36] sm:%s4]
    %s38 = scalar_lea.vmem [#allocation1], 968
    %39 = vst [vmem:[%s38] sm:%s4] %v37
    %s40 = smul.addr 2, 120
    %s41 = scalar_lea.vmem %s0, %s40
    %v42 = vld [vmem:[%s41] sm:%s4]
    %s43 = scalar_lea.vmem [#allocation1], 960
    %44 = vst [vmem:[%s43] sm:%s4] %v42
    %s45 = smul.addr 2, 119
    %s46 = scalar_lea.vmem %s0, %s45
    %v47 = vld [vmem:[%s46] sm:%s4]
    %s48 = scalar_lea.vmem [#allocation1], 952
    %49 = vst [vmem:[%s48] sm:%s4] %v47
    %s50 = smul.addr 2, 118
    %s51 = scalar_lea.vmem %s0, %s50
    %v52 = vld [vmem:[%s51] sm:%s4]
    %s53 = scalar_lea.vmem [#allocation1], 944
    %54 = vst [vmem:[%s53] sm:%s4] %v52
    %s55 = smul.addr 2, 117
    %s56 = scalar_lea.vmem %s0, %s55
    %v57 = vld [vmem:[%s56] sm:%s4]
    %s58 = scalar_lea.vmem [#allocation1], 936
    %59 = vst [vmem:[%s58] sm:%s4] %v57
    %s60 = smul.addr 2, 116
    %s61 = scalar_lea.vmem %s0, %s60
    %v62 = vld [vmem:[%s61] sm:%s4]
    %s63 = scalar_lea.vmem [#allocation1], 928
    %64 = vst [vmem:[%s63] sm:%s4] %v62
    %s65 = smul.addr 2, 115
    %s66 = scalar_lea.vmem %s0, %s65
    %v67 = vld [vmem:[%s66] sm:%s4]
    %s68 = scalar_lea.vmem [#allocation1], 920
    %69 = vst [vmem:[%s68] sm:%s4] %v67
    %s70 = smul.addr 2, 114
    %s71 = scalar_lea.vmem %s0, %s70
    %v72 = vld [vmem:[%s71] sm:%s4]
    %s73 = scalar_lea.vmem [#allocation1], 912
    %74 = vst [vmem:[%s73] sm:%s4] %v72
    %s75 = smul.addr 2, 113
    %s76 = scalar_lea.vmem %s0, %s75
    %v77 = vld [vmem:[%s76] sm:%s4]
    %s78 = scalar_lea.vmem [#allocation1], 904
    %79 = vst [vmem:[%s78] sm:%s4] %v77
    %s80 = smul.addr 2, 112
    %s81 = scalar_lea.vmem %s0, %s80
    %v82 = vld [vmem:[%s81] sm:%s4]
    %s83 = scalar_lea.vmem [#allocation1], 896
    %84 = vst [vmem:[%s83] sm:%s4] %v82
    %s85 = smul.addr 2, 111
    %s86 = scalar_lea.vmem %s0, %s85
    %v87 = vld [vmem:[%s86] sm:%s4]
    %s88 = scalar_lea.vmem [#allocation1], 888
    %89 = vst [vmem:[%s88] sm:%s4] %v87
    %s90 = smul.addr 2, 110
    %s91 = scalar_lea.vmem %s0, %s90
    %v92 = vld [vmem:[%s91] sm:%s4]
    %s93 = scalar_lea.vmem [#allocation1], 880
    %94 = vst [vmem:[%s93] sm:%s4] %v92
    %s95 = smul.addr 2, 109
    %s96 = scalar_lea.vmem %s0, %s95
    %v97 = vld [vmem:[%s96] sm:%s4]
    %s98 = scalar_lea.vmem [#allocation1], 872
    %99 = vst [vmem:[%s98] sm:%s4] %v97
    %s100 = smul.addr 2, 108
    %s101 = scalar_lea.vmem %s0, %s100
    %v102 = vld [vmem:[%s101] sm:%s4]
    %s103 = scalar_lea.vmem [#allocation1], 864
    %104 = vst [vmem:[%s103] sm:%s4] %v102
    %s105 = smul.addr 2, 107
    %s106 = scalar_lea.vmem %s0, %s105
    %v107 = vld [vmem:[%s106] sm:%s4]
    %s108 = scalar_lea.vmem [#allocation1], 856
    %109 = vst [vmem:[%s108] sm:%s4] %v107
    %s110 = smul.addr 2, 106
    %s111 = scalar_lea.vmem %s0, %s110
    %v112 = vld [vmem:[%s111] sm:%s4]
    %s113 = scalar_lea.vmem [#allocation1], 848
    %114 = vst [vmem:[%s113] sm:%s4] %v112
    %s115 = smul.addr 2, 105
    %s116 = scalar_lea.vmem %s0, %s115
    %v117 = vld [vmem:[%s116] sm:%s4]
    %s118 = scalar_lea.vmem [#allocation1], 840
    %119 = vst [vmem:[%s118] sm:%s4] %v117
    %s120 = smul.addr 2, 104
    %s121 = scalar_lea.vmem %s0, %s120
    %v122 = vld [vmem:[%s121] sm:%s4]
    %s123 = scalar_lea.vmem [#allocation1], 832
    %124 = vst [vmem:[%s123] sm:%s4] %v122
    %s125 = smul.addr 2, 103
    %s126 = scalar_lea.vmem %s0, %s125
    %v127 = vld [vmem:[%s126] sm:%s4]
    %s128 = scalar_lea.vmem [#allocation1], 824
    %129 = vst [vmem:[%s128] sm:%s4] %v127
    %s130 = smul.addr 2, 102
    %s131 = scalar_lea.vmem %s0, %s130
    %v132 = vld [vmem:[%s131] sm:%s4]
    %s133 = scalar_lea.vmem [#allocation1], 816
    %134 = vst [vmem:[%s133] sm:%s4] %v132
    %s135 = smul.addr 2, 101
    %s136 = scalar_lea.vmem %s0, %s135
    %v137 = vld [vmem:[%s136] sm:%s4]
    %s138 = scalar_lea.vmem [#allocation1], 808
    %139 = vst [vmem:[%s138] sm:%s4] %v137
    %s140 = smul.addr 2, 100
    %s141 = scalar_lea.vmem %s0, %s140
    %v142 = vld [vmem:[%s141] sm:%s4]
    %s143 = scalar_lea.vmem [#allocation1], 800
    %144 = vst [vmem:[%s143] sm:%s4] %v142
    %s145 = smul.addr 2, 99
    %s146 = scalar_lea.vmem %s0, %s145
    %v147 = vld [vmem:[%s146] sm:%s4]
    %s148 = scalar_lea.vmem [#allocation1], 792
    %149 = vst [vmem:[%s148] sm:%s4] %v147
    %s150 = smul.addr 2, 98
    %s151 = scalar_lea.vmem %s0, %s150
    %v152 = vld [vmem:[%s151] sm:%s4]
    %s153 = scalar_lea.vmem [#allocation1], 784
    %154 = vst [vmem:[%s153] sm:%s4] %v152
    %s155 = smul.addr 2, 97
    %s156 = scalar_lea.vmem %s0, %s155
    %v157 = vld [vmem:[%s156] sm:%s4]
    %s158 = scalar_lea.vmem [#allocation1], 776
    %159 = vst [vmem:[%s158] sm:%s4] %v157
    %s160 = smul.addr 2, 96
    %s161 = scalar_lea.vmem %s0, %s160
    %v162 = vld [vmem:[%s161] sm:%s4]
    %s163 = scalar_lea.vmem [#allocation1], 768
    %164 = vst [vmem:[%s163] sm:%s4] %v162
    %s165 = smul.addr 2, 95
    %s166 = scalar_lea.vmem %s0, %s165
    %v167 = vld [vmem:[%s166] sm:%s4]
    %s168 = scalar_lea.vmem [#allocation1], 760
    %169 = vst [vmem:[%s168] sm:%s4] %v167
    %s170 = smul.addr 2, 94
    %s171 = scalar_lea.vmem %s0, %s170
    %v172 = vld [vmem:[%s171] sm:%s4]
    %s173 = scalar_lea.vmem [#allocation1], 752
    %174 = vst [vmem:[%s173] sm:%s4] %v172
    %s175 = smul.addr 2, 93
    %s176 = scalar_lea.vmem %s0, %s175
    %v177 = vld [vmem:[%s176] sm:%s4]
    %s178 = scalar_lea.vmem [#allocation1], 744
    %179 = vst [vmem:[%s178] sm:%s4] %v177
    %s180 = smul.addr 2, 92
    %s181 = scalar_lea.vmem %s0, %s180
    %v182 = vld [vmem:[%s181] sm:%s4]
    %s183 = scalar_lea.vmem [#allocation1], 736
    %184 = vst [vmem:[%s183] sm:%s4] %v182
    %s185 = smul.addr 2, 91
    %s186 = scalar_lea.vmem %s0, %s185
    %v187 = vld [vmem:[%s186] sm:%s4]
    %s188 = scalar_lea.vmem [#allocation1], 728
    %189 = vst [vmem:[%s188] sm:%s4] %v187
    %s190 = smul.addr 2, 90
    %s191 = scalar_lea.vmem %s0, %s190
    %v192 = vld [vmem:[%s191] sm:%s4]
    %s193 = scalar_lea.vmem [#allocation1], 720
    %194 = vst [vmem:[%s193] sm:%s4] %v192
    %s195 = smul.addr 2, 89
    %s196 = scalar_lea.vmem %s0, %s195
    %v197 = vld [vmem:[%s196] sm:%s4]
    %s198 = scalar_lea.vmem [#allocation1], 712
    %199 = vst [vmem:[%s198] sm:%s4] %v197
    %s200 = smul.addr 2, 88
    %s201 = scalar_lea.vmem %s0, %s200
    %v202 = vld [vmem:[%s201] sm:%s4]
    %s203 = scalar_lea.vmem [#allocation1], 704
    %204 = vst [vmem:[%s203] sm:%s4] %v202
    %s205 = smul.addr 2, 87
    %s206 = scalar_lea.vmem %s0, %s205
    %v207 = vld [vmem:[%s206] sm:%s4]
    %s208 = scalar_lea.vmem [#allocation1], 696
    %209 = vst [vmem:[%s208] sm:%s4] %v207
    %s210 = smul.addr 2, 86
    %s211 = scalar_lea.vmem %s0, %s210
    %v212 = vld [vmem:[%s211] sm:%s4]
    %s213 = scalar_lea.vmem [#allocation1], 688
    %214 = vst [vmem:[%s213] sm:%s4] %v212
    %s215 = smul.addr 2, 85
    %s216 = scalar_lea.vmem %s0, %s215
    %v217 = vld [vmem:[%s216] sm:%s4]
    %s218 = scalar_lea.vmem [#allocation1], 680
    %219 = vst [vmem:[%s218] sm:%s4] %v217
    %s220 = smul.addr 2, 84
    %s221 = scalar_lea.vmem %s0, %s220
    %v222 = vld [vmem:[%s221] sm:%s4]
    %s223 = scalar_lea.vmem [#allocation1], 672
    %224 = vst [vmem:[%s223] sm:%s4] %v222
    %s225 = smul.addr 2, 83
    %s226 = scalar_lea.vmem %s0, %s225
    %v227 = vld [vmem:[%s226] sm:%s4]
    %s228 = scalar_lea.vmem [#allocation1], 664
    %229 = vst [vmem:[%s228] sm:%s4] %v227
    %s230 = smul.addr 2, 82
    %s231 = scalar_lea.vmem %s0, %s230
    %v232 = vld [vmem:[%s231] sm:%s4]
    %s233 = scalar_lea.vmem [#allocation1], 656
    %234 = vst [vmem:[%s233] sm:%s4] %v232
    %s235 = smul.addr 2, 81
    %s236 = scalar_lea.vmem %s0, %s235
    %v237 = vld [vmem:[%s236] sm:%s4]
    %s238 = scalar_lea.vmem [#allocation1], 648
    %239 = vst [vmem:[%s238] sm:%s4] %v237
    %s240 = smul.addr 2, 80
    %s241 = scalar_lea.vmem %s0, %s240
    %v242 = vld [vmem:[%s241] sm:%s4]
    %s243 = scalar_lea.vmem [#allocation1], 640
    %244 = vst [vmem:[%s243] sm:%s4] %v242
    %s245 = smul.addr 2, 79
    %s246 = scalar_lea.vmem %s0, %s245
    %v247 = vld [vmem:[%s246] sm:%s4]
    %s248 = scalar_lea.vmem [#allocation1], 632
    %249 = vst [vmem:[%s248] sm:%s4] %v247
    %s250 = smul.addr 2, 78
    %s251 = scalar_lea.vmem %s0, %s250
    %v252 = vld [vmem:[%s251] sm:%s4]
    %s253 = scalar_lea.vmem [#allocation1], 624
    %254 = vst [vmem:[%s253] sm:%s4] %v252
    %s255 = smul.addr 2, 77
    %s256 = scalar_lea.vmem %s0, %s255
    %v257 = vld [vmem:[%s256] sm:%s4]
    %s258 = scalar_lea.vmem [#allocation1], 616
    %259 = vst [vmem:[%s258] sm:%s4] %v257
    %s260 = smul.addr 2, 76
    %s261 = scalar_lea.vmem %s0, %s260
    %v262 = vld [vmem:[%s261] sm:%s4]
    %s263 = scalar_lea.vmem [#allocation1], 608
    %264 = vst [vmem:[%s263] sm:%s4] %v262
    %s265 = smul.addr 2, 75
    %s266 = scalar_lea.vmem %s0, %s265
    %v267 = vld [vmem:[%s266] sm:%s4]
    %s268 = scalar_lea.vmem [#allocation1], 600
    %269 = vst [vmem:[%s268] sm:%s4] %v267
    %s270 = smul.addr 2, 74
    %s271 = scalar_lea.vmem %s0, %s270
    %v272 = vld [vmem:[%s271] sm:%s4]
    %s273 = scalar_lea.vmem [#allocation1], 592
    %274 = vst [vmem:[%s273] sm:%s4] %v272
    %s275 = smul.addr 2, 73
    %s276 = scalar_lea.vmem %s0, %s275
    %v277 = vld [vmem:[%s276] sm:%s4]
    %s278 = scalar_lea.vmem [#allocation1], 584
    %279 = vst [vmem:[%s278] sm:%s4] %v277
    %s280 = smul.addr 2, 72
    %s281 = scalar_lea.vmem %s0, %s280
    %v282 = vld [vmem:[%s281] sm:%s4]
    %s283 = scalar_lea.vmem [#allocation1], 576
    %284 = vst [vmem:[%s283] sm:%s4] %v282
    %s285 = smul.addr 2, 71
    %s286 = scalar_lea.vmem %s0, %s285
    %v287 = vld [vmem:[%s286] sm:%s4]
    %s288 = scalar_lea.vmem [#allocation1], 568
    %289 = vst [vmem:[%s288] sm:%s4] %v287
    %s290 = smul.addr 2, 70
    %s291 = scalar_lea.vmem %s0, %s290
    %v292 = vld [vmem:[%s291] sm:%s4]
    %s293 = scalar_lea.vmem [#allocation1], 560
    %294 = vst [vmem:[%s293] sm:%s4] %v292
    %s295 = smul.addr 2, 69
    %s296 = scalar_lea.vmem %s0, %s295
    %v297 = vld [vmem:[%s296] sm:%s4]
    %s298 = scalar_lea.vmem [#allocation1], 552
    %299 = vst [vmem:[%s298] sm:%s4] %v297
    %s300 = smul.addr 2, 68
    %s301 = scalar_lea.vmem %s0, %s300
    %v302 = vld [vmem:[%s301] sm:%s4]
    %s303 = scalar_lea.vmem [#allocation1], 544
    %304 = vst [vmem:[%s303] sm:%s4] %v302
    %s305 = smul.addr 2, 67
    %s306 = scalar_lea.vmem %s0, %s305
    %v307 = vld [vmem:[%s306] sm:%s4]
    %s308 = scalar_lea.vmem [#allocation1], 536
    %309 = vst [vmem:[%s308] sm:%s4] %v307
    %s310 = smul.addr 2, 66
    %s311 = scalar_lea.vmem %s0, %s310
    %v312 = vld [vmem:[%s311] sm:%s4]
    %s313 = scalar_lea.vmem [#allocation1], 528
    %314 = vst [vmem:[%s313] sm:%s4] %v312
    %s315 = smul.addr 2, 65
    %s316 = scalar_lea.vmem %s0, %s315
    %v317 = vld [vmem:[%s316] sm:%s4]
    %s318 = scalar_lea.vmem [#allocation1], 520
    %319 = vst [vmem:[%s318] sm:%s4] %v317
    %s320 = smul.addr 2, 64
    %s321 = scalar_lea.vmem %s0, %s320
    %v322 = vld [vmem:[%s321] sm:%s4]
    %s323 = scalar_lea.vmem [#allocation1], 512
    %324 = vst [vmem:[%s323] sm:%s4] %v322
    %s325 = smul.addr 2, 63
    %s326 = scalar_lea.vmem %s0, %s325
    %v327 = vld [vmem:[%s326] sm:%s4]
    %s328 = scalar_lea.vmem [#allocation1], 504
    %329 = vst [vmem:[%s328] sm:%s4] %v327
    %s330 = smul.addr 2, 62
    %s331 = scalar_lea.vmem %s0, %s330
    %v332 = vld [vmem:[%s331] sm:%s4]
    %s333 = scalar_lea.vmem [#allocation1], 496
    %334 = vst [vmem:[%s333] sm:%s4] %v332
    %s335 = smul.addr 2, 61
    %s336 = scalar_lea.vmem %s0, %s335
    %v337 = vld [vmem:[%s336] sm:%s4]
    %s338 = scalar_lea.vmem [#allocation1], 488
    %339 = vst [vmem:[%s338] sm:%s4] %v337
    %s340 = smul.addr 2, 60
    %s341 = scalar_lea.vmem %s0, %s340
    %v342 = vld [vmem:[%s341] sm:%s4]
    %s343 = scalar_lea.vmem [#allocation1], 480
    %344 = vst [vmem:[%s343] sm:%s4] %v342
    %s345 = smul.addr 2, 59
    %s346 = scalar_lea.vmem %s0, %s345
    %v347 = vld [vmem:[%s346] sm:%s4]
    %s348 = scalar_lea.vmem [#allocation1], 472
    %349 = vst [vmem:[%s348] sm:%s4] %v347
    %s350 = smul.addr 2, 58
    %s351 = scalar_lea.vmem %s0, %s350
    %v352 = vld [vmem:[%s351] sm:%s4]
    %s353 = scalar_lea.vmem [#allocation1], 464
    %354 = vst [vmem:[%s353] sm:%s4] %v352
    %s355 = smul.addr 2, 57
    %s356 = scalar_lea.vmem %s0, %s355
    %v357 = vld [vmem:[%s356] sm:%s4]
    %s358 = scalar_lea.vmem [#allocation1], 456
    %359 = vst [vmem:[%s358] sm:%s4] %v357
    %s360 = smul.addr 2, 56
    %s361 = scalar_lea.vmem %s0, %s360
    %v362 = vld [vmem:[%s361] sm:%s4]
    %s363 = scalar_lea.vmem [#allocation1], 448
    %364 = vst [vmem:[%s363] sm:%s4] %v362
    %s365 = smul.addr 2, 55
    %s366 = scalar_lea.vmem %s0, %s365
    %v367 = vld [vmem:[%s366] sm:%s4]
    %s368 = scalar_lea.vmem [#allocation1], 440
    %369 = vst [vmem:[%s368] sm:%s4] %v367
    %s370 = smul.addr 2, 54
    %s371 = scalar_lea.vmem %s0, %s370
    %v372 = vld [vmem:[%s371] sm:%s4]
    %s373 = scalar_lea.vmem [#allocation1], 432
    %374 = vst [vmem:[%s373] sm:%s4] %v372
    %s375 = smul.addr 2, 53
    %s376 = scalar_lea.vmem %s0, %s375
    %v377 = vld [vmem:[%s376] sm:%s4]
    %s378 = scalar_lea.vmem [#allocation1], 424
    %379 = vst [vmem:[%s378] sm:%s4] %v377
    %s380 = smul.addr 2, 52
    %s381 = scalar_lea.vmem %s0, %s380
    %v382 = vld [vmem:[%s381] sm:%s4]
    %s383 = scalar_lea.vmem [#allocation1], 416
    %384 = vst [vmem:[%s383] sm:%s4] %v382
    %s385 = smul.addr 2, 51
    %s386 = scalar_lea.vmem %s0, %s385
    %v387 = vld [vmem:[%s386] sm:%s4]
    %s388 = scalar_lea.vmem [#allocation1], 408
    %389 = vst [vmem:[%s388] sm:%s4] %v387
    %s390 = smul.addr 2, 50
    %s391 = scalar_lea.vmem %s0, %s390
    %v392 = vld [vmem:[%s391] sm:%s4]
    %s393 = scalar_lea.vmem [#allocation1], 400
    %394 = vst [vmem:[%s393] sm:%s4] %v392
    %s395 = smul.addr 2, 49
    %s396 = scalar_lea.vmem %s0, %s395
    %v397 = vld [vmem:[%s396] sm:%s4]
    %s398 = scalar_lea.vmem [#allocation1], 392
    %399 = vst [vmem:[%s398] sm:%s4] %v397
    %s400 = smul.addr 2, 48
    %s401 = scalar_lea.vmem %s0, %s400
    %v402 = vld [vmem:[%s401] sm:%s4]
    %s403 = scalar_lea.vmem [#allocation1], 384
    %404 = vst [vmem:[%s403] sm:%s4] %v402
    %s405 = smul.addr 2, 47
    %s406 = scalar_lea.vmem %s0, %s405
    %v407 = vld [vmem:[%s406] sm:%s4]
    %s408 = scalar_lea.vmem [#allocation1], 376
    %409 = vst [vmem:[%s408] sm:%s4] %v407
    %s410 = smul.addr 2, 46
    %s411 = scalar_lea.vmem %s0, %s410
    %v412 = vld [vmem:[%s411] sm:%s4]
    %s413 = scalar_lea.vmem [#allocation1], 368
    %414 = vst [vmem:[%s413] sm:%s4] %v412
    %s415 = smul.addr 2, 45
    %s416 = scalar_lea.vmem %s0, %s415
    %v417 = vld [vmem:[%s416] sm:%s4]
    %s418 = scalar_lea.vmem [#allocation1], 360
    %419 = vst [vmem:[%s418] sm:%s4] %v417
    %s420 = smul.addr 2, 44
    %s421 = scalar_lea.vmem %s0, %s420
    %v422 = vld [vmem:[%s421] sm:%s4]
    %s423 = scalar_lea.vmem [#allocation1], 352
    %424 = vst [vmem:[%s423] sm:%s4] %v422
    %s425 = smul.addr 2, 43
    %s426 = scalar_lea.vmem %s0, %s425
    %v427 = vld [vmem:[%s426] sm:%s4]
    %s428 = scalar_lea.vmem [#allocation1], 344
    %429 = vst [vmem:[%s428] sm:%s4] %v427
    %s430 = smul.addr 2, 42
    %s431 = scalar_lea.vmem %s0, %s430
    %v432 = vld [vmem:[%s431] sm:%s4]
    %s433 = scalar_lea.vmem [#allocation1], 336
    %434 = vst [vmem:[%s433] sm:%s4] %v432
    %s435 = smul.addr 2, 41
    %s436 = scalar_lea.vmem %s0, %s435
    %v437 = vld [vmem:[%s436] sm:%s4]
    %s438 = scalar_lea.vmem [#allocation1], 328
    %439 = vst [vmem:[%s438] sm:%s4] %v437
    %s440 = smul.addr 2, 40
    %s441 = scalar_lea.vmem %s0, %s440
    %v442 = vld [vmem:[%s441] sm:%s4]
    %s443 = scalar_lea.vmem [#allocation1], 320
    %444 = vst [vmem:[%s443] sm:%s4] %v442
    %s445 = smul.addr 2, 39
    %s446 = scalar_lea.vmem %s0, %s445
    %v447 = vld [vmem:[%s446] sm:%s4]
    %s448 = scalar_lea.vmem [#allocation1], 312
    %449 = vst [vmem:[%s448] sm:%s4] %v447
    %s450 = smul.addr 2, 38
    %s451 = scalar_lea.vmem %s0, %s450
    %v452 = vld [vmem:[%s451] sm:%s4]
    %s453 = scalar_lea.vmem [#allocation1], 304
    %454 = vst [vmem:[%s453] sm:%s4] %v452
    %s455 = smul.addr 2, 37
    %s456 = scalar_lea.vmem %s0, %s455
    %v457 = vld [vmem:[%s456] sm:%s4]
    %s458 = scalar_lea.vmem [#allocation1], 296
    %459 = vst [vmem:[%s458] sm:%s4] %v457
    %s460 = smul.addr 2, 36
    %s461 = scalar_lea.vmem %s0, %s460
    %v462 = vld [vmem:[%s461] sm:%s4]
    %s463 = scalar_lea.vmem [#allocation1], 288
    %464 = vst [vmem:[%s463] sm:%s4] %v462
    %s465 = smul.addr 2, 35
    %s466 = scalar_lea.vmem %s0, %s465
    %v467 = vld [vmem:[%s466] sm:%s4]
    %s468 = scalar_lea.vmem [#allocation1], 280
    %469 = vst [vmem:[%s468] sm:%s4] %v467
    %s470 = smul.addr 2, 34
    %s471 = scalar_lea.vmem %s0, %s470
    %v472 = vld [vmem:[%s471] sm:%s4]
    %s473 = scalar_lea.vmem [#allocation1], 272
    %474 = vst [vmem:[%s473] sm:%s4] %v472
    %s475 = smul.addr 2, 33
    %s476 = scalar_lea.vmem %s0, %s475
    %v477 = vld [vmem:[%s476] sm:%s4]
    %s478 = scalar_lea.vmem [#allocation1], 264
    %479 = vst [vmem:[%s478] sm:%s4] %v477
    %s480 = smul.addr 2, 32
    %s481 = scalar_lea.vmem %s0, %s480
    %v482 = vld [vmem:[%s481] sm:%s4]
    %s483 = scalar_lea.vmem [#allocation1], 256
    %484 = vst [vmem:[%s483] sm:%s4] %v482
    %s485 = smul.addr 2, 31
    %s486 = scalar_lea.vmem %s0, %s485
    %v487 = vld [vmem:[%s486] sm:%s4]
    %s488 = scalar_lea.vmem [#allocation1], 248
    %489 = vst [vmem:[%s488] sm:%s4] %v487
    %s490 = smul.addr 2, 30
    %s491 = scalar_lea.vmem %s0, %s490
    %v492 = vld [vmem:[%s491] sm:%s4]
    %s493 = scalar_lea.vmem [#allocation1], 240
    %494 = vst [vmem:[%s493] sm:%s4] %v492
    %s495 = smul.addr 2, 29
    %s496 = scalar_lea.vmem %s0, %s495
    %v497 = vld [vmem:[%s496] sm:%s4]
    %s498 = scalar_lea.vmem [#allocation1], 232
    %499 = vst [vmem:[%s498] sm:%s4] %v497
    %s500 = smul.addr 2, 28
    %s501 = scalar_lea.vmem %s0, %s500
    %v502 = vld [vmem:[%s501] sm:%s4]
    %s503 = scalar_lea.vmem [#allocation1], 224
    %504 = vst [vmem:[%s503] sm:%s4] %v502
    %s505 = smul.addr 2, 27
    %s506 = scalar_lea.vmem %s0, %s505
    %v507 = vld [vmem:[%s506] sm:%s4]
    %s508 = scalar_lea.vmem [#allocation1], 216
    %509 = vst [vmem:[%s508] sm:%s4] %v507
    %s510 = smul.addr 2, 26
    %s511 = scalar_lea.vmem %s0, %s510
    %v512 = vld [vmem:[%s511] sm:%s4]
    %s513 = scalar_lea.vmem [#allocation1], 208
    %514 = vst [vmem:[%s513] sm:%s4] %v512
    %s515 = smul.addr 2, 25
    %s516 = scalar_lea.vmem %s0, %s515
    %v517 = vld [vmem:[%s516] sm:%s4]
    %s518 = scalar_lea.vmem [#allocation1], 200
    %519 = vst [vmem:[%s518] sm:%s4] %v517
    %s520 = smul.addr 2, 24
    %s521 = scalar_lea.vmem %s0, %s520
    %v522 = vld [vmem:[%s521] sm:%s4]
    %s523 = scalar_lea.vmem [#allocation1], 192
    %524 = vst [vmem:[%s523] sm:%s4] %v522
    %s525 = smul.addr 2, 23
    %s526 = scalar_lea.vmem %s0, %s525
    %v527 = vld [vmem:[%s526] sm:%s4]
    %s528 = scalar_lea.vmem [#allocation1], 184
    %529 = vst [vmem:[%s528] sm:%s4] %v527
    %s530 = smul.addr 2, 22
    %s531 = scalar_lea.vmem %s0, %s530
    %v532 = vld [vmem:[%s531] sm:%s4]
    %s533 = scalar_lea.vmem [#allocation1], 176
    %534 = vst [vmem:[%s533] sm:%s4] %v532
    %s535 = smul.addr 2, 21
    %s536 = scalar_lea.vmem %s0, %s535
    %v537 = vld [vmem:[%s536] sm:%s4]
    %s538 = scalar_lea.vmem [#allocation1], 168
    %539 = vst [vmem:[%s538] sm:%s4] %v537
    %s540 = smul.addr 2, 20
    %s541 = scalar_lea.vmem %s0, %s540
    %v542 = vld [vmem:[%s541] sm:%s4]
    %s543 = scalar_lea.vmem [#allocation1], 160
    %544 = vst [vmem:[%s543] sm:%s4] %v542
    %s545 = smul.addr 2, 19
    %s546 = scalar_lea.vmem %s0, %s545
    %v547 = vld [vmem:[%s546] sm:%s4]
    %s548 = scalar_lea.vmem [#allocation1], 152
    %549 = vst [vmem:[%s548] sm:%s4] %v547
    %s550 = smul.addr 2, 18
    %s551 = scalar_lea.vmem %s0, %s550
    %v552 = vld [vmem:[%s551] sm:%s4]
    %s553 = scalar_lea.vmem [#allocation1], 144
    %554 = vst [vmem:[%s553] sm:%s4] %v552
    %s555 = smul.addr 2, 17
    %s556 = scalar_lea.vmem %s0, %s555
    %v557 = vld [vmem:[%s556] sm:%s4]
    %s558 = scalar_lea.vmem [#allocation1], 136
    %559 = vst [vmem:[%s558] sm:%s4] %v557
    %s560 = smul.addr 2, 16
    %s561 = scalar_lea.vmem %s0, %s560
    %v562 = vld [vmem:[%s561] sm:%s4]
    %s563 = scalar_lea.vmem [#allocation1], 128
    %564 = vst [vmem:[%s563] sm:%s4] %v562
    %s565 = smul.addr 2, 15
    %s566 = scalar_lea.vmem %s0, %s565
    %v567 = vld [vmem:[%s566] sm:%s4]
    %s568 = scalar_lea.vmem [#allocation1], 120
    %569 = vst [vmem:[%s568] sm:%s4] %v567
    %s570 = smul.addr 2, 14
    %s571 = scalar_lea.vmem %s0, %s570
    %v572 = vld [vmem:[%s571] sm:%s4]
    %s573 = scalar_lea.vmem [#allocation1], 112
    %574 = vst [vmem:[%s573] sm:%s4] %v572
    %s575 = smul.addr 2, 13
    %s576 = scalar_lea.vmem %s0, %s575
    %v577 = vld [vmem:[%s576] sm:%s4]
    %s578 = scalar_lea.vmem [#allocation1], 104
    %579 = vst [vmem:[%s578] sm:%s4] %v577
    %s580 = smul.addr 2, 12
    %s581 = scalar_lea.vmem %s0, %s580
    %v582 = vld [vmem:[%s581] sm:%s4]
    %s583 = scalar_lea.vmem [#allocation1], 96
    %584 = vst [vmem:[%s583] sm:%s4] %v582
    %s585 = smul.addr 2, 11
    %s586 = scalar_lea.vmem %s0, %s585
    %v587 = vld [vmem:[%s586] sm:%s4]
    %s588 = scalar_lea.vmem [#allocation1], 88
    %589 = vst [vmem:[%s588] sm:%s4] %v587
    %s590 = smul.addr 2, 10
    %s591 = scalar_lea.vmem %s0, %s590
    %v592 = vld [vmem:[%s591] sm:%s4]
    %s593 = scalar_lea.vmem [#allocation1], 80
    %594 = vst [vmem:[%s593] sm:%s4] %v592
    %s595 = smul.addr 2, 9
    %s596 = scalar_lea.vmem %s0, %s595
    %v597 = vld [vmem:[%s596] sm:%s4]
    %s598 = scalar_lea.vmem [#allocation1], 72
    %599 = vst [vmem:[%s598] sm:%s4] %v597
    %s600 = smul.addr 2, 8
    %s601 = scalar_lea.vmem %s0, %s600
    %v602 = vld [vmem:[%s601] sm:%s4]
    %s603 = scalar_lea.vmem [#allocation1], 64
    %604 = vst [vmem:[%s603] sm:%s4] %v602
    %s605 = smul.addr 2, 7
    %s606 = scalar_lea.vmem %s0, %s605
    %v607 = vld [vmem:[%s606] sm:%s4]
    %s608 = scalar_lea.vmem [#allocation1], 56
    %609 = vst [vmem:[%s608] sm:%s4] %v607
    %s610 = smul.addr 2, 6
    %s611 = scalar_lea.vmem %s0, %s610
    %v612 = vld [vmem:[%s611] sm:%s4]
    %s613 = scalar_lea.vmem [#allocation1], 48
    %614 = vst [vmem:[%s613] sm:%s4] %v612
    %s615 = smul.addr 2, 5
    %s616 = scalar_lea.vmem %s0, %s615
    %v617 = vld [vmem:[%s616] sm:%s4]
    %s618 = scalar_lea.vmem [#allocation1], 40
    %619 = vst [vmem:[%s618] sm:%s4] %v617
    %s620 = smul.addr 2, 4
    %s621 = scalar_lea.vmem %s0, %s620
    %v622 = vld [vmem:[%s621] sm:%s4]
    %s623 = scalar_lea.vmem [#allocation1], 32
    %624 = vst [vmem:[%s623] sm:%s4] %v622
    %s625 = smul.addr 2, 3
    %s626 = scalar_lea.vmem %s0, %s625
    %v627 = vld [vmem:[%s626] sm:%s4]
    %s628 = scalar_lea.vmem [#allocation1], 24
    %629 = vst [vmem:[%s628] sm:%s4] %v627
    %s630 = smul.addr 2, 2
    %s631 = scalar_lea.vmem %s0, %s630
    %v632 = vld [vmem:[%s631] sm:%s4]
    %s633 = scalar_lea.vmem [#allocation1], 16
    %634 = vst [vmem:[%s633] sm:%s4] %v632
    %s635 = scalar_lea.vmem %s0, 2
    %v636 = vld [vmem:[%s635] sm:%s4]
    %s637 = scalar_lea.vmem [#allocation1], 8
    %638 = vst [vmem:[%s637] sm:%s4] %v636
    %v639 = vld [vmem:[%s0] sm:%s4]
    %640 = vst [vmem:[#allocation1] sm:%s4] %v639
    %v641 = vld [vmem:[#allocation1] sm:$0x1]
    %s642 = scalar_lea.vmem [#allocation1], 63
    %v643 = vld [vmem:[%s642] sm:$0x2]
    %vm644 = vcmask 1041409
    %v645 = vsel %vm644, %v643, %v641
    %s646 = scalar_lea.vmem [#allocation1], 126
    %v647 = vld [vmem:[%s646] sm:$0x4]
    %vm648 = vcmask 1042434
    %v649 = vsel %vm648, %v647, %v645
    %s650 = scalar_lea.vmem [#allocation1], 189
    %v651 = vld [vmem:[%s650] sm:$0x8]
    %vm652 = vcmask 1043459
    %v653 = vsel %vm652, %v651, %v649
    %s654 = scalar_lea.vmem [#allocation1], 252
    %v655 = vld [vmem:[%s654] sm:$0x10]
    %vm656 = vcmask 1044484
    %v657 = vsel %vm656, %v655, %v653
    %s658 = scalar_lea.vmem [#allocation1], 315
    %v659 = vld [vmem:[%s658] sm:$0x20]
    %vm660 = vcmask 1045509
    %v661 = vsel %vm660, %v659, %v657
    %s662 = scalar_lea.vmem [#allocation1], 378
    %v663 = vld [vmem:[%s662] sm:$0x40]
    %vm664 = vcmask 1046534
    %v665 = vsel %vm664, %v663, %v661
    %s666 = scalar_lea.vmem [#allocation1], 441
    %v667 = vld [vmem:[%s666] sm:$0x80]
    %vm668 = vcmask 1047559
    %v669 = vsel %vm668, %v667, %v665
    %vm670 = vcmask 64512
    %671 = vst.msk [vmem:[#allocation0] ss:$8 sm:$0xf] %vm670, %v669
    %s672 = scalar_lea.vmem [#allocation0], 4294967265
    %673 = vst.msk [vmem:[%s672] ss:$8 sm:$0xf0] %vm670, %v669
    %s674 = scalar_lea.vmem [#allocation1], 512
    %v675 = vld [vmem:[%s674] sm:$0x1]
    %s676 = scalar_lea.vmem [#allocation1], 575
    %v677 = vld [vmem:[%s676] sm:$0x2]
    %vm678 = vcmask 1041409
    %v679 = vsel %vm678, %v677, %v675
    %s680 = scalar_lea.vmem [#allocation1], 638
    %v681 = vld [vmem:[%s680] sm:$0x4]
    %vm682 = vcmask 1042434
    %v683 = vsel %vm682, %v681, %v679
    %s684 = scalar_lea.vmem [#allocation1], 701
    %v685 = vld [vmem:[%s684] sm:$0x8]
    %vm686 = vcmask 1043459
    %v687 = vsel %vm686, %v685, %v683
    %s688 = scalar_lea.vmem [#allocation1], 764
    %v689 = vld [vmem:[%s688] sm:$0x10]
    %vm690 = vcmask 1044484
    %v691 = vsel %vm690, %v689, %v687
    %s692 = scalar_lea.vmem [#allocation1], 827
    %v693 = vld [vmem:[%s692] sm:$0x20]
    %vm694 = vcmask 1045509
    %v695 = vsel %vm694, %v693, %v691
    %s696 = scalar_lea.vmem [#allocation1], 890
    %v697 = vld [vmem:[%s696] sm:$0x40]
    %vm698 = vcmask 1046534
    %v699 = vsel %vm698, %v697, %v695
    %s700 = scalar_lea.vmem [#allocation1], 953
    %v701 = vld [vmem:[%s700] sm:$0x80]
    %vm702 = vcmask 1047559
    %v703 = vsel %vm702, %v701, %v699
    %vm704 = vcmask 64512
    %s705 = scalar_lea.vmem [#allocation0], 2
    %706 = vst.msk [vmem:[%s705] ss:$8 sm:$0xf] %vm704, %v703
    %s707 = scalar_lea.vmem [#allocation0], 4294967267
    %708 = vst.msk [vmem:[%s707] ss:$8 sm:$0xf0] %vm704, %v703
    %s709 = scalar_lea.vmem [#allocation1], 57
    %v710 = vld [vmem:[%s709] sm:$0x1]
    %s711 = scalar_lea.vmem [#allocation1], 312
    %v712 = vld [vmem:[%s711] sm:$0x2]
    %vm713 = vcmask 1041409
    %v714 = vsel %vm713, %v712, %v710
    %s715 = scalar_lea.vmem [#allocation1], 567
    %v716 = vld [vmem:[%s715] sm:$0x4]
    %vm717 = vcmask 1042434
    %v718 = vsel %vm717, %v716, %v714
    %s719 = scalar_lea.vmem [#allocation1], 822
    %v720 = vld [vmem:[%s719] sm:$0x8]
    %vm721 = vcmask 1043459
    %v722 = vsel %vm721, %v720, %v718
    %s723 = scalar_lea.vmem [#allocation1], 117
    %v724 = vld [vmem:[%s723] sm:$0x10]
    %vm725 = vcmask 1044484
    %v726 = vsel %vm725, %v724, %v722
    %s727 = scalar_lea.vmem [#allocation1], 372
    %v728 = vld [vmem:[%s727] sm:$0x20]
    %vm729 = vcmask 1045509
    %v730 = vsel %vm729, %v728, %v726
    %s731 = scalar_lea.vmem [#allocation1], 627
    %v732 = vld [vmem:[%s731] sm:$0x40]
    %vm733 = vcmask 1046534
    %v734 = vsel %vm733, %v732, %v730
    %s735 = scalar_lea.vmem [#allocation1], 882
    %v736 = vld [vmem:[%s735] sm:$0x80]
    %vm737 = vcmask 1047559
    %v738 = vsel %vm737, %v736, %v734
    %739 = vrot.lane.b32.xlu0 %v738, 120
    %v740 = vpop.permute.xlu0 %739
    %vm741 = vcmask 1048512
    %742 = vst.msk [vmem:[#allocation0] sm:$0xf] %vm741, %v740
    %s743 = scalar_lea.vmem [#allocation0], 4
    %744 = vst.msk [vmem:[%s743] sm:$0xf0] %vm741, %v740
    %s745 = scalar_lea.vmem [#allocation1], 185
    %v746 = vld [vmem:[%s745] sm:$0x1]
    %s747 = scalar_lea.vmem [#allocation1], 440
    %v748 = vld [vmem:[%s747] sm:$0x2]
    %vm749 = vcmask 1041409
    %v750 = vsel %vm749, %v748, %v746
    %s751 = scalar_lea.vmem [#allocation1], 695
    %v752 = vld [vmem:[%s751] sm:$0x4]
    %vm753 = vcmask 1042434
    %v754 = vsel %vm753, %v752, %v750
    %s755 = scalar_lea.vmem [#allocation1], 950
    %v756 = vld [vmem:[%s755] sm:$0x8]
    %vm757 = vcmask 1043459
    %v758 = vsel %vm757, %v756, %v754
    %s759 = scalar_lea.vmem [#allocation1], 245
    %v760 = vld [vmem:[%s759] sm:$0x10]
    %vm761 = vcmask 1044484
    %v762 = vsel %vm761, %v760, %v758
    %s763 = scalar_lea.vmem [#allocation1], 500
    %v764 = vld [vmem:[%s763] sm:$0x20]
    %vm765 = vcmask 1045509
    %v766 = vsel %vm765, %v764, %v762
    %s767 = scalar_lea.vmem [#allocation1], 755
    %v768 = vld [vmem:[%s767] sm:$0x40]
    %vm769 = vcmask 1046534
    %v770 = vsel %vm769, %v768, %v766
    %s771 = scalar_lea.vmem [#allocation1], 1010
    %v772 = vld [vmem:[%s771] sm:$0x80]
    %vm773 = vcmask 1047559
    %v774 = vsel %vm773, %v772, %v770
    %775 = vrot.lane.b32.xlu0 %v774, 120
    %v776 = vpop.permute.xlu0 %775
    %vm777 = vcmask 1048512
    %s778 = scalar_lea.vmem [#allocation0], 16
    %779 = vst.msk [vmem:[%s778] sm:$0xf] %vm777, %v776
    %s780 = scalar_lea.vmem [#allocation0], 20
    %781 = vst.msk [vmem:[%s780] sm:$0xf0] %vm777, %v776
    %s782 = scalar_lea.vmem [#allocation1], 56
    %v783 = vld [vmem:[%s782] sm:$0x1]
    %s784 = scalar_lea.vmem [#allocation1], 311
    %v785 = vld [vmem:[%s784] sm:$0x2]
    %vm786 = vcmask 1041409
    %v787 = vsel %vm786, %v785, %v783
    %s788 = scalar_lea.vmem [#allocation1], 566
    %v789 = vld [vmem:[%s788] sm:$0x4]
    %vm790 = vcmask 1042434
    %v791 = vsel %vm790, %v789, %v787
    %s792 = scalar_lea.vmem [#allocation1], 821
    %v793 = vld [vmem:[%s792] sm:$0x8]
    %vm794 = vcmask 1043459
    %v795 = vsel %vm794, %v793, %v791
    %s796 = scalar_lea.vmem [#allocation1], 116
    %v797 = vld [vmem:[%s796] sm:$0x10]
    %vm798 = vcmask 1044484
    %v799 = vsel %vm798, %v797, %v795
    %s800 = scalar_lea.vmem [#allocation1], 371
    %v801 = vld [vmem:[%s800] sm:$0x20]
    %vm802 = vcmask 1045509
    %v803 = vsel %vm802, %v801, %v799
    %s804 = scalar_lea.vmem [#allocation1], 626
    %v805 = vld [vmem:[%s804] sm:$0x40]
    %vm806 = vcmask 1046534
    %v807 = vsel %vm806, %v805, %v803
    %s808 = scalar_lea.vmem [#allocation1], 881
    %v809 = vld [vmem:[%s808] sm:$0x80]
    %vm810 = vcmask 1047559
    %v811 = vsel %vm810, %v809, %v807
    %812 = vrot.lane.b32.xlu0 %v811, 112
    %v813 = vpop.permute.xlu0 %812
    %vm814 = vcmask 982912
    %815 = vst.msk [vmem:[#allocation0] sm:$0xf] %vm814, %v813
    %s816 = scalar_lea.vmem [#allocation0], 4
    %817 = vst.msk [vmem:[%s816] sm:$0xf0] %vm814, %v813
    %s818 = scalar_lea.vmem [#allocation1], 184
    %v819 = vld [vmem:[%s818] sm:$0x1]
    %s820 = scalar_lea.vmem [#allocation1], 439
    %v821 = vld [vmem:[%s820] sm:$0x2]
    %vm822 = vcmask 1041409
    %v823 = vsel %vm822, %v821, %v819
    %s824 = scalar_lea.vmem [#allocation1], 694
    %v825 = vld [vmem:[%s824] sm:$0x4]
    %vm826 = vcmask 1042434
    %v827 = vsel %vm826, %v825, %v823
    %s828 = scalar_lea.vmem [#allocation1], 949
    %v829 = vld [vmem:[%s828] sm:$0x8]
    %vm830 = vcmask 1043459
    %v831 = vsel %vm830, %v829, %v827
    %s832 = scalar_lea.vmem [#allocation1], 244
    %v833 = vld [vmem:[%s832] sm:$0x10]
    %vm834 = vcmask 1044484
    %v835 = vsel %vm834, %v833, %v831
    %s836 = scalar_lea.vmem [#allocation1], 499
    %v837 = vld [vmem:[%s836] sm:$0x20]
    %vm838 = vcmask 1045509
    %v839 = vsel %vm838, %v837, %v835
    %s840 = scalar_lea.vmem [#allocation1], 754
    %v841 = vld [vmem:[%s840] sm:$0x40]
    %vm842 = vcmask 1046534
    %v843 = vsel %vm842, %v841, %v839
    %s844 = scalar_lea.vmem [#allocation1], 1009
    %v845 = vld [vmem:[%s844] sm:$0x80]
    %vm846 = vcmask 1047559
    %v847 = vsel %vm846, %v845, %v843
    %848 = vrot.lane.b32.xlu0 %v847, 112
    %v849 = vpop.permute.xlu0 %848
    %vm850 = vcmask 982912
    %s851 = scalar_lea.vmem [#allocation0], 16
    %852 = vst.msk [vmem:[%s851] sm:$0xf] %vm850, %v849
    %s853 = scalar_lea.vmem [#allocation0], 20
    %854 = vst.msk [vmem:[%s853] sm:$0xf0] %vm850, %v849
    %s855 = scalar_lea.vmem [#allocation1], 49
    %v856 = vld [vmem:[%s855] sm:$0x1]
    %s857 = scalar_lea.vmem [#allocation1], 304
    %v858 = vld [vmem:[%s857] sm:$0x2]
    %vm859 = vcmask 1041409
    %v860 = vsel %vm859, %v858, %v856
    %s861 = scalar_lea.vmem [#allocation1], 559
    %v862 = vld [vmem:[%s861] sm:$0x4]
    %vm863 = vcmask 1042434
    %v864 = vsel %vm863, %v862, %v860
    %s865 = scalar_lea.vmem [#allocation1], 814
    %v866 = vld [vmem:[%s865] sm:$0x8]
    %vm867 = vcmask 1043459
    %v868 = vsel %vm867, %v866, %v864
    %s869 = scalar_lea.vmem [#allocation1], 109
    %v870 = vld [vmem:[%s869] sm:$0x10]
    %vm871 = vcmask 1044484
    %v872 = vsel %vm871, %v870, %v868
    %s873 = scalar_lea.vmem [#allocation1], 364
    %v874 = vld [vmem:[%s873] sm:$0x20]
    %vm875 = vcmask 1045509
    %v876 = vsel %vm875, %v874, %v872
    %s877 = scalar_lea.vmem [#allocation1], 619
    %v878 = vld [vmem:[%s877] sm:$0x40]
    %vm879 = vcmask 1046534
    %v880 = vsel %vm879, %v878, %v876
    %s881 = scalar_lea.vmem [#allocation1], 874
    %v882 = vld [vmem:[%s881] sm:$0x80]
    %vm883 = vcmask 1047559
    %v884 = vsel %vm883, %v882, %v880
    %885 = vrot.lane.b32.xlu0 %v884, 104
    %v886 = vpop.permute.xlu0 %885
    %vm887 = vcmask 917312
    %888 = vst.msk [vmem:[#allocation0] sm:$0xf] %vm887, %v886
    %s889 = scalar_lea.vmem [#allocation0], 4
    %890 = vst.msk [vmem:[%s889] sm:$0xf0] %vm887, %v886
    %s891 = scalar_lea.vmem [#allocation1], 177
    %v892 = vld [vmem:[%s891] sm:$0x1]
    %s893 = scalar_lea.vmem [#allocation1], 432
    %v894 = vld [vmem:[%s893] sm:$0x2]
    %vm895 = vcmask 1041409
    %v896 = vsel %vm895, %v894, %v892
    %s897 = scalar_lea.vmem [#allocation1], 687
    %v898 = vld [vmem:[%s897] sm:$0x4]
    %vm899 = vcmask 1042434
    %v900 = vsel %vm899, %v898, %v896
    %s901 = scalar_lea.vmem [#allocation1], 942
    %v902 = vld [vmem:[%s901] sm:$0x8]
    %vm903 = vcmask 1043459
    %v904 = vsel %vm903, %v902, %v900
    %s905 = scalar_lea.vmem [#allocation1], 237
    %v906 = vld [vmem:[%s905] sm:$0x10]
    %vm907 = vcmask 1044484
    %v908 = vsel %vm907, %v906, %v904
    %s909 = scalar_lea.vmem [#allocation1], 492
    %v910 = vld [vmem:[%s909] sm:$0x20]
    %vm911 = vcmask 1045509
    %v912 = vsel %vm911, %v910, %v908
    %s913 = scalar_lea.vmem [#allocation1], 747
    %v914 = vld [vmem:[%s913] sm:$0x40]
    %vm915 = vcmask 1046534
    %v916 = vsel %vm915, %v914, %v912
    %s917 = scalar_lea.vmem [#allocation1], 1002
    %v918 = vld [vmem:[%s917] sm:$0x80]
    %vm919 = vcmask 1047559
    %v920 = vsel %vm919, %v918, %v916
    %921 = vrot.lane.b32.xlu0 %v920, 104
    %v922 = vpop.permute.xlu0 %921
    %vm923 = vcmask 917312
    %s924 = scalar_lea.vmem [#allocation0], 16
    %925 = vst.msk [vmem:[%s924] sm:$0xf] %vm923, %v922
    %s926 = scalar_lea.vmem [#allocation0], 20
    %927 = vst.msk [vmem:[%s926] sm:$0xf0] %vm923, %v922
    %s928 = scalar_lea.vmem [#allocation1], 48
    %v929 = vld [vmem:[%s928] sm:$0x1]
    %s930 = scalar_lea.vmem [#allocation1], 303
    %v931 = vld [vmem:[%s930] sm:$0x2]
    %vm932 = vcmask 1041409
    %v933 = vsel %vm932, %v931, %v929
    %s934 = scalar_lea.vmem [#allocation1], 558
    %v935 = vld [vmem:[%s934] sm:$0x4]
    %vm936 = vcmask 1042434
    %v937 = vsel %vm936, %v935, %v933
    %s938 = scalar_lea.vmem [#allocation1], 813
    %v939 = vld [vmem:[%s938] sm:$0x8]
    %vm940 = vcmask 1043459
    %v941 = vsel %vm940, %v939, %v937
    %s942 = scalar_lea.vmem [#allocation1], 108
    %v943 = vld [vmem:[%s942] sm:$0x10]
    %vm944 = vcmask 1044484
    %v945 = vsel %vm944, %v943, %v941
    %s946 = scalar_lea.vmem [#allocation1], 363
    %v947 = vld [vmem:[%s946] sm:$0x20]
    %vm948 = vcmask 1045509
    %v949 = vsel %vm948, %v947, %v945
    %s950 = scalar_lea.vmem [#allocation1], 618
    %v951 = vld [vmem:[%s950] sm:$0x40]
    %vm952 = vcmask 1046534
    %v953 = vsel %vm952, %v951, %v949
    %s954 = scalar_lea.vmem [#allocation1], 873
    %v955 = vld [vmem:[%s954] sm:$0x80]
    %vm956 = vcmask 1047559
    %v957 = vsel %vm956, %v955, %v953
    %958 = vrot.lane.b32.xlu0 %v957, 96
    %v959 = vpop.permute.xlu0 %958
    %vm960 = vcmask 851712
    %961 = vst.msk [vmem:[#allocation0] sm:$0xf] %vm960, %v959
    %s962 = scalar_lea.vmem [#allocation0], 4
    %963 = vst.msk [vmem:[%s962] sm:$0xf0] %vm960, %v959
    %s964 = scalar_lea.vmem [#allocation1], 176
    %v965 = vld [vmem:[%s964] sm:$0x1]
    %s966 = scalar_lea.vmem [#allocation1], 431
    %v967 = vld [vmem:[%s966] sm:$0x2]
    %vm968 = vcmask 1041409
    %v969 = vsel %vm968, %v967, %v965
    %s970 = scalar_lea.vmem [#allocation1], 686
    %v971 = vld [vmem:[%s970] sm:$0x4]
    %vm972 = vcmask 1042434
    %v973 = vsel %vm972, %v971, %v969
    %s974 = scalar_lea.vmem [#allocation1], 941
    %v975 = vld [vmem:[%s974] sm:$0x8]
    %vm976 = vcmask 1043459
    %v977 = vsel %vm976, %v975, %v973
    %s978 = scalar_lea.vmem [#allocation1], 236
    %v979 = vld [vmem:[%s978] sm:$0x10]
    %vm980 = vcmask 1044484
    %v981 = vsel %vm980, %v979, %v977
    %s982 = scalar_lea.vmem [#allocation1], 491
    %v983 = vld [vmem:[%s982] sm:$0x20]
    %vm984 = vcmask 1045509
    %v985 = vsel %vm984, %v983, %v981
    %s986 = scalar_lea.vmem [#allocation1], 746
    %v987 = vld [vmem:[%s986] sm:$0x40]
    %vm988 = vcmask 1046534
    %v989 = vsel %vm988, %v987, %v985
    %s990 = scalar_lea.vmem [#allocation1], 1001
    %v991 = vld [vmem:[%s990] sm:$0x80]
    %vm992 = vcmask 1047559
    %v993 = vsel %vm992, %v991, %v989
    %994 = vrot.lane.b32.xlu0 %v993, 96
    %v995 = vpop.permute.xlu0 %994
    %vm996 = vcmask 851712
    %s997 = scalar_lea.vmem [#allocation0], 16
    %998 = vst.msk [vmem:[%s997] sm:$0xf] %vm996, %v995
    %s999 = scalar_lea.vmem [#allocation0], 20
    %1000 = vst.msk [vmem:[%s999] sm:$0xf0] %vm996, %v995
    %s1001 = scalar_lea.vmem [#allocation1], 41
    %v1002 = vld [vmem:[%s1001] sm:$0x1]
    %s1003 = scalar_lea.vmem [#allocation1], 296
    %v1004 = vld [vmem:[%s1003] sm:$0x2]
    %vm1005 = vcmask 1041409
    %v1006 = vsel %vm1005, %v1004, %v1002
    %s1007 = scalar_lea.vmem [#allocation1], 551
    %v1008 = vld [vmem:[%s1007] sm:$0x4]
    %vm1009 = vcmask 1042434
    %v1010 = vsel %vm1009, %v1008, %v1006
    %s1011 = scalar_lea.vmem [#allocation1], 806
    %v1012 = vld [vmem:[%s1011] sm:$0x8]
    %vm1013 = vcmask 1043459
    %v1014 = vsel %vm1013, %v1012, %v1010
    %s1015 = scalar_lea.vmem [#allocation1], 101
    %v1016 = vld [vmem:[%s1015] sm:$0x10]
    %vm1017 = vcmask 1044484
    %v1018 = vsel %vm1017, %v1016, %v1014
    %s1019 = scalar_lea.vmem [#allocation1], 356
    %v1020 = vld [vmem:[%s1019] sm:$0x20]
    %vm1021 = vcmask 1045509
    %v1022 = vsel %vm1021, %v1020, %v1018
    %s1023 = scalar_lea.vmem [#allocation1], 611
    %v1024 = vld [vmem:[%s1023] sm:$0x40]
    %vm1025 = vcmask 1046534
    %v1026 = vsel %vm1025, %v1024, %v1022
    %s1027 = scalar_lea.vmem [#allocation1], 866
    %v1028 = vld [vmem:[%s1027] sm:$0x80]
    %vm1029 = vcmask 1047559
    %v1030 = vsel %vm1029, %v1028, %v1026
    %1031 = vrot.lane.b32.xlu0 %v1030, 88
    %v1032 = vpop.permute.xlu0 %1031
    %vm1033 = vcmask 786112
    %1034 = vst.msk [vmem:[#allocation0] sm:$0xf] %vm1033, %v1032
    %s1035 = scalar_lea.vmem [#allocation0], 4
    %1036 = vst.msk [vmem:[%s1035] sm:$0xf0] %vm1033, %v1032
    %s1037 = scalar_lea.vmem [#allocation1], 169
    %v1038 = vld [vmem:[%s1037] sm:$0x1]
    %s1039 = scalar_lea.vmem [#allocation1], 424
    %v1040 = vld [vmem:[%s1039] sm:$0x2]
    %vm1041 = vcmask 1041409
    %v1042 = vsel %vm1041, %v1040, %v1038
    %s1043 = scalar_lea.vmem [#allocation1], 679
    %v1044 = vld [vmem:[%s1043] sm:$0x4]
    %vm1045 = vcmask 1042434
    %v1046 = vsel %vm1045, %v1044, %v1042
    %s1047 = scalar_lea.vmem [#allocation1], 934
    %v1048 = vld [vmem:[%s1047] sm:$0x8]
    %vm1049 = vcmask 1043459
    %v1050 = vsel %vm1049, %v1048, %v1046
    %s1051 = scalar_lea.vmem [#allocation1], 229
    %v1052 = vld [vmem:[%s1051] sm:$0x10]
    %vm1053 = vcmask 1044484
    %v1054 = vsel %vm1053, %v1052, %v1050
    %s1055 = scalar_lea.vmem [#allocation1], 484
    %v1056 = vld [vmem:[%s1055] sm:$0x20]
    %vm1057 = vcmask 1045509
    %v1058 = vsel %vm1057, %v1056, %v1054
    %s1059 = scalar_lea.vmem [#allocation1], 739
    %v1060 = vld [vmem:[%s1059] sm:$0x40]
    %vm1061 = vcmask 1046534
    %v1062 = vsel %vm1061, %v1060, %v1058
    %s1063 = scalar_lea.vmem [#allocation1], 994
    %v1064 = vld [vmem:[%s1063] sm:$0x80]
    %vm1065 = vcmask 1047559
    %v1066 = vsel %vm1065, %v1064, %v1062
    %1067 = vrot.lane.b32.xlu0 %v1066, 88
    %v1068 = vpop.permute.xlu0 %1067
    %vm1069 = vcmask 786112
    %s1070 = scalar_lea.vmem [#allocation0], 16
    %1071 = vst.msk [vmem:[%s1070] sm:$0xf] %vm1069, %v1068
    %s1072 = scalar_lea.vmem [#allocation0], 20
    %1073 = vst.msk [vmem:[%s1072] sm:$0xf0] %vm1069, %v1068
    %s1074 = scalar_lea.vmem [#allocation1], 40
    %v1075 = vld [vmem:[%s1074] sm:$0x1]
    %s1076 = scalar_lea.vmem [#allocation1], 295
    %v1077 = vld [vmem:[%s1076] sm:$0x2]
    %vm1078 = vcmask 1041409
    %v1079 = vsel %vm1078, %v1077, %v1075
    %s1080 = scalar_lea.vmem [#allocation1], 550
    %v1081 = vld [vmem:[%s1080] sm:$0x4]
    %vm1082 = vcmask 1042434
    %v1083 = vsel %vm1082, %v1081, %v1079
    %s1084 = scalar_lea.vmem [#allocation1], 805
    %v1085 = vld [vmem:[%s1084] sm:$0x8]
    %vm1086 = vcmask 1043459
    %v1087 = vsel %vm1086, %v1085, %v1083
    %s1088 = scalar_lea.vmem [#allocation1], 100
    %v1089 = vld [vmem:[%s1088] sm:$0x10]
    %vm1090 = vcmask 1044484
    %v1091 = vsel %vm1090, %v1089, %v1087
    %s1092 = scalar_lea.vmem [#allocation1], 355
    %v1093 = vld [vmem:[%s1092] sm:$0x20]
    %vm1094 = vcmask 1045509
    %v1095 = vsel %vm1094, %v1093, %v1091
    %s1096 = scalar_lea.vmem [#allocation1], 610
    %v1097 = vld [vmem:[%s1096] sm:$0x40]
    %vm1098 = vcmask 1046534
    %v1099 = vsel %vm1098, %v1097, %v1095
    %s1100 = scalar_lea.vmem [#allocation1], 865
    %v1101 = vld [vmem:[%s1100] sm:$0x80]
    %vm1102 = vcmask 1047559
    %v1103 = vsel %vm1102, %v1101, %v1099
    %1104 = vrot.lane.b32.xlu0 %v1103, 80
    %v1105 = vpop.permute.xlu0 %1104
    %vm1106 = vcmask 720512
    %1107 = vst.msk [vmem:[#allocation0] sm:$0xf] %vm1106, %v1105
    %s1108 = scalar_lea.vmem [#allocation0], 4
    %1109 = vst.msk [vmem:[%s1108] sm:$0xf0] %vm1106, %v1105
    %s1110 = scalar_lea.vmem [#allocation1], 168
    %v1111 = vld [vmem:[%s1110] sm:$0x1]
    %s1112 = scalar_lea.vmem [#allocation1], 423
    %v1113 = vld [vmem:[%s1112] sm:$0x2]
    %vm1114 = vcmask 1041409
    %v1115 = vsel %vm1114, %v1113, %v1111
    %s1116 = scalar_lea.vmem [#allocation1], 678
    %v1117 = vld [vmem:[%s1116] sm:$0x4]
    %vm1118 = vcmask 1042434
    %v1119 = vsel %vm1118, %v1117, %v1115
    %s1120 = scalar_lea.vmem [#allocation1], 933
    %v1121 = vld [vmem:[%s1120] sm:$0x8]
    %vm1122 = vcmask 1043459
    %v1123 = vsel %vm1122, %v1121, %v1119
    %s1124 = scalar_lea.vmem [#allocation1], 228
    %v1125 = vld [vmem:[%s1124] sm:$0x10]
    %vm1126 = vcmask 1044484
    %v1127 = vsel %vm1126, %v1125, %v1123
    %s1128 = scalar_lea.vmem [#allocation1], 483
    %v1129 = vld [vmem:[%s1128] sm:$0x20]
    %vm1130 = vcmask 1045509
    %v1131 = vsel %vm1130, %v1129, %v1127
    %s1132 = scalar_lea.vmem [#allocation1], 738
    %v1133 = vld [vmem:[%s1132] sm:$0x40]
    %vm1134 = vcmask 1046534
    %v1135 = vsel %vm1134, %v1133, %v1131
    %s1136 = scalar_lea.vmem [#allocation1], 993
    %v1137 = vld [vmem:[%s1136] sm:$0x80]
    %vm1138 = vcmask 1047559
    %v1139 = vsel %vm1138, %v1137, %v1135
    %1140 = vrot.lane.b32.xlu0 %v1139, 80
    %v1141 = vpop.permute.xlu0 %1140
    %vm1142 = vcmask 720512
    %s1143 = scalar_lea.vmem [#allocation0], 16
    %1144 = vst.msk [vmem:[%s1143] sm:$0xf] %vm1142, %v1141
    %s1145 = scalar_lea.vmem [#allocation0], 20
    %1146 = vst.msk [vmem:[%s1145] sm:$0xf0] %vm1142, %v1141
    %s1147 = scalar_lea.vmem [#allocation1], 33
    %v1148 = vld [vmem:[%s1147] sm:$0x1]
    %s1149 = scalar_lea.vmem [#allocation1], 288
    %v1150 = vld [vmem:[%s1149] sm:$0x2]
    %vm1151 = vcmask 1041409
    %v1152 = vsel %vm1151, %v1150, %v1148
    %s1153 = scalar_lea.vmem [#allocation1], 543
    %v1154 = vld [vmem:[%s1153] sm:$0x4]
    %vm1155 = vcmask 1042434
    %v1156 = vsel %vm1155, %v1154, %v1152
    %s1157 = scalar_lea.vmem [#allocation1], 798
    %v1158 = vld [vmem:[%s1157] sm:$0x8]
    %vm1159 = vcmask 1043459
    %v1160 = vsel %vm1159, %v1158, %v1156
    %s1161 = scalar_lea.vmem [#allocation1], 93
    %v1162 = vld [vmem:[%s1161] sm:$0x10]
    %vm1163 = vcmask 1044484
    %v1164 = vsel %vm1163, %v1162, %v1160
    %s1165 = scalar_lea.vmem [#allocation1], 348
    %v1166 = vld [vmem:[%s1165] sm:$0x20]
    %vm1167 = vcmask 1045509
    %v1168 = vsel %vm1167, %v1166, %v1164
    %s1169 = scalar_lea.vmem [#allocation1], 603
    %v1170 = vld [vmem:[%s1169] sm:$0x40]
    %vm1171 = vcmask 1046534
    %v1172 = vsel %vm1171, %v1170, %v1168
    %s1173 = scalar_lea.vmem [#allocation1], 858
    %v1174 = vld [vmem:[%s1173] sm:$0x80]
    %vm1175 = vcmask 1047559
    %v1176 = vsel %vm1175, %v1174, %v1172
    %1177 = vrot.lane.b32.xlu0 %v1176, 72
    %v1178 = vpop.permute.xlu0 %1177
    %vm1179 = vcmask 654912
    %1180 = vst.msk [vmem:[#allocation0] sm:$0xf] %vm1179, %v1178
    %s1181 = scalar_lea.vmem [#allocation0], 4
    %1182 = vst.msk [vmem:[%s1181] sm:$0xf0] %vm1179, %v1178
    %s1183 = scalar_lea.vmem [#allocation1], 161
    %v1184 = vld [vmem:[%s1183] sm:$0x1]
    %s1185 = scalar_lea.vmem [#allocation1], 416
    %v1186 = vld [vmem:[%s1185] sm:$0x2]
    %vm1187 = vcmask 1041409
    %v1188 = vsel %vm1187, %v1186, %v1184
    %s1189 = scalar_lea.vmem [#allocation1], 671
    %v1190 = vld [vmem:[%s1189] sm:$0x4]
    %vm1191 = vcmask 1042434
    %v1192 = vsel %vm1191, %v1190, %v1188
    %s1193 = scalar_lea.vmem [#allocation1], 926
    %v1194 = vld [vmem:[%s1193] sm:$0x8]
    %vm1195 = vcmask 1043459
    %v1196 = vsel %vm1195, %v1194, %v1192
    %s1197 = scalar_lea.vmem [#allocation1], 221
    %v1198 = vld [vmem:[%s1197] sm:$0x10]
    %vm1199 = vcmask 1044484
    %v1200 = vsel %vm1199, %v1198, %v1196
    %s1201 = scalar_lea.vmem [#allocation1], 476
    %v1202 = vld [vmem:[%s1201] sm:$0x20]
    %vm1203 = vcmask 1045509
    %v1204 = vsel %vm1203, %v1202, %v1200
    %s1205 = scalar_lea.vmem [#allocation1], 731
    %v1206 = vld [vmem:[%s1205] sm:$0x40]
    %vm1207 = vcmask 1046534
    %v1208 = vsel %vm1207, %v1206, %v1204
    %s1209 = scalar_lea.vmem [#allocation1], 986
    %v1210 = vld [vmem:[%s1209] sm:$0x80]
    %vm1211 = vcmask 1047559
    %v1212 = vsel %vm1211, %v1210, %v1208
    %1213 = vrot.lane.b32.xlu0 %v1212, 72
    %v1214 = vpop.permute.xlu0 %1213
    %vm1215 = vcmask 654912
    %s1216 = scalar_lea.vmem [#allocation0], 16
    %1217 = vst.msk [vmem:[%s1216] sm:$0xf] %vm1215, %v1214
    %s1218 = scalar_lea.vmem [#allocation0], 20
    %1219 = vst.msk [vmem:[%s1218] sm:$0xf0] %vm1215, %v1214
    %s1220 = scalar_lea.vmem [#allocation1], 32
    %v1221 = vld [vmem:[%s1220] sm:$0x1]
    %s1222 = scalar_lea.vmem [#allocation1], 287
    %v1223 = vld [vmem:[%s1222] sm:$0x2]
    %vm1224 = vcmask 1041409
    %v1225 = vsel %vm1224, %v1223, %v1221
    %s1226 = scalar_lea.vmem [#allocation1], 542
    %v1227 = vld [vmem:[%s1226] sm:$0x4]
    %vm1228 = vcmask 1042434
    %v1229 = vsel %vm1228, %v1227, %v1225
    %s1230 = scalar_lea.vmem [#allocation1], 797
    %v1231 = vld [vmem:[%s1230] sm:$0x8]
    %vm1232 = vcmask 1043459
    %v1233 = vsel %vm1232, %v1231, %v1229
    %s1234 = scalar_lea.vmem [#allocation1], 92
    %v1235 = vld [vmem:[%s1234] sm:$0x10]
    %vm1236 = vcmask 1044484
    %v1237 = vsel %vm1236, %v1235, %v1233
    %s1238 = scalar_lea.vmem [#allocation1], 347
    %v1239 = vld [vmem:[%s1238] sm:$0x20]
    %vm1240 = vcmask 1045509
    %v1241 = vsel %vm1240, %v1239, %v1237
    %s1242 = scalar_lea.vmem [#allocation1], 602
    %v1243 = vld [vmem:[%s1242] sm:$0x40]
    %vm1244 = vcmask 1046534
    %v1245 = vsel %vm1244, %v1243, %v1241
    %s1246 = scalar_lea.vmem [#allocation1], 857
    %v1247 = vld [vmem:[%s1246] sm:$0x80]
    %vm1248 = vcmask 1047559
    %v1249 = vsel %vm1248, %v1247, %v1245
    %1250 = vrot.lane.b32.xlu0 %v1249, 64
    %v1251 = vpop.permute.xlu0 %1250
    %vm1252 = vcmask 589312
    %1253 = vst.msk [vmem:[#allocation0] sm:$0xf] %vm1252, %v1251
    %s1254 = scalar_lea.vmem [#allocation0], 4
    %1255 = vst.msk [vmem:[%s1254] sm:$0xf0] %vm1252, %v1251
    %s1256 = scalar_lea.vmem [#allocation1], 160
    %v1257 = vld [vmem:[%s1256] sm:$0x1]
    %s1258 = scalar_lea.vmem [#allocation1], 415
    %v1259 = vld [vmem:[%s1258] sm:$0x2]
    %vm1260 = vcmask 1041409
    %v1261 = vsel %vm1260, %v1259, %v1257
    %s1262 = scalar_lea.vmem [#allocation1], 670
    %v1263 = vld [vmem:[%s1262] sm:$0x4]
    %vm1264 = vcmask 1042434
    %v1265 = vsel %vm1264, %v1263, %v1261
    %s1266 = scalar_lea.vmem [#allocation1], 925
    %v1267 = vld [vmem:[%s1266] sm:$0x8]
    %vm1268 = vcmask 1043459
    %v1269 = vsel %vm1268, %v1267, %v1265
    %s1270 = scalar_lea.vmem [#allocation1], 220
    %v1271 = vld [vmem:[%s1270] sm:$0x10]
    %vm1272 = vcmask 1044484
    %v1273 = vsel %vm1272, %v1271, %v1269
    %s1274 = scalar_lea.vmem [#allocation1], 475
    %v1275 = vld [vmem:[%s1274] sm:$0x20]
    %vm1276 = vcmask 1045509
    %v1277 = vsel %vm1276, %v1275, %v1273
    %s1278 = scalar_lea.vmem [#allocation1], 730
    %v1279 = vld [vmem:[%s1278] sm:$0x40]
    %vm1280 = vcmask 1046534
    %v1281 = vsel %vm1280, %v1279, %v1277
    %s1282 = scalar_lea.vmem [#allocation1], 985
    %v1283 = vld [vmem:[%s1282] sm:$0x80]
    %vm1284 = vcmask 1047559
    %v1285 = vsel %vm1284, %v1283, %v1281
    %1286 = vrot.lane.b32.xlu0 %v1285, 64
    %v1287 = vpop.permute.xlu0 %1286
    %vm1288 = vcmask 589312
    %s1289 = scalar_lea.vmem [#allocation0], 16
    %1290 = vst.msk [vmem:[%s1289] sm:$0xf] %vm1288, %v1287
    %s1291 = scalar_lea.vmem [#allocation0], 20
    %1292 = vst.msk [vmem:[%s1291] sm:$0xf0] %vm1288, %v1287
    %s1293 = scalar_lea.vmem [#allocation1], 25
    %v1294 = vld [vmem:[%s1293] sm:$0x1]
    %s1295 = scalar_lea.vmem [#allocation1], 280
    %v1296 = vld [vmem:[%s1295] sm:$0x2]
    %vm1297 = vcmask 1041409
    %v1298 = vsel %vm1297, %v1296, %v1294
    %s1299 = scalar_lea.vmem [#allocation1], 535
    %v1300 = vld [vmem:[%s1299] sm:$0x4]
    %vm1301 = vcmask 1042434
    %v1302 = vsel %vm1301, %v1300, %v1298
    %s1303 = scalar_lea.vmem [#allocation1], 790
    %v1304 = vld [vmem:[%s1303] sm:$0x8]
    %vm1305 = vcmask 1043459
    %v1306 = vsel %vm1305, %v1304, %v1302
    %s1307 = scalar_lea.vmem [#allocation1], 85
    %v1308 = vld [vmem:[%s1307] sm:$0x10]
    %vm1309 = vcmask 1044484
    %v1310 = vsel %vm1309, %v1308, %v1306
    %s1311 = scalar_lea.vmem [#allocation1], 340
    %v1312 = vld [vmem:[%s1311] sm:$0x20]
    %vm1313 = vcmask 1045509
    %v1314 = vsel %vm1313, %v1312, %v1310
    %s1315 = scalar_lea.vmem [#allocation1], 595
    %v1316 = vld [vmem:[%s1315] sm:$0x40]
    %vm1317 = vcmask 1046534
    %v1318 = vsel %vm1317, %v1316, %v1314
    %s1319 = scalar_lea.vmem [#allocation1], 850
    %v1320 = vld [vmem:[%s1319] sm:$0x80]
    %vm1321 = vcmask 1047559
    %v1322 = vsel %vm1321, %v1320, %v1318
    %1323 = vrot.lane.b32.xlu0 %v1322, 56
    %v1324 = vpop.permute.xlu0 %1323
    %vm1325 = vcmask 523712
    %1326 = vst.msk [vmem:[#allocation0] sm:$0xf] %vm1325, %v1324
    %s1327 = scalar_lea.vmem [#allocation0], 4
    %1328 = vst.msk [vmem:[%s1327] sm:$0xf0] %vm1325, %v1324
    %s1329 = scalar_lea.vmem [#allocation1], 153
    %v1330 = vld [vmem:[%s1329] sm:$0x1]
    %s1331 = scalar_lea.vmem [#allocation1], 408
    %v1332 = vld [vmem:[%s1331] sm:$0x2]
    %vm1333 = vcmask 1041409
    %v1334 = vsel %vm1333, %v1332, %v1330
    %s1335 = scalar_lea.vmem [#allocation1], 663
    %v1336 = vld [vmem:[%s1335] sm:$0x4]
    %vm1337 = vcmask 1042434
    %v1338 = vsel %vm1337, %v1336, %v1334
    %s1339 = scalar_lea.vmem [#allocation1], 918
    %v1340 = vld [vmem:[%s1339] sm:$0x8]
    %vm1341 = vcmask 1043459
    %v1342 = vsel %vm1341, %v1340, %v1338
    %s1343 = scalar_lea.vmem [#allocation1], 213
    %v1344 = vld [vmem:[%s1343] sm:$0x10]
    %vm1345 = vcmask 1044484
    %v1346 = vsel %vm1345, %v1344, %v1342
    %s1347 = scalar_lea.vmem [#allocation1], 468
    %v1348 = vld [vmem:[%s1347] sm:$0x20]
    %vm1349 = vcmask 1045509
    %v1350 = vsel %vm1349, %v1348, %v1346
    %s1351 = scalar_lea.vmem [#allocation1], 723
    %v1352 = vld [vmem:[%s1351] sm:$0x40]
    %vm1353 = vcmask 1046534
    %v1354 = vsel %vm1353, %v1352, %v1350
    %s1355 = scalar_lea.vmem [#allocation1], 978
    %v1356 = vld [vmem:[%s1355] sm:$0x80]
    %vm1357 = vcmask 1047559
    %v1358 = vsel %vm1357, %v1356, %v1354
    %1359 = vrot.lane.b32.xlu0 %v1358, 56
    %v1360 = vpop.permute.xlu0 %1359
    %vm1361 = vcmask 523712
    %s1362 = scalar_lea.vmem [#allocation0], 16
    %1363 = vst.msk [vmem:[%s1362] sm:$0xf] %vm1361, %v1360
    %s1364 = scalar_lea.vmem [#allocation0], 20
    %1365 = vst.msk [vmem:[%s1364] sm:$0xf0] %vm1361, %v1360
    %s1366 = scalar_lea.vmem [#allocation1], 24
    %v1367 = vld [vmem:[%s1366] sm:$0x1]
    %s1368 = scalar_lea.vmem [#allocation1], 279
    %v1369 = vld [vmem:[%s1368] sm:$0x2]
    %vm1370 = vcmask 1041409
    %v1371 = vsel %vm1370, %v1369, %v1367
    %s1372 = scalar_lea.vmem [#allocation1], 534
    %v1373 = vld [vmem:[%s1372] sm:$0x4]
    %vm1374 = vcmask 1042434
    %v1375 = vsel %vm1374, %v1373, %v1371
    %s1376 = scalar_lea.vmem [#allocation1], 789
    %v1377 = vld [vmem:[%s1376] sm:$0x8]
    %vm1378 = vcmask 1043459
    %v1379 = vsel %vm1378, %v1377, %v1375
    %s1380 = scalar_lea.vmem [#allocation1], 84
    %v1381 = vld [vmem:[%s1380] sm:$0x10]
    %vm1382 = vcmask 1044484
    %v1383 = vsel %vm1382, %v1381, %v1379
    %s1384 = scalar_lea.vmem [#allocation1], 339
    %v1385 = vld [vmem:[%s1384] sm:$0x20]
    %vm1386 = vcmask 1045509
    %v1387 = vsel %vm1386, %v1385, %v1383
    %s1388 = scalar_lea.vmem [#allocation1], 594
    %v1389 = vld [vmem:[%s1388] sm:$0x40]
    %vm1390 = vcmask 1046534
    %v1391 = vsel %vm1390, %v1389, %v1387
    %s1392 = scalar_lea.vmem [#allocation1], 849
    %v1393 = vld [vmem:[%s1392] sm:$0x80]
    %vm1394 = vcmask 1047559
    %v1395 = vsel %vm1394, %v1393, %v1391
    %1396 = vrot.lane.b32.xlu0 %v1395, 48
    %v1397 = vpop.permute.xlu0 %1396
    %vm1398 = vcmask 458112
    %1399 = vst.msk [vmem:[#allocation0] sm:$0xf] %vm1398, %v1397
    %s1400 = scalar_lea.vmem [#allocation0], 4
    %1401 = vst.msk [vmem:[%s1400] sm:$0xf0] %vm1398, %v1397
    %s1402 = scalar_lea.vmem [#allocation1], 152
    %v1403 = vld [vmem:[%s1402] sm:$0x1]
    %s1404 = scalar_lea.vmem [#allocation1], 407
    %v1405 = vld [vmem:[%s1404] sm:$0x2]
    %vm1406 = vcmask 1041409
    %v1407 = vsel %vm1406, %v1405, %v1403
    %s1408 = scalar_lea.vmem [#allocation1], 662
    %v1409 = vld [vmem:[%s1408] sm:$0x4]
    %vm1410 = vcmask 1042434
    %v1411 = vsel %vm1410, %v1409, %v1407
    %s1412 = scalar_lea.vmem [#allocation1], 917
    %v1413 = vld [vmem:[%s1412] sm:$0x8]
    %vm1414 = vcmask 1043459
    %v1415 = vsel %vm1414, %v1413, %v1411
    %s1416 = scalar_lea.vmem [#allocation1], 212
    %v1417 = vld [vmem:[%s1416] sm:$0x10]
    %vm1418 = vcmask 1044484
    %v1419 = vsel %vm1418, %v1417, %v1415
    %s1420 = scalar_lea.vmem [#allocation1], 467
    %v1421 = vld [vmem:[%s1420] sm:$0x20]
    %vm1422 = vcmask 1045509
    %v1423 = vsel %vm1422, %v1421, %v1419
    %s1424 = scalar_lea.vmem [#allocation1], 722
    %v1425 = vld [vmem:[%s1424] sm:$0x40]
    %vm1426 = vcmask 1046534
    %v1427 = vsel %vm1426, %v1425, %v1423
    %s1428 = scalar_lea.vmem [#allocation1], 977
    %v1429 = vld [vmem:[%s1428] sm:$0x80]
    %vm1430 = vcmask 1047559
    %v1431 = vsel %vm1430, %v1429, %v1427
    %1432 = vrot.lane.b32.xlu0 %v1431, 48
    %v1433 = vpop.permute.xlu0 %1432
    %vm1434 = vcmask 458112
    %s1435 = scalar_lea.vmem [#allocation0], 16
    %1436 = vst.msk [vmem:[%s1435] sm:$0xf] %vm1434, %v1433
    %s1437 = scalar_lea.vmem [#allocation0], 20
    %1438 = vst.msk [vmem:[%s1437] sm:$0xf0] %vm1434, %v1433
    %s1439 = scalar_lea.vmem [#allocation1], 17
    %v1440 = vld [vmem:[%s1439] sm:$0x1]
    %s1441 = scalar_lea.vmem [#allocation1], 272
    %v1442 = vld [vmem:[%s1441] sm:$0x2]
    %vm1443 = vcmask 1041409
    %v1444 = vsel %vm1443, %v1442, %v1440
    %s1445 = scalar_lea.vmem [#allocation1], 527
    %v1446 = vld [vmem:[%s1445] sm:$0x4]
    %vm1447 = vcmask 1042434
    %v1448 = vsel %vm1447, %v1446, %v1444
    %s1449 = scalar_lea.vmem [#allocation1], 782
    %v1450 = vld [vmem:[%s1449] sm:$0x8]
    %vm1451 = vcmask 1043459
    %v1452 = vsel %vm1451, %v1450, %v1448
    %s1453 = scalar_lea.vmem [#allocation1], 77
    %v1454 = vld [vmem:[%s1453] sm:$0x10]
    %vm1455 = vcmask 1044484
    %v1456 = vsel %vm1455, %v1454, %v1452
    %s1457 = scalar_lea.vmem [#allocation1], 332
    %v1458 = vld [vmem:[%s1457] sm:$0x20]
    %vm1459 = vcmask 1045509
    %v1460 = vsel %vm1459, %v1458, %v1456
    %s1461 = scalar_lea.vmem [#allocation1], 587
    %v1462 = vld [vmem:[%s1461] sm:$0x40]
    %vm1463 = vcmask 1046534
    %v1464 = vsel %vm1463, %v1462, %v1460
    %s1465 = scalar_lea.vmem [#allocation1], 842
    %v1466 = vld [vmem:[%s1465] sm:$0x80]
    %vm1467 = vcmask 1047559
    %v1468 = vsel %vm1467, %v1466, %v1464
    %1469 = vrot.lane.b32.xlu0 %v1468, 40
    %v1470 = vpop.permute.xlu0 %1469
    %vm1471 = vcmask 392512
    %1472 = vst.msk [vmem:[#allocation0] sm:$0xf] %vm1471, %v1470
    %s1473 = scalar_lea.vmem [#allocation0], 4
    %1474 = vst.msk [vmem:[%s1473] sm:$0xf0] %vm1471, %v1470
    %s1475 = scalar_lea.vmem [#allocation1], 145
    %v1476 = vld [vmem:[%s1475] sm:$0x1]
    %s1477 = scalar_lea.vmem [#allocation1], 400
    %v1478 = vld [vmem:[%s1477] sm:$0x2]
    %vm1479 = vcmask 1041409
    %v1480 = vsel %vm1479, %v1478, %v1476
    %s1481 = scalar_lea.vmem [#allocation1], 655
    %v1482 = vld [vmem:[%s1481] sm:$0x4]
    %vm1483 = vcmask 1042434
    %v1484 = vsel %vm1483, %v1482, %v1480
    %s1485 = scalar_lea.vmem [#allocation1], 910
    %v1486 = vld [vmem:[%s1485] sm:$0x8]
    %vm1487 = vcmask 1043459
    %v1488 = vsel %vm1487, %v1486, %v1484
    %s1489 = scalar_lea.vmem [#allocation1], 205
    %v1490 = vld [vmem:[%s1489] sm:$0x10]
    %vm1491 = vcmask 1044484
    %v1492 = vsel %vm1491, %v1490, %v1488
    %s1493 = scalar_lea.vmem [#allocation1], 460
    %v1494 = vld [vmem:[%s1493] sm:$0x20]
    %vm1495 = vcmask 1045509
    %v1496 = vsel %vm1495, %v1494, %v1492
    %s1497 = scalar_lea.vmem [#allocation1], 715
    %v1498 = vld [vmem:[%s1497] sm:$0x40]
    %vm1499 = vcmask 1046534
    %v1500 = vsel %vm1499, %v1498, %v1496
    %s1501 = scalar_lea.vmem [#allocation1], 970
    %v1502 = vld [vmem:[%s1501] sm:$0x80]
    %vm1503 = vcmask 1047559
    %v1504 = vsel %vm1503, %v1502, %v1500
    %1505 = vrot.lane.b32.xlu0 %v1504, 40
    %v1506 = vpop.permute.xlu0 %1505
    %vm1507 = vcmask 392512
    %s1508 = scalar_lea.vmem [#allocation0], 16
    %1509 = vst.msk [vmem:[%s1508] sm:$0xf] %vm1507, %v1506
    %s1510 = scalar_lea.vmem [#allocation0], 20
    %1511 = vst.msk [vmem:[%s1510] sm:$0xf0] %vm1507, %v1506
    %s1512 = scalar_lea.vmem [#allocation1], 16
    %v1513 = vld [vmem:[%s1512] sm:$0x1]
    %s1514 = scalar_lea.vmem [#allocation1], 271
    %v1515 = vld [vmem:[%s1514] sm:$0x2]
    %vm1516 = vcmask 1041409
    %v1517 = vsel %vm1516, %v1515, %v1513
    %s1518 = scalar_lea.vmem [#allocation1], 526
    %v1519 = vld [vmem:[%s1518] sm:$0x4]
    %vm1520 = vcmask 1042434
    %v1521 = vsel %vm1520, %v1519, %v1517
    %s1522 = scalar_lea.vmem [#allocation1], 781
    %v1523 = vld [vmem:[%s1522] sm:$0x8]
    %vm1524 = vcmask 1043459
    %v1525 = vsel %vm1524, %v1523, %v1521
    %s1526 = scalar_lea.vmem [#allocation1], 76
    %v1527 = vld [vmem:[%s1526] sm:$0x10]
    %vm1528 = vcmask 1044484
    %v1529 = vsel %vm1528, %v1527, %v1525
    %s1530 = scalar_lea.vmem [#allocation1], 331
    %v1531 = vld [vmem:[%s1530] sm:$0x20]
    %vm1532 = vcmask 1045509
    %v1533 = vsel %vm1532, %v1531, %v1529
    %s1534 = scalar_lea.vmem [#allocation1], 586
    %v1535 = vld [vmem:[%s1534] sm:$0x40]
    %vm1536 = vcmask 1046534
    %v1537 = vsel %vm1536, %v1535, %v1533
    %s1538 = scalar_lea.vmem [#allocation1], 841
    %v1539 = vld [vmem:[%s1538] sm:$0x80]
    %vm1540 = vcmask 1047559
    %v1541 = vsel %vm1540, %v1539, %v1537
    %1542 = vrot.lane.b32.xlu0 %v1541, 32
    %v1543 = vpop.permute.xlu0 %1542
    %vm1544 = vcmask 326912
    %1545 = vst.msk [vmem:[#allocation0] sm:$0xf] %vm1544, %v1543
    %s1546 = scalar_lea.vmem [#allocation0], 4
    %1547 = vst.msk [vmem:[%s1546] sm:$0xf0] %vm1544, %v1543
    %s1548 = scalar_lea.vmem [#allocation1], 144
    %v1549 = vld [vmem:[%s1548] sm:$0x1]
    %s1550 = scalar_lea.vmem [#allocation1], 399
    %v1551 = vld [vmem:[%s1550] sm:$0x2]
    %vm1552 = vcmask 1041409
    %v1553 = vsel %vm1552, %v1551, %v1549
    %s1554 = scalar_lea.vmem [#allocation1], 654
    %v1555 = vld [vmem:[%s1554] sm:$0x4]
    %vm1556 = vcmask 1042434
    %v1557 = vsel %vm1556, %v1555, %v1553
    %s1558 = scalar_lea.vmem [#allocation1], 909
    %v1559 = vld [vmem:[%s1558] sm:$0x8]
    %vm1560 = vcmask 1043459
    %v1561 = vsel %vm1560, %v1559, %v1557
    %s1562 = scalar_lea.vmem [#allocation1], 204
    %v1563 = vld [vmem:[%s1562] sm:$0x10]
    %vm1564 = vcmask 1044484
    %v1565 = vsel %vm1564, %v1563, %v1561
    %s1566 = scalar_lea.vmem [#allocation1], 459
    %v1567 = vld [vmem:[%s1566] sm:$0x20]
    %vm1568 = vcmask 1045509
    %v1569 = vsel %vm1568, %v1567, %v1565
    %s1570 = scalar_lea.vmem [#allocation1], 714
    %v1571 = vld [vmem:[%s1570] sm:$0x40]
    %vm1572 = vcmask 1046534
    %v1573 = vsel %vm1572, %v1571, %v1569
    %s1574 = scalar_lea.vmem [#allocation1], 969
    %v1575 = vld [vmem:[%s1574] sm:$0x80]
    %vm1576 = vcmask 1047559
    %v1577 = vsel %vm1576, %v1575, %v1573
    %1578 = vrot.lane.b32.xlu0 %v1577, 32
    %v1579 = vpop.permute.xlu0 %1578
    %vm1580 = vcmask 326912
    %s1581 = scalar_lea.vmem [#allocation0], 16
    %1582 = vst.msk [vmem:[%s1581] sm:$0xf] %vm1580, %v1579
    %s1583 = scalar_lea.vmem [#allocation0], 20
    %1584 = vst.msk [vmem:[%s1583] sm:$0xf0] %vm1580, %v1579
    %s1585 = scalar_lea.vmem [#allocation1], 9
    %v1586 = vld [vmem:[%s1585] sm:$0x1]
    %s1587 = scalar_lea.vmem [#allocation1], 264
    %v1588 = vld [vmem:[%s1587] sm:$0x2]
    %vm1589 = vcmask 1041409
    %v1590 = vsel %vm1589, %v1588, %v1586
    %s1591 = scalar_lea.vmem [#allocation1], 519
    %v1592 = vld [vmem:[%s1591] sm:$0x4]
    %vm1593 = vcmask 1042434
    %v1594 = vsel %vm1593, %v1592, %v1590
    %s1595 = scalar_lea.vmem [#allocation1], 774
    %v1596 = vld [vmem:[%s1595] sm:$0x8]
    %vm1597 = vcmask 1043459
    %v1598 = vsel %vm1597, %v1596, %v1594
    %s1599 = scalar_lea.vmem [#allocation1], 69
    %v1600 = vld [vmem:[%s1599] sm:$0x10]
    %vm1601 = vcmask 1044484
    %v1602 = vsel %vm1601, %v1600, %v1598
    %s1603 = scalar_lea.vmem [#allocation1], 324
    %v1604 = vld [vmem:[%s1603] sm:$0x20]
    %vm1605 = vcmask 1045509
    %v1606 = vsel %vm1605, %v1604, %v1602
    %s1607 = scalar_lea.vmem [#allocation1], 579
    %v1608 = vld [vmem:[%s1607] sm:$0x40]
    %vm1609 = vcmask 1046534
    %v1610 = vsel %vm1609, %v1608, %v1606
    %s1611 = scalar_lea.vmem [#allocation1], 834
    %v1612 = vld [vmem:[%s1611] sm:$0x80]
    %vm1613 = vcmask 1047559
    %v1614 = vsel %vm1613, %v1612, %v1610
    %1615 = vrot.lane.b32.xlu0 %v1614, 24
    %v1616 = vpop.permute.xlu0 %1615
    %vm1617 = vcmask 261312
    %1618 = vst.msk [vmem:[#allocation0] sm:$0xf] %vm1617, %v1616
    %s1619 = scalar_lea.vmem [#allocation0], 4
    %1620 = vst.msk [vmem:[%s1619] sm:$0xf0] %vm1617, %v1616
    %s1621 = scalar_lea.vmem [#allocation1], 137
    %v1622 = vld [vmem:[%s1621] sm:$0x1]
    %s1623 = scalar_lea.vmem [#allocation1], 392
    %v1624 = vld [vmem:[%s1623] sm:$0x2]
    %vm1625 = vcmask 1041409
    %v1626 = vsel %vm1625, %v1624, %v1622
    %s1627 = scalar_lea.vmem [#allocation1], 647
    %v1628 = vld [vmem:[%s1627] sm:$0x4]
    %vm1629 = vcmask 1042434
    %v1630 = vsel %vm1629, %v1628, %v1626
    %s1631 = scalar_lea.vmem [#allocation1], 902
    %v1632 = vld [vmem:[%s1631] sm:$0x8]
    %vm1633 = vcmask 1043459
    %v1634 = vsel %vm1633, %v1632, %v1630
    %s1635 = scalar_lea.vmem [#allocation1], 197
    %v1636 = vld [vmem:[%s1635] sm:$0x10]
    %vm1637 = vcmask 1044484
    %v1638 = vsel %vm1637, %v1636, %v1634
    %s1639 = scalar_lea.vmem [#allocation1], 452
    %v1640 = vld [vmem:[%s1639] sm:$0x20]
    %vm1641 = vcmask 1045509
    %v1642 = vsel %vm1641, %v1640, %v1638
    %s1643 = scalar_lea.vmem [#allocation1], 707
    %v1644 = vld [vmem:[%s1643] sm:$0x40]
    %vm1645 = vcmask 1046534
    %v1646 = vsel %vm1645, %v1644, %v1642
    %s1647 = scalar_lea.vmem [#allocation1], 962
    %v1648 = vld [vmem:[%s1647] sm:$0x80]
    %vm1649 = vcmask 1047559
    %v1650 = vsel %vm1649, %v1648, %v1646
    %1651 = vrot.lane.b32.xlu0 %v1650, 24
    %v1652 = vpop.permute.xlu0 %1651
    %vm1653 = vcmask 261312
    %s1654 = scalar_lea.vmem [#allocation0], 16
    %1655 = vst.msk [vmem:[%s1654] sm:$0xf] %vm1653, %v1652
    %s1656 = scalar_lea.vmem [#allocation0], 20
    %1657 = vst.msk [vmem:[%s1656] sm:$0xf0] %vm1653, %v1652
    %s1658 = scalar_lea.vmem [#allocation1], 8
    %v1659 = vld [vmem:[%s1658] sm:$0x1]
    %s1660 = scalar_lea.vmem [#allocation1], 263
    %v1661 = vld [vmem:[%s1660] sm:$0x2]
    %vm1662 = vcmask 1041409
    %v1663 = vsel %vm1662, %v1661, %v1659
    %s1664 = scalar_lea.vmem [#allocation1], 518
    %v1665 = vld [vmem:[%s1664] sm:$0x4]
    %vm1666 = vcmask 1042434
    %v1667 = vsel %vm1666, %v1665, %v1663
    %s1668 = scalar_lea.vmem [#allocation1], 773
    %v1669 = vld [vmem:[%s1668] sm:$0x8]
    %vm1670 = vcmask 1043459
    %v1671 = vsel %vm1670, %v1669, %v1667
    %s1672 = scalar_lea.vmem [#allocation1], 68
    %v1673 = vld [vmem:[%s1672] sm:$0x10]
    %vm1674 = vcmask 1044484
    %v1675 = vsel %vm1674, %v1673, %v1671
    %s1676 = scalar_lea.vmem [#allocation1], 323
    %v1677 = vld [vmem:[%s1676] sm:$0x20]
    %vm1678 = vcmask 1045509
    %v1679 = vsel %vm1678, %v1677, %v1675
    %s1680 = scalar_lea.vmem [#allocation1], 578
    %v1681 = vld [vmem:[%s1680] sm:$0x40]
    %vm1682 = vcmask 1046534
    %v1683 = vsel %vm1682, %v1681, %v1679
    %s1684 = scalar_lea.vmem [#allocation1], 833
    %v1685 = vld [vmem:[%s1684] sm:$0x80]
    %vm1686 = vcmask 1047559
    %v1687 = vsel %vm1686, %v1685, %v1683
    %1688 = vrot.lane.b32.xlu0 %v1687, 16
    %v1689 = vpop.permute.xlu0 %1688
    %vm1690 = vcmask 195712
    %1691 = vst.msk [vmem:[#allocation0] sm:$0xf] %vm1690, %v1689
    %s1692 = scalar_lea.vmem [#allocation0], 4
    %1693 = vst.msk [vmem:[%s1692] sm:$0xf0] %vm1690, %v1689
    %s1694 = scalar_lea.vmem [#allocation1], 136
    %v1695 = vld [vmem:[%s1694] sm:$0x1]
    %s1696 = scalar_lea.vmem [#allocation1], 391
    %v1697 = vld [vmem:[%s1696] sm:$0x2]
    %vm1698 = vcmask 1041409
    %v1699 = vsel %vm1698, %v1697, %v1695
    %s1700 = scalar_lea.vmem [#allocation1], 646
    %v1701 = vld [vmem:[%s1700] sm:$0x4]
    %vm1702 = vcmask 1042434
    %v1703 = vsel %vm1702, %v1701, %v1699
    %s1704 = scalar_lea.vmem [#allocation1], 901
    %v1705 = vld [vmem:[%s1704] sm:$0x8]
    %vm1706 = vcmask 1043459
    %v1707 = vsel %vm1706, %v1705, %v1703
    %s1708 = scalar_lea.vmem [#allocation1], 196
    %v1709 = vld [vmem:[%s1708] sm:$0x10]
    %vm1710 = vcmask 1044484
    %v1711 = vsel %vm1710, %v1709, %v1707
    %s1712 = scalar_lea.vmem [#allocation1], 451
    %v1713 = vld [vmem:[%s1712] sm:$0x20]
    %vm1714 = vcmask 1045509
    %v1715 = vsel %vm1714, %v1713, %v1711
    %s1716 = scalar_lea.vmem [#allocation1], 706
    %v1717 = vld [vmem:[%s1716] sm:$0x40]
    %vm1718 = vcmask 1046534
    %v1719 = vsel %vm1718, %v1717, %v1715
    %s1720 = scalar_lea.vmem [#allocation1], 961
    %v1721 = vld [vmem:[%s1720] sm:$0x80]
    %vm1722 = vcmask 1047559
    %v1723 = vsel %vm1722, %v1721, %v1719
    %1724 = vrot.lane.b32.xlu0 %v1723, 16
    %v1725 = vpop.permute.xlu0 %1724
    %vm1726 = vcmask 195712
    %s1727 = scalar_lea.vmem [#allocation0], 16
    %1728 = vst.msk [vmem:[%s1727] sm:$0xf] %vm1726, %v1725
    %s1729 = scalar_lea.vmem [#allocation0], 20
    %1730 = vst.msk [vmem:[%s1729] sm:$0xf0] %vm1726, %v1725
    %s1731 = scalar_lea.vmem [#allocation1], 1
    %v1732 = vld [vmem:[%s1731] sm:$0x1]
    %s1733 = scalar_lea.vmem [#allocation1], 256
    %v1734 = vld [vmem:[%s1733] sm:$0x2]
    %vm1735 = vcmask 1041409
    %v1736 = vsel %vm1735, %v1734, %v1732
    %s1737 = scalar_lea.vmem [#allocation1], 511
    %v1738 = vld [vmem:[%s1737] sm:$0x4]
    %vm1739 = vcmask 1042434
    %v1740 = vsel %vm1739, %v1738, %v1736
    %s1741 = scalar_lea.vmem [#allocation1], 766
    %v1742 = vld [vmem:[%s1741] sm:$0x8]
    %vm1743 = vcmask 1043459
    %v1744 = vsel %vm1743, %v1742, %v1740
    %s1745 = scalar_lea.vmem [#allocation1], 61
    %v1746 = vld [vmem:[%s1745] sm:$0x10]
    %vm1747 = vcmask 1044484
    %v1748 = vsel %vm1747, %v1746, %v1744
    %s1749 = scalar_lea.vmem [#allocation1], 316
    %v1750 = vld [vmem:[%s1749] sm:$0x20]
    %vm1751 = vcmask 1045509
    %v1752 = vsel %vm1751, %v1750, %v1748
    %s1753 = scalar_lea.vmem [#allocation1], 571
    %v1754 = vld [vmem:[%s1753] sm:$0x40]
    %vm1755 = vcmask 1046534
    %v1756 = vsel %vm1755, %v1754, %v1752
    %s1757 = scalar_lea.vmem [#allocation1], 826
    %v1758 = vld [vmem:[%s1757] sm:$0x80]
    %vm1759 = vcmask 1047559
    %v1760 = vsel %vm1759, %v1758, %v1756
    %1761 = vrot.lane.b32.xlu0 %v1760, 8
    %v1762 = vpop.permute.xlu0 %1761
    %vm1763 = vcmask 130112
    %1764 = vst.msk [vmem:[#allocation0] sm:$0xf] %vm1763, %v1762
    %s1765 = scalar_lea.vmem [#allocation0], 4
    %1766 = vst.msk [vmem:[%s1765] sm:$0xf0] %vm1763, %v1762
    %s1767 = scalar_lea.vmem [#allocation1], 129
    %v1768 = vld [vmem:[%s1767] sm:$0x1]
    %s1769 = scalar_lea.vmem [#allocation1], 384
    %v1770 = vld [vmem:[%s1769] sm:$0x2]
    %vm1771 = vcmask 1041409
    %v1772 = vsel %vm1771, %v1770, %v1768
    %s1773 = scalar_lea.vmem [#allocation1], 639
    %v1774 = vld [vmem:[%s1773] sm:$0x4]
    %vm1775 = vcmask 1042434
    %v1776 = vsel %vm1775, %v1774, %v1772
    %s1777 = scalar_lea.vmem [#allocation1], 894
    %v1778 = vld [vmem:[%s1777] sm:$0x8]
    %vm1779 = vcmask 1043459
    %v1780 = vsel %vm1779, %v1778, %v1776
    %s1781 = scalar_lea.vmem [#allocation1], 189
    %v1782 = vld [vmem:[%s1781] sm:$0x10]
    %vm1783 = vcmask 1044484
    %v1784 = vsel %vm1783, %v1782, %v1780
    %s1785 = scalar_lea.vmem [#allocation1], 444
    %v1786 = vld [vmem:[%s1785] sm:$0x20]
    %vm1787 = vcmask 1045509
    %v1788 = vsel %vm1787, %v1786, %v1784
    %s1789 = scalar_lea.vmem [#allocation1], 699
    %v1790 = vld [vmem:[%s1789] sm:$0x40]
    %vm1791 = vcmask 1046534
    %v1792 = vsel %vm1791, %v1790, %v1788
    %s1793 = scalar_lea.vmem [#allocation1], 954
    %v1794 = vld [vmem:[%s1793] sm:$0x80]
    %vm1795 = vcmask 1047559
    %v1796 = vsel %vm1795, %v1794, %v1792
    %1797 = vrot.lane.b32.xlu0 %v1796, 8
    %v1798 = vpop.permute.xlu0 %1797
    %vm1799 = vcmask 130112
    %s1800 = scalar_lea.vmem [#allocation0], 16
    %1801 = vst.msk [vmem:[%s1800] sm:$0xf] %vm1799, %v1798
    %s1802 = scalar_lea.vmem [#allocation0], 20
    %1803 = vst.msk [vmem:[%s1802] sm:$0xf0] %vm1799, %v1798
    %s1805 = sshll.u32 1, 4
    %s1806 = ssub.s32 %s1805, 1
    %v1808 = vld [vmem:[#allocation0] sm:%s1806]
    %s1809 = sshll.u32 1, 4
    %s1810 = ssub.s32 %s1809, 1
    %1811 = vst [vmem:[%s1] sm:%s1810] %v1808
    %s1812 = scalar_lea.vmem [#allocation0], 8
    %v1813 = vld [vmem:[%s1812] sm:%s1806]
    %s1814 = sshll.u32 1, 4
    %s1815 = ssub.s32 %s1814, 1
    %s1816 = scalar_lea.vmem %s1, 4
    %1817 = vst [vmem:[%s1816] sm:%s1815] %v1813
    %s1818 = scalar_lea.vmem [#allocation0], 16
    %v1819 = vld [vmem:[%s1818] sm:%s1806]
    %s1820 = sshll.u32 1, 4
    %s1821 = ssub.s32 %s1820, 1
    %s1822 = smul.addr 4, 2
    %s1823 = scalar_lea.vmem %s1, %s1822
    %1824 = vst [vmem:[%s1823] sm:%s1821] %v1819
    %s1825 = scalar_lea.vmem [#allocation0], 24
    %v1826 = vld [vmem:[%s1825] sm:%s1806]
    %s1827 = sshll.u32 1, 4
    %s1828 = ssub.s32 %s1827, 1
    %s1829 = smul.addr 4, 3
    %s1830 = scalar_lea.vmem %s1, %s1829
    %1831 = vst [vmem:[%s1830] sm:%s1828] %v1826

// kernel: reverse.0
$region0: #{reverse.0}
  %s0 = inlined_call_operand.vmem [shape: f32[4,2,16,7], index: 0, kind: input, shape index: {}]
  %s1 = inlined_call_operand.vmem [shape: f32[4,2,16,7], index: 1, kind: output, shape index: {}]
  $region1: #{reverse.0} parent=0
    #allocation0 [shape = 'u8[65536]{0}', space=vmem, size = 0x10000, scoped, tag = 'operand span for operand 0']
    #allocation1 [shape = 'u8[32768]{0}', space=vmem, size = 0x8000, scoped, tag = 'operand span for operand 1']
    %s2 = scalar_lea.vmem [#allocation0], 8
    // Predicated region
    $region2: #{reverse.0} parent=1 // pred_check
      _
    $region3: #{reverse.0} parent=1 // pred_check_branch
      %4 = sbr.rel (0) target = $region5
    $region4: #{reverse.0} parent=1 // pred_region
      // Predicated region
      $region6: #{reverse.0} parent=4 // pred_check
        _
      $region7: #{reverse.0} parent=4 // pred_check_branch
        %6 = sbr.rel (0) target = $region9
      $region8: #{reverse.0} parent=4 // pred_region
        // Predicated region
        $region21: #{reverse.0} parent=8 // pred_check
          _
        $region22: #{reverse.0} parent=8 // pred_check_branch
          %36 = sbr.rel (0) target = $region24
        $region23: #{reverse.0} parent=8 // pred_region
          loop: start=0, step=1, limit=1
          $region25: #{reverse.0} parent=23 // loop_pre_header
            _
          $region26: #{reverse.0} parent=23 // loop_header
            %s38 = sphi 0, %s42
            %p39 = scmp.ge.s32.totalorder %s38, 1
            %s43 = sphi %s0, %s0
            %s44 = sphi %s2, %s2
          $region27: #{reverse.0} parent=23 // loop_header_branch
            %41 = sbr.rel (%p39) target = $region31
          $region28: #{reverse.0} parent=23 // loop_body
            %v45 = vld [vmem:[%s43] sm:$0xff]
            %46 = vst [vmem:[%s44] sm:$0xff] %v45
            %v47 = vld [vmem:[%s43 + $0x8] sm:$0xff]
            %48 = vst [vmem:[%s44 + $0x10] sm:$0xff] %v47
            %v49 = vld [vmem:[%s43 + $0x10] sm:$0xff]
            %50 = vst [vmem:[%s44 + $0x20] sm:$0xff] %v49
            %v51 = vld [vmem:[%s43 + $0x18] sm:$0xff]
            %52 = vst [vmem:[%s44 + $0x30] sm:$0xff] %v51
            %v53 = vld [vmem:[%s43 + $0x20] sm:$0xff]
            %54 = vst [vmem:[%s44 + $0x40] sm:$0xff] %v53
            %v55 = vld [vmem:[%s43 + $0x28] sm:$0xff]
            %56 = vst [vmem:[%s44 + $0x50] sm:$0xff] %v55
            %v57 = vld [vmem:[%s43 + $0x30] sm:$0xff]
            %58 = vst [vmem:[%s44 + $0x60] sm:$0xff] %v57
            %v59 = vld [vmem:[%s43 + $0x38] sm:$0xff]
            %60 = vst [vmem:[%s44 + $0x70] sm:$0xff] %v59
          $region29: #{reverse.0} parent=23 // loop_footer
            %s42 = sadd.s32 1, %s38
          $region30: #{reverse.0} parent=23 // loop_footer_branch
            %37 = sbr.rel target = $region26
          $region31: #{reverse.0} parent=23 // loop_exit
            _
        $region24: #{reverse.0} parent=8 // pred_fallthru
          _
        // Predicated region
        $region32: #{reverse.0} parent=8 // pred_check
          _
        $region33: #{reverse.0} parent=8 // pred_check_branch
          %62 = sbr.rel target = $region35
        $region34: #{reverse.0} parent=8 // pred_region
          _
        $region35: #{reverse.0} parent=8 // pred_fallthru
          _
      $region9: #{reverse.0} parent=4 // pred_fallthru
        _
      // Predicated region
      $region10: #{reverse.0} parent=4 // pred_check
        _
      $region11: #{reverse.0} parent=4 // pred_check_branch
        %8 = sbr.rel target = $region13
      $region12: #{reverse.0} parent=4 // pred_region
        %s10 = ssub.s32 256, 1
        loop: start=0, step=1, limit=1
        $region14: #{reverse.0} parent=12 // loop_pre_header
          _
        $region15: #{reverse.0} parent=12 // loop_header
          %s12 = sphi 0, %s16
          %p13 = scmp.ge.s32.totalorder %s12, 1
          %s17 = sphi %s0, %s0
          %s18 = sphi %s2, %s2
        $region16: #{reverse.0} parent=12 // loop_header_branch
          %15 = sbr.rel (%p13) target = $region20
        $region17: #{reverse.0} parent=12 // loop_body
          %v19 = vld [vmem:[%s17] sm:%s10]
          %20 = vst [vmem:[%s18] sm:%s10] %v19
          %v21 = vld [vmem:[%s17 + $0x8] sm:%s10]
          %22 = vst [vmem:[%s18 + $0x10] sm:%s10] %v21
          %v23 = vld [vmem:[%s17 + $0x10] sm:%s10]
          %24 = vst [vmem:[%s18 + $0x20] sm:%s10] %v23
          %v25 = vld [vmem:[%s17 + $0x18] sm:%s10]
          %26 = vst [vmem:[%s18 + $0x30] sm:%s10] %v25
          %v27 = vld [vmem:[%s17 + $0x20] sm:%s10]
          %28 = vst [vmem:[%s18 + $0x40] sm:%s10] %v27
          %v29 = vld [vmem:[%s17 + $0x28] sm:%s10]
          %30 = vst [vmem:[%s18 + $0x50] sm:%s10] %v29
          %v31 = vld [vmem:[%s17 + $0x30] sm:%s10]
          %32 = vst [vmem:[%s18 + $0x60] sm:%s10] %v31
          %v33 = vld [vmem:[%s17 + $0x38] sm:%s10]
          %34 = vst [vmem:[%s18 + $0x70] sm:%s10] %v33
        $region18: #{reverse.0} parent=12 // loop_footer
          %s16 = sadd.s32 1, %s12
        $region19: #{reverse.0} parent=12 // loop_footer_branch
          %11 = sbr.rel target = $region15
        $region20: #{reverse.0} parent=12 // loop_exit
          _
      $region13: #{reverse.0} parent=4 // pred_fallthru
        _
    $region5: #{reverse.0} parent=1 // pred_fallthru
      _
    %63 = vnop
    %s64 = scalar_lea.vmem [#allocation0], 7
    %v65 = vld [vmem:[%s64] ss:$-1 sm:$0xff]
    %v66 = vrot.slane %v65, 1
    %67 = vst [vmem:[#allocation1] sm:$0xff] %v66
    %s68 = scalar_lea.vmem [#allocation0], 8
    %s69 = scalar_lea.vmem %s68, 7 [#allocation0]
    %v70 = vld [vmem:[%s69] ss:$-1 sm:$0xff]
    %v71 = vrot.slane %v70, 1
    %v72 = vlaneseq
    %v73 = vshrl.u32 %v72, 7
    %vm74 = vcmp.lt.s32.totalorder %v73, 7
    %75 = vst.msk [vmem:[#allocation1] sm:$0xff] %vm74, %v71
    %s76 = scalar_lea.vmem [#allocation1], 8
    %s77 = scalar_lea.vmem [#allocation0], 16
    %s78 = scalar_lea.vmem %s77, 7 [#allocation0]
    %v79 = vld [vmem:[%s78] ss:$-1 sm:$0xff]
    %v80 = vrot.slane %v79, 1
    %81 = vst [vmem:[%s76] sm:$0xff] %v80
    %s82 = scalar_lea.vmem %s77, 8 [#allocation0]
    %s83 = scalar_lea.vmem %s82, 7 [#allocation0]
    %v84 = vld [vmem:[%s83] ss:$-1 sm:$0xff]
    %v85 = vrot.slane %v84, 1
    %v86 = vlaneseq
    %v87 = vshrl.u32 %v86, 7
    %vm88 = vcmp.lt.s32.totalorder %v87, 7
    %89 = vst.msk [vmem:[%s76] sm:$0xff] %vm88, %v85
    %s90 = scalar_lea.vmem [#allocation1], 16
    %s91 = scalar_lea.vmem [#allocation0], 32
    %s92 = scalar_lea.vmem %s91, 7 [#allocation0]
    %v93 = vld [vmem:[%s92] ss:$-1 sm:$0xff]
    %v94 = vrot.slane %v93, 1
    %95 = vst [vmem:[%s90] sm:$0xff] %v94
    %s96 = scalar_lea.vmem %s91, 8 [#allocation0]
    %s97 = scalar_lea.vmem %s96, 7 [#allocation0]
    %v98 = vld [vmem:[%s97] ss:$-1 sm:$0xff]
    %v99 = vrot.slane %v98, 1
    %v100 = vlaneseq
    %v101 = vshrl.u32 %v100, 7
    %vm102 = vcmp.lt.s32.totalorder %v101, 7
    %103 = vst.msk [vmem:[%s90] sm:$0xff] %vm102, %v99
    %s104 = scalar_lea.vmem [#allocation1], 24
    %s105 = scalar_lea.vmem [#allocation0], 48
    %s106 = scalar_lea.vmem %s105, 7 [#allocation0]
    %v107 = vld [vmem:[%s106] ss:$-1 sm:$0xff]
    %v108 = vrot.slane %v107, 1
    %109 = vst [vmem:[%s104] sm:$0xff] %v108
    %s110 = scalar_lea.vmem %s105, 8 [#allocation0]
    %s111 = scalar_lea.vmem %s110, 7 [#allocation0]
    %v112 = vld [vmem:[%s111] ss:$-1 sm:$0xff]
    %v113 = vrot.slane %v112, 1
    %v114 = vlaneseq
    %v115 = vshrl.u32 %v114, 7
    %vm116 = vcmp.lt.s32.totalorder %v115, 7
    %117 = vst.msk [vmem:[%s104] sm:$0xff] %vm116, %v113
    %s118 = scalar_lea.vmem [#allocation1], 32
    %s119 = scalar_lea.vmem [#allocation0], 64
    %s120 = scalar_lea.vmem %s119, 7 [#allocation0]
    %v121 = vld [vmem:[%s120] ss:$-1 sm:$0xff]
    %v122 = vrot.slane %v121, 1
    %123 = vst [vmem:[%s118] sm:$0xff] %v122
    %s124 = scalar_lea.vmem %s119, 8 [#allocation0]
    %s125 = scalar_lea.vmem %s124, 7 [#allocation0]
    %v126 = vld [vmem:[%s125] ss:$-1 sm:$0xff]
    %v127 = vrot.slane %v126, 1
    %v128 = vlaneseq
    %v129 = vshrl.u32 %v128, 7
    %vm130 = vcmp.lt.s32.totalorder %v129, 7
    %131 = vst.msk [vmem:[%s118] sm:$0xff] %vm130, %v127
    %s132 = scalar_lea.vmem [#allocation1], 40
    %s133 = scalar_lea.vmem [#allocation0], 80
    %s134 = scalar_lea.vmem %s133, 7 [#allocation0]
    %v135 = vld [vmem:[%s134] ss:$-1 sm:$0xff]
    %v136 = vrot.slane %v135, 1
    %137 = vst [vmem:[%s132] sm:$0xff] %v136
    %s138 = scalar_lea.vmem %s133, 8 [#allocation0]
    %s139 = scalar_lea.vmem %s138, 7 [#allocation0]
    %v140 = vld [vmem:[%s139] ss:$-1 sm:$0xff]
    %v141 = vrot.slane %v140, 1
    %v142 = vlaneseq
    %v143 = vshrl.u32 %v142, 7
    %vm144 = vcmp.lt.s32.totalorder %v143, 7
    %145 = vst.msk [vmem:[%s132] sm:$0xff] %vm144, %v141
    %s146 = scalar_lea.vmem [#allocation1], 48
    %s147 = scalar_lea.vmem [#allocation0], 96
    %s148 = scalar_lea.vmem %s147, 7 [#allocation0]
    %v149 = vld [vmem:[%s148] ss:$-1 sm:$0xff]
    %v150 = vrot.slane %v149, 1
    %151 = vst [vmem:[%s146] sm:$0xff] %v150
    %s152 = scalar_lea.vmem %s147, 8 [#allocation0]
    %s153 = scalar_lea.vmem %s152, 7 [#allocation0]
    %v154 = vld [vmem:[%s153] ss:$-1 sm:$0xff]
    %v155 = vrot.slane %v154, 1
    %v156 = vlaneseq
    %v157 = vshrl.u32 %v156, 7
    %vm158 = vcmp.lt.s32.totalorder %v157, 7
    %159 = vst.msk [vmem:[%s146] sm:$0xff] %vm158, %v155
    %s160 = scalar_lea.vmem [#allocation1], 56
    %s161 = scalar_lea.vmem [#allocation0], 112
    %s162 = scalar_lea.vmem %s161, 7 [#allocation0]
    %v163 = vld [vmem:[%s162] ss:$-1 sm:$0xff]
    %v164 = vrot.slane %v163, 1
    %165 = vst [vmem:[%s160] sm:$0xff] %v164
    %s166 = scalar_lea.vmem %s161, 8 [#allocation0]
    %s167 = scalar_lea.vmem %s166, 7 [#allocation0]
    %v168 = vld [vmem:[%s167] ss:$-1 sm:$0xff]
    %v169 = vrot.slane %v168, 1
    %v170 = vlaneseq
    %v171 = vshrl.u32 %v170, 7
    %vm172 = vcmp.lt.s32.totalorder %v171, 7
    %173 = vst.msk [vmem:[%s160] sm:$0xff] %vm172, %v169
    // Predicated region
    $region36: #{reverse.0} parent=1 // pred_check
      _
    $region37: #{reverse.0} parent=1 // pred_check_branch
      %175 = sbr.rel (0) target = $region39
    $region38: #{reverse.0} parent=1 // pred_region
      // Predicated region
      $region40: #{reverse.0} parent=38 // pred_check
        _
      $region41: #{reverse.0} parent=38 // pred_check_branch
        %177 = sbr.rel (0) target = $region43
      $region42: #{reverse.0} parent=38 // pred_region
        // Predicated region
        $region55: #{reverse.0} parent=42 // pred_check
          _
        $region56: #{reverse.0} parent=42 // pred_check_branch
          %207 = sbr.rel (0) target = $region58
        $region57: #{reverse.0} parent=42 // pred_region
          loop: start=0, step=1, limit=1
          $region59: #{reverse.0} parent=57 // loop_pre_header
            _
          $region60: #{reverse.0} parent=57 // loop_header
            %s209 = sphi 0, %s213
            %p210 = scmp.ge.s32.totalorder %s209, 1
            %s214 = sphi [#allocation1], [#allocation1]
            %s215 = sphi %s1, %s1
          $region61: #{reverse.0} parent=57 // loop_header_branch
            %212 = sbr.rel (%p210) target = $region65
          $region62: #{reverse.0} parent=57 // loop_body
            %v216 = vld [vmem:[%s214] sm:$0xff]
            %217 = vst [vmem:[%s215] sm:$0xff] %v216
            %v218 = vld [vmem:[%s214 + $0x8] sm:$0xff]
            %219 = vst [vmem:[%s215 + $0x8] sm:$0xff] %v218
            %v220 = vld [vmem:[%s214 + $0x10] sm:$0xff]
            %221 = vst [vmem:[%s215 + $0x10] sm:$0xff] %v220
            %v222 = vld [vmem:[%s214 + $0x18] sm:$0xff]
            %223 = vst [vmem:[%s215 + $0x18] sm:$0xff] %v222
            %v224 = vld [vmem:[%s214 + $0x20] sm:$0xff]
            %225 = vst [vmem:[%s215 + $0x20] sm:$0xff] %v224
            %v226 = vld [vmem:[%s214 + $0x28] sm:$0xff]
            %227 = vst [vmem:[%s215 + $0x28] sm:$0xff] %v226
            %v228 = vld [vmem:[%s214 + $0x30] sm:$0xff]
            %229 = vst [vmem:[%s215 + $0x30] sm:$0xff] %v228
            %v230 = vld [vmem:[%s214 + $0x38] sm:$0xff]
            %231 = vst [vmem:[%s215 + $0x38] sm:$0xff] %v230
          $region63: #{reverse.0} parent=57 // loop_footer
            %s213 = sadd.s32 1, %s209
          $region64: #{reverse.0} parent=57 // loop_footer_branch
            %208 = sbr.rel target = $region60
          $region65: #{reverse.0} parent=57 // loop_exit
            _
        $region58: #{reverse.0} parent=42 // pred_fallthru
          _
        // Predicated region
        $region66: #{reverse.0} parent=42 // pred_check
          _
        $region67: #{reverse.0} parent=42 // pred_check_branch
          %233 = sbr.rel target = $region69
        $region68: #{reverse.0} parent=42 // pred_region
          _
        $region69: #{reverse.0} parent=42 // pred_fallthru
          _
      $region43: #{reverse.0} parent=38 // pred_fallthru
        _
      // Predicated region
      $region44: #{reverse.0} parent=38 // pred_check
        _
      $region45: #{reverse.0} parent=38 // pred_check_branch
        %179 = sbr.rel target = $region47
      $region46: #{reverse.0} parent=38 // pred_region
        %s181 = ssub.s32 256, 1
        loop: start=0, step=1, limit=1
        $region48: #{reverse.0} parent=46 // loop_pre_header
          _
        $region49: #{reverse.0} parent=46 // loop_header
          %s183 = sphi 0, %s187
          %p184 = scmp.ge.s32.totalorder %s183, 1
          %s188 = sphi [#allocation1], [#allocation1]
          %s189 = sphi %s1, %s1
        $region50: #{reverse.0} parent=46 // loop_header_branch
          %186 = sbr.rel (%p184) target = $region54
        $region51: #{reverse.0} parent=46 // loop_body
          %v190 = vld [vmem:[%s188] sm:%s181]
          %191 = vst [vmem:[%s189] sm:%s181] %v190
          %v192 = vld [vmem:[%s188 + $0x8] sm:%s181]
          %193 = vst [vmem:[%s189 + $0x8] sm:%s181] %v192
          %v194 = vld [vmem:[%s188 + $0x10] sm:%s181]
          %195 = vst [vmem:[%s189 + $0x10] sm:%s181] %v194
          %v196 = vld [vmem:[%s188 + $0x18] sm:%s181]
          %197 = vst [vmem:[%s189 + $0x18] sm:%s181] %v196
          %v198 = vld [vmem:[%s188 + $0x20] sm:%s181]
          %199 = vst [vmem:[%s189 + $0x20] sm:%s181] %v198
          %v200 = vld [vmem:[%s188 + $0x28] sm:%s181]
          %201 = vst [vmem:[%s189 + $0x28] sm:%s181] %v200
          %v202 = vld [vmem:[%s188 + $0x30] sm:%s181]
          %203 = vst [vmem:[%s189 + $0x30] sm:%s181] %v202
          %v204 = vld [vmem:[%s188 + $0x38] sm:%s181]
          %205 = vst [vmem:[%s189 + $0x38] sm:%s181] %v204
        $region52: #{reverse.0} parent=46 // loop_footer
          %s187 = sadd.s32 1, %s183
        $region53: #{reverse.0} parent=46 // loop_footer_branch
          %182 = sbr.rel target = $region49
        $region54: #{reverse.0} parent=46 // loop_exit
          _
      $region47: #{reverse.0} parent=38 // pred_fallthru
        _
    $region39: #{reverse.0} parent=1 // pred_fallthru
      _
    %234 = vnop

// kernel: ffc_forward.5
$region0: #{ffc_forward.5}
  #allocation0 [shape = 'u32[]', space=smem, size = 0x4, offset = 0x4, fixed_abs, tag = 'smem constant byte address 0x4 - core index']
  #allocation1 [shape = 'u32[144,128]{1,0:T(1,128)}', space=vmem, size = 0x12000, scoped, tag = 'internal scratch']
  %s0 = inlined_call_operand.vmem [shape: f32[4,512], index: 0, kind: input, shape index: {}]
  %s1 = inlined_call_operand.vmem [shape: f32[4,512], index: 1, kind: input, shape index: {}]
  %s2 = inlined_call_operand.vmem [shape: f32[4,512], index: 2, kind: input, shape index: {}]
  %s3 = inlined_call_operand.vmem [shape: f32[8,512], index: 3, kind: input, shape index: {}]
  %s4 = inlined_call_operand.vmem [shape: f32[8,4], index: 4, kind: input, shape index: {}]
  %s5 = inlined_call_operand.vmem [shape: f32[8,512], index: 5, kind: output, shape index: {}]
  %s6 = sld [smem:[#allocation0]]
  $region30: #{ffc_forward.5} parent=0
    _
  %s8 = ssub.s32 1, %s6
  %s9 = scalar_select 0, %s8, %s6
  // Predicated region
  $region2: #{ffc_forward.5} parent=0 // pred_check
    _
  $region3: #{ffc_forward.5} parent=0 // pred_check_branch
    %11 = sbr.rel (0) target = $region5
  $region4: #{ffc_forward.5} parent=0 // pred_region
    _
  $region5: #{ffc_forward.5} parent=0 // pred_fallthru
    _
  // Predicated region
  $region6: #{ffc_forward.5} parent=0 // pred_check
    _
  $region7: #{ffc_forward.5} parent=0 // pred_check_branch
    %13 = sbr.rel (0) target = $region9
  $region8: #{ffc_forward.5} parent=0 // pred_region
    _
  $region9: #{ffc_forward.5} parent=0 // pred_fallthru
    _
  // Predicated region
  $region10: #{ffc_forward.5} parent=0 // pred_check
    _
  $region11: #{ffc_forward.5} parent=0 // pred_check_branch
    %15 = sbr.rel (0) target = $region13
  $region12: #{ffc_forward.5} parent=0 // pred_region
    _
  $region13: #{ffc_forward.5} parent=0 // pred_fallthru
    _
  // Predicated region
  $region14: #{ffc_forward.5} parent=0 // pred_check
    _
  $region15: #{ffc_forward.5} parent=0 // pred_check_branch
    %17 = sbr.rel (0) target = $region17
  $region16: #{ffc_forward.5} parent=0 // pred_region
    _
  $region17: #{ffc_forward.5} parent=0 // pred_fallthru
    _
  // Predicated region
  $region18: #{ffc_forward.5} parent=0 // pred_check
    _
  $region19: #{ffc_forward.5} parent=0 // pred_check_branch
    %19 = sbr.rel (0) target = $region21
  $region20: #{ffc_forward.5} parent=0 // pred_region
    _
  $region21: #{ffc_forward.5} parent=0 // pred_fallthru
    _
  %v20 = vld [vmem:[%s0] sm:$0xff]
  %v21 = vld [vmem:[%s0 + $0x8] sm:$0xff]
  %v22 = vld [vmem:[%s1] sm:$0xff]
  %v23 = vld [vmem:[%s1 + $0x8] sm:$0xff]
  %v24 = vadd.f32 %v20, %v22
  %v25 = vadd.f32 %v21, %v23
  %v26 = vld [vmem:[%s2] sm:$0xff]
  %v27 = vld [vmem:[%s2 + $0x8] sm:$0xff]
  %v28 = vadd.f32 %v24, %v26
  %v29 = vadd.f32 %v25, %v27
  %v30 = vld [vmem:[%s4] sm:$0xff]
  %v31 = vld [vmem:[%s3] sm:$0xff]
  %v32 = vld [vmem:[%s3 + $0x8] sm:$0xff]
  %v33 = vld [vmem:[%s3 + $0x10] sm:$0xff]
  %v34 = vld [vmem:[%s3 + $0x18] sm:$0xff]
  %v37 = vcombine.high %v28, %v28
  %v38 = vcombine.high %v29, %v29
  %vm39 = vcmask 31744
  %v41 = vsel %vm39, %v30, 0
  %vm43 = vcmask 1043456
  %v44 = vsel %vm43, %v28, 0
  %v46 = vsel %vm43, %v37, 0
  %v48 = vsel %vm43, %v29, 0
  %v50 = vsel %vm43, %v38, 0
  %52 = vmatprep.subr.mxu0 0.0
  %53 = vmatpush1.msra.mxu0 0.0
  %54 = vmatprep.subr.mxu0 0.0
  %55 = vmatpush1.msra.mxu0 0.0
  %56 = vmatprep.subr.mxu0 0.0
  %57 = vmatpush1.msra.mxu0 0.0
  %58 = vmatprep.subr.mxu0 0.0
  %59 = vmatpush1.msra.mxu0 0.0
  %60 = vmatprep.subr.mxu0 0.0
  %61 = vmatpush1.msra.mxu0 0.0
  %62 = vmatprep.subr.mxu0 0.0
  %63 = vmatpush1.msra.mxu0 0.0
  %64 = vmatprep.subr.mxu0 0.0
  %65 = vmatpush1.msra.mxu0 0.0
  %66 = vmatprep.subr.mxu0 0.0
  %67 = vmatpush1.msra.mxu0 0.0
  %68 = vmatprep.subr.mxu0 0.0
  %69 = vmatpush1.msra.mxu0 0.0
  %70 = vmatprep.subr.mxu0 0.0
  %71 = vmatpush1.msra.mxu0 0.0
  %72 = vmatprep.subr.mxu0 0.0
  %73 = vmatpush1.msra.mxu0 0.0
  %74 = vmatprep.subr.mxu0 0.0
  %75 = vmatpush1.msra.mxu0 0.0
  %76 = vmatprep.subr.mxu0 0.0
  %77 = vmatpush1.msra.mxu0 0.0
  %78 = vmatprep.subr.mxu0 0.0
  %79 = vmatpush1.msra.mxu0 0.0
  %80 = vmatprep.subr.mxu0 0.0
  %81 = vmatpush1.msra.mxu0 0.0
  %82 = vmatprep.subr.mxu0 %v46
  %83 = vmatpush1.msra.mxu0 %v44
  %84 = vmatprep.subr.mxu0 0.0
  %85 = vmatpush2.msra.mxu0 0.0
  %86 = vmatprep.subr.mxu0 0.0
  %87 = vmatpush2.msra.mxu0 0.0
  %88 = vmatprep.subr.mxu0 0.0
  %89 = vmatpush2.msra.mxu0 0.0
  %90 = vmatprep.subr.mxu0 0.0
  %91 = vmatpush2.msra.mxu0 0.0
  %92 = vmatprep.subr.mxu0 0.0
  %93 = vmatpush2.msra.mxu0 0.0
  %94 = vmatprep.subr.mxu0 0.0
  %95 = vmatpush2.msra.mxu0 0.0
  %96 = vmatprep.subr.mxu0 0.0
  %97 = vmatpush2.msra.mxu0 0.0
  %98 = vmatprep.subr.mxu0 0.0
  %99 = vmatpush2.msra.mxu0 0.0
  %100 = vmatprep.subr.mxu0 0.0
  %101 = vmatpush2.msra.mxu0 0.0
  %102 = vmatprep.subr.mxu0 0.0
  %103 = vmatpush2.msra.mxu0 0.0
  %104 = vmatprep.subr.mxu0 0.0
  %105 = vmatpush2.msra.mxu0 0.0
  %106 = vmatprep.subr.mxu0 0.0
  %107 = vmatpush2.msra.mxu0 0.0
  %108 = vmatprep.subr.mxu0 0.0
  %109 = vmatpush2.msra.mxu0 0.0
  %110 = vmatprep.subr.mxu0 0.0
  %111 = vmatpush2.msra.mxu0 0.0
  %112 = vmatprep.subr.mxu0 0.0
  %113 = vmatpush2.msra.mxu0 0.0
  %114 = vmatprep.subr.mxu0 0.0
  %115 = vmatpush2.msra.mxu0 0.0
  %116 = vmatprep.mubr.f32.mxu0 0.0
  %117 = vmatmul.mubr.f32.gmra.mxu0 %v41
  %v118 = vpop.f32.mrf.mxu0
  %v119 = vadd.f32 %v31, %v118
  %v120 = vpop.f32.mrf.mxu0
  %v121 = vadd.f32 %v32, %v120
  %122 = vdwg.mxu0
  %123 = vmatprep.subr.mxu0 0.0
  %124 = vmatpush1.msra.mxu0 0.0
  %125 = vmatprep.subr.mxu0 0.0
  %126 = vmatpush1.msra.mxu0 0.0
  %127 = vmatprep.subr.mxu0 0.0
  %128 = vmatpush1.msra.mxu0 0.0
  %129 = vmatprep.subr.mxu0 0.0
  %130 = vmatpush1.msra.mxu0 0.0
  %131 = vmatprep.subr.mxu0 0.0
  %132 = vmatpush1.msra.mxu0 0.0
  %133 = vmatprep.subr.mxu0 0.0
  %134 = vmatpush1.msra.mxu0 0.0
  %135 = vmatprep.subr.mxu0 0.0
  %136 = vmatpush1.msra.mxu0 0.0
  %137 = vmatprep.subr.mxu0 0.0
  %138 = vmatpush1.msra.mxu0 0.0
  %139 = vmatprep.subr.mxu0 0.0
  %140 = vmatpush1.msra.mxu0 0.0
  %141 = vmatprep.subr.mxu0 0.0
  %142 = vmatpush1.msra.mxu0 0.0
  %143 = vmatprep.subr.mxu0 0.0
  %144 = vmatpush1.msra.mxu0 0.0
  %145 = vmatprep.subr.mxu0 0.0
  %146 = vmatpush1.msra.mxu0 0.0
  %147 = vmatprep.subr.mxu0 0.0
  %148 = vmatpush1.msra.mxu0 0.0
  %149 = vmatprep.subr.mxu0 0.0
  %150 = vmatpush1.msra.mxu0 0.0
  %151 = vmatprep.subr.mxu0 0.0
  %152 = vmatpush1.msra.mxu0 0.0
  %153 = vmatprep.subr.mxu0 %v50
  %154 = vmatpush1.msra.mxu0 %v48
  %155 = vmatprep.subr.mxu0 0.0
  %156 = vmatpush2.msra.mxu0 0.0
  %157 = vmatprep.subr.mxu0 0.0
  %158 = vmatpush2.msra.mxu0 0.0
  %159 = vmatprep.subr.mxu0 0.0
  %160 = vmatpush2.msra.mxu0 0.0
  %161 = vmatprep.subr.mxu0 0.0
  %162 = vmatpush2.msra.mxu0 0.0
  %163 = vmatprep.subr.mxu0 0.0
  %164 = vmatpush2.msra.mxu0 0.0
  %165 = vmatprep.subr.mxu0 0.0
  %166 = vmatpush2.msra.mxu0 0.0
  %167 = vmatprep.subr.mxu0 0.0
  %168 = vmatpush2.msra.mxu0 0.0
  %169 = vmatprep.subr.mxu0 0.0
  %170 = vmatpush2.msra.mxu0 0.0
  %171 = vmatprep.subr.mxu0 0.0
  %172 = vmatpush2.msra.mxu0 0.0
  %173 = vmatprep.subr.mxu0 0.0
  %174 = vmatpush2.msra.mxu0 0.0
  %175 = vmatprep.subr.mxu0 0.0
  %176 = vmatpush2.msra.mxu0 0.0
  %177 = vmatprep.subr.mxu0 0.0
  %178 = vmatpush2.msra.mxu0 0.0
  %179 = vmatprep.subr.mxu0 0.0
  %180 = vmatpush2.msra.mxu0 0.0
  %181 = vmatprep.subr.mxu0 0.0
  %182 = vmatpush2.msra.mxu0 0.0
  %183 = vmatprep.subr.mxu0 0.0
  %184 = vmatpush2.msra.mxu0 0.0
  %185 = vmatprep.subr.mxu0 0.0
  %186 = vmatpush2.msra.mxu0 0.0
  %187 = vmatprep.mubr.f32.mxu0 0.0
  %188 = vmatmul.mubr.f32.gmra.mxu0 %v41
  %v189 = vpop.f32.mrf.mxu0
  %v190 = vadd.f32 %v33, %v189
  %v191 = vpop.f32.mrf.mxu0
  %v192 = vadd.f32 %v34, %v191
  %193 = vdwg.mxu0
  %194 = vst [vmem:[%s5] sm:$0xff] %v119
  %195 = vst [vmem:[%s5 + $0x8] sm:$0xff] %v121
  %196 = vst [vmem:[%s5 + $0x10] sm:$0xff] %v190
  %197 = vst [vmem:[%s5 + $0x18] sm:$0xff] %v192
  // Predicated region
  $region22: #{ffc_forward.5} parent=0 // pred_check
    _
  $region23: #{ffc_forward.5} parent=0 // pred_check_branch
    %199 = sbr.rel (0) target = $region25
  $region24: #{ffc_forward.5} parent=0 // pred_region
    _
  $region25: #{ffc_forward.5} parent=0 // pred_fallthru
    _
  // Predicated region
  $region26: #{ffc_forward.5} parent=0 // pred_check
    _
  $region27: #{ffc_forward.5} parent=0 // pred_check_branch
    %201 = sbr.rel (0) target = $region29
  $region28: #{ffc_forward.5} parent=0 // pred_region
    _
  $region29: #{ffc_forward.5} parent=0 // pred_fallthru
    _

</llo_original>
